<compile_context>
chip_gen: v7x
topology: tpu7x:2x2x1
jax: 0.10.0
libtpu: 0.0.40
codegen_flags: <defaults>
</compile_context>

<pallas_src>
import jax
import jax.numpy as jnp
from jax.experimental import pallas as pl
from jax.experimental.pallas import tpu as pltpu

IN_FEATURES = 224 * 224 * 3  # 150528
HIDDEN = 512
OUT_FEATURES = 90


def _fc1_kernel(x_ref, w_ref, b_ref, o_ref):
    """One (M, tn) output block, accumulated over the K grid axis (axis 1)."""
    k = pl.program_id(1)

    @pl.when(k == 0)
    def _():
        o_ref[...] = jnp.zeros_like(o_ref)

    # Accumulate directly into the VMEM-resident f32 output block.
    o_ref[...] += jnp.dot(
        x_ref[...], w_ref[...], preferred_element_type=jnp.float32
    )

    @pl.when(k == pl.num_programs(1) - 1)
    def _():
        o_ref[...] = jnp.maximum(o_ref[...] + b_ref[...], 0.0)  # bias + relu


def _fc23_kernel(h_ref, w2_ref, b2_ref, w3_ref, b3_ref, o_ref):
    """relu(h @ W2 + b2) then sigmoid(. @ W3 + b3), all resident in VMEM."""
    h2 = jnp.maximum(
        jnp.dot(h_ref[...], w2_ref[...], preferred_element_type=jnp.float32)
        + b2_ref[...],
        0.0,
    )
    o_ref[...] = jax.nn.sigmoid(
        jnp.dot(h2, w3_ref[...], preferred_element_type=jnp.float32)
        + b3_ref[...]
    )


def _fc1_tiling(n_out):
    """Generation-aware (tk, tn, vmem_limit_bytes) for the fc1 kernel."""
    # Safe-everywhere fallback: 7168 x 256 f32 weight tile = 7 MiB
    # (14 MiB double-buffered) fits even a 64 MiB VMEM TensorCore.
    fallback = (7168, min(256, n_out), 48 << 20)
    try:
        vmem_cap = pltpu.get_tpu_info().vmem_capacity_bytes
    except Exception:
        return fallback
    if vmem_cap >= (100 << 20):
        # v5e / v6e: 128 MiB physical VMEM, single TensorCore per chip.
        # 21504 x 512 f32 tile = 42 MiB (84 MiB double-buffered) -> K grid = 7.
        return 21504, n_out, 100 << 20
    # v7x-class: 64 MiB VMEM per TC, 2 TCs -> split N across cores.
    # 10752 x 256 f32 tile = 10.5 MiB (21 MiB double-buffered) -> grid (2, 14).
    return 10752, min(256, n_out), 48 << 20


def pallas_fc1(x, w, b):
    """relu(x @ w + b); x:(M,K), w:(K,N), b:(1,N); K-tiled weight streaming."""
    M, K = x.shape
    Kw, N = w.shape
    assert K == Kw and b.shape == (1, N)

    tk, tn, vmem_limit = _fc1_tiling(N)
    assert K % tk == 0 and N % tn == 0

    return pl.pallas_call(
        _fc1_kernel,
        out_shape=jax.ShapeDtypeStruct((M, N), jnp.float32),
        grid_spec=pltpu.PrefetchScalarGridSpec(
            num_scalar_prefetch=0,
            grid=(N // tn, K // tk),  # reduction (K) axis last
            in_specs=[
                pl.BlockSpec((M, tk), lambda j, k: (0, k)),
                pl.BlockSpec((tk, tn), lambda j, k: (k, j)),
                pl.BlockSpec((1, tn), lambda j, k: (0, j)),
            ],
            out_specs=pl.BlockSpec((M, tn), lambda j, k: (0, j)),
        ),
        compiler_params=pltpu.CompilerParams(
            dimension_semantics=("parallel", "arbitrary"),
            vmem_limit_bytes=vmem_limit,
        ),
    )(x, w, b)


def pallas_fc23(h, w2, b2, w3, b3):
    """sigmoid(relu(h @ w2 + b2) @ w3 + b3) as a single small VMEM kernel."""
    M = h.shape[0]
    return pl.pallas_call(
        _fc23_kernel,
        out_shape=jax.ShapeDtypeStruct((M, w3.shape[1]), jnp.float32),
    )(h, w2, b2, w3, b3)


def init_params(key):
    """Deterministic PyTorch-style uniform(-1/sqrt(fan_in), 1/sqrt(fan_in))."""
    dims = [(IN_FEATURES, HIDDEN), (HIDDEN, HIDDEN), (HIDDEN, OUT_FEATURES)]
    params = []
    for i, (fan_in, fan_out) in enumerate(dims):
        kw, kb = jax.random.split(jax.random.fold_in(key, i))
        bound = 1.0 / jnp.sqrt(jnp.float32(fan_in))
        # stored as (in_features, out_features) == W.T of nn.Linear
        w = jax.random.uniform(
            kw, (fan_in, fan_out), jnp.float32, -bound, bound
        )
        b = jax.random.uniform(kb, (1, fan_out), jnp.float32, -bound, bound)
        params.append((w, b))
    return params


@jax.jit
def custom_mlp_forward(x, params):
    (w1, b1), (w2, b2), (w3, b3) = params
    h = x.reshape(-1, IN_FEATURES)  # x.view(-1, 224*224*3)
    h = pallas_fc1(h, w1, b1)
    return pallas_fc23(h, w2, b2, w3, b3)


if __name__ == "__main__":
    key = jax.random.PRNGKey(0)
    params = init_params(jax.random.fold_in(key, 123))
    # NCHW input, batch=2 (fc1's in_features fixes channels/spatial to 3x224x224)
    x = jax.random.normal(
        jax.random.fold_in(key, 7), (2, 3, 224, 224), jnp.float32
    )

    out = custom_mlp_forward(x, params)
    jax.block_until_ready(out)

    # lightweight sanity checks against a pure-JAX reference
    (w1, b1), (w2, b2), (w3, b3) = params
    hf = x.reshape(-1, IN_FEATURES)
    ref = jax.nn.relu(hf @ w1 + b1)
    ref = jax.nn.relu(ref @ w2 + b2)
    ref = jax.nn.sigmoid(ref @ w3 + b3)
    assert out.shape == (2, OUT_FEATURES) and out.dtype == jnp.float32
    assert jnp.allclose(out, ref, atol=2e-5, rtol=1e-5)

    print("KERNEL_OK")
</pallas_src>

<mosaic_0001>
module attributes {stable_mosaic.version = 11 : i64} {
  func.func @_fc1_kernel(%arg0: i32, %arg1: i32, %arg2: memref<2x7168xf32, #tpu.memory_space<vmem>>, %arg3: memref<7168x256xf32, #tpu.memory_space<vmem>>, %arg4: memref<1x256xf32, #tpu.memory_space<vmem>>, %arg5: memref<2x256xf32, #tpu.memory_space<vmem>>) attributes {dimension_semantics = [#tpu.dimension_semantics<parallel>, #tpu.dimension_semantics<arbitrary>], iteration_bounds = array<i64: 2, 21>, scalar_prefetch = 0 : i64, scratch_operands = 0 : i64, tpu.core_type = #tpu.core_type<tc>, window_params = [{transform_indices = @transform_0, window_bounds = array<i64: 2, 7168>}, {transform_indices = @transform_1, window_bounds = array<i64: 7168, 256>}, {transform_indices = @transform_2, window_bounds = array<i64: 1, 256>}, {transform_indices = @transform_3, window_bounds = array<i64: 2, 256>}]} {
    %c0_i32 = arith.constant 0 : i32
    %0 = arith.cmpi eq, %arg1, %c0_i32 : i32
    %1 = arith.extui %0 : i1 to i32
    %c0_i32_0 = arith.constant 0 : i32
    %2 = arith.cmpi ne, %1, %c0_i32_0 : i32
    scf.if %2 {
      %cst_9 = arith.constant 0.000000e+00 : f32
      %12 = vector.broadcast %cst_9 : f32 to vector<2x256xf32>
      %c0_10 = arith.constant 0 : index
      %c0_11 = arith.constant 0 : index
      %13 = vector.load %arg5[%c0_10, %c0_11] : memref<2x256xf32, #tpu.memory_space<vmem>>, vector<2x256xf32>
      tpu.vector_store %arg5[%c0_10, %c0_11], %12 {strides = array<i32>} : memref<2x256xf32, #tpu.memory_space<vmem>>, vector<2x256xf32>,
    } else {
    }
    %c0 = arith.constant 0 : index
    %c0_1 = arith.constant 0 : index
    %3 = vector.load %arg5[%c0, %c0_1] : memref<2x256xf32, #tpu.memory_space<vmem>>, vector<2x256xf32>
    %c0_2 = arith.constant 0 : index
    %c0_3 = arith.constant 0 : index
    %4 = vector.load %arg2[%c0_2, %c0_3] : memref<2x7168xf32, #tpu.memory_space<vmem>>, vector<2x7168xf32>
    %c0_4 = arith.constant 0 : index
    %c0_5 = arith.constant 0 : index
    %5 = vector.load %arg3[%c0_4, %c0_5] : memref<7168x256xf32, #tpu.memory_space<vmem>>, vector<7168x256xf32>
    %cst = arith.constant dense<0.000000e+00> : vector<2x256xf32>
    %6 = tpu.matmul %4, %5, %cst {dimension_numbers = #tpu.dot_dimension_numbers<[1], [0], [0], [1], [0, 0, 1, 1], [], []>} : vector<2x7168xf32>, vector<7168x256xf32>, vector<2x256xf32> -> vector<2x256xf32>
    %7 = arith.addf %3, %6 : vector<2x256xf32>
    %c0_6 = arith.constant 0 : index
    %c0_7 = arith.constant 0 : index
    %8 = vector.load %arg5[%c0_6, %c0_7] : memref<2x256xf32, #tpu.memory_space<vmem>>, vector<2x256xf32>
    tpu.vector_store %arg5[%c0_6, %c0_7], %7 {strides = array<i32>} : memref<2x256xf32, #tpu.memory_space<vmem>>, vector<2x256xf32>,
    %c20_i32 = arith.constant 20 : i32
    %9 = arith.cmpi eq, %arg1, %c20_i32 : i32
    %10 = arith.extui %9 : i1 to i32
    %c0_i32_8 = arith.constant 0 : i32
    %11 = arith.cmpi ne, %10, %c0_i32_8 : i32
    scf.if %11 {
      %c0_9 = arith.constant 0 : index
      %c0_10 = arith.constant 0 : index
      %12 = vector.load %arg5[%c0_9, %c0_10] : memref<2x256xf32, #tpu.memory_space<vmem>>, vector<2x256xf32>
      %c0_11 = arith.constant 0 : index
      %c0_12 = arith.constant 0 : index
      %13 = vector.load %arg4[%c0_11, %c0_12] : memref<1x256xf32, #tpu.memory_space<vmem>>, vector<1x256xf32>
      %14 = vector.broadcast %13 : vector<1x256xf32> to vector<2x256xf32>
      %15 = arith.addf %12, %14 : vector<2x256xf32>
      %cst_13 = arith.constant 0.000000e+00 : f32
      %16 = vector.broadcast %cst_13 : f32 to vector<2x256xf32>
      %17 = arith.maximumf %15, %16 : vector<2x256xf32>
      %c0_14 = arith.constant 0 : index
      %c0_15 = arith.constant 0 : index
      %18 = vector.load %arg5[%c0_14, %c0_15] : memref<2x256xf32, #tpu.memory_space<vmem>>, vector<2x256xf32>
      tpu.vector_store %arg5[%c0_14, %c0_15], %17 {strides = array<i32>} : memref<2x256xf32, #tpu.memory_space<vmem>>, vector<2x256xf32>,
    } else {
    }
    return
  }
  func.func @transform_0(%arg0: i32, %arg1: i32) -> (i32, i32) {
    %c0_i32 = arith.constant 0 : i32
    %c0_i32_0 = arith.constant 0 : i32
    return %c0_i32, %arg1 : i32, i32
  }
  func.func @transform_1(%arg0: i32, %arg1: i32) -> (i32, i32) {
    %c0_i32 = arith.constant 0 : i32
    return %arg1, %arg0 : i32, i32
  }
  func.func @transform_2(%arg0: i32, %arg1: i32) -> (i32, i32) {
    %c0_i32 = arith.constant 0 : i32
    %c0_i32_0 = arith.constant 0 : i32
    return %c0_i32, %arg0 : i32, i32
  }
  func.func @transform_3(%arg0: i32, %arg1: i32) -> (i32, i32) {
    %c0_i32 = arith.constant 0 : i32
    %c0_i32_0 = arith.constant 0 : i32
    return %c0_i32, %arg0 : i32, i32
  }
}

module attributes {stable_mosaic.version = 11 : i64} {
  func.func @_fc23_kernel(%arg0: memref<2x512xf32, #tpu.memory_space<vmem>>, %arg1: memref<512x512xf32, #tpu.memory_space<vmem>>, %arg2: memref<1x512xf32, #tpu.memory_space<vmem>>, %arg3: memref<512x90xf32, #tpu.memory_space<vmem>>, %arg4: memref<1x90xf32, #tpu.memory_space<vmem>>, %arg5: memref<2x90xf32, #tpu.memory_space<vmem>>) attributes {dimension_semantics = [], scalar_prefetch = 0 : i64, scratch_operands = 0 : i64, tpu.core_type = #tpu.core_type<tc>} {
    %c0 = arith.constant 0 : index
    %c0_0 = arith.constant 0 : index
    %0 = vector.load %arg0[%c0, %c0_0] : memref<2x512xf32, #tpu.memory_space<vmem>>, vector<2x512xf32>
    %c0_1 = arith.constant 0 : index
    %c0_2 = arith.constant 0 : index
    %1 = vector.load %arg1[%c0_1, %c0_2] : memref<512x512xf32, #tpu.memory_space<vmem>>, vector<512x512xf32>
    %cst = arith.constant dense<0.000000e+00> : vector<2x512xf32>
    %2 = tpu.matmul %0, %1, %cst {dimension_numbers = #tpu.dot_dimension_numbers<[1], [0], [0], [1], [0, 0, 1, 1], [], []>} : vector<2x512xf32>, vector<512x512xf32>, vector<2x512xf32> -> vector<2x512xf32>
    %c0_3 = arith.constant 0 : index
    %c0_4 = arith.constant 0 : index
    %3 = vector.load %arg2[%c0_3, %c0_4] : memref<1x512xf32, #tpu.memory_space<vmem>>, vector<1x512xf32>
    %4 = vector.broadcast %3 : vector<1x512xf32> to vector<2x512xf32>
    %5 = arith.addf %2, %4 : vector<2x512xf32>
    %cst_5 = arith.constant 0.000000e+00 : f32
    %6 = vector.broadcast %cst_5 : f32 to vector<2x512xf32>
    %7 = arith.maximumf %5, %6 : vector<2x512xf32>
    %c0_6 = arith.constant 0 : index
    %c0_7 = arith.constant 0 : index
    %8 = vector.load %arg3[%c0_6, %c0_7] : memref<512x90xf32, #tpu.memory_space<vmem>>, vector<512x90xf32>
    %cst_8 = arith.constant dense<0.000000e+00> : vector<2x90xf32>
    %9 = tpu.matmul %7, %8, %cst_8 {dimension_numbers = #tpu.dot_dimension_numbers<[1], [0], [0], [1], [0, 0, 1, 1], [], []>} : vector<2x512xf32>, vector<512x90xf32>, vector<2x90xf32> -> vector<2x90xf32>
    %c0_9 = arith.constant 0 : index
    %c0_10 = arith.constant 0 : index
    %10 = vector.load %arg4[%c0_9, %c0_10] : memref<1x90xf32, #tpu.memory_space<vmem>>, vector<1x90xf32>
    %11 = vector.broadcast %10 : vector<1x90xf32> to vector<2x90xf32>
    %12 = arith.addf %9, %11 : vector<2x90xf32>
    %13 = arith.negf %12 : vector<2x90xf32>
    %14 = math.exp %13 : vector<2x90xf32>
    %cst_11 = arith.constant 1.000000e+00 : f32
    %15 = vector.broadcast %cst_11 : f32 to vector<2x90xf32>
    %16 = arith.addf %15, %14 : vector<2x90xf32>
    %17 = arith.divf %15, %16 : vector<2x90xf32>
    %c0_12 = arith.constant 0 : index
    %c0_13 = arith.constant 0 : index
    %18 = vector.load %arg5[%c0_12, %c0_13] : memref<2x90xf32, #tpu.memory_space<vmem>>, vector<2x90xf32>
    tpu.vector_store %arg5[%c0_12, %c0_13], %17 {strides = array<i32>} : memref<2x90xf32, #tpu.memory_space<vmem>>, vector<2x90xf32>,
    return
  }
}

</mosaic_0001>

<llo_original>
// kernel: custom_mlp_forward.3
$region0: #{custom_mlp_forward.3}
  #allocation0 [shape = 'u32[]', space=smem, size = 0x4, offset = 0x4, fixed_abs, tag = 'smem constant byte address 0x4 - core index']
  #allocation1 [shape = 'u32[144,128]{1,0:T(1,128)}', space=vmem, size = 0x12000, scoped, tag = 'internal scratch']
  %s0 = inlined_call_operand.vmem [shape: f32[2,512], index: 0, kind: input, shape index: {}]
  %s1 = inlined_call_operand.vmem [shape: f32[512,512], index: 1, kind: input, shape index: {}]
  %s2 = inlined_call_operand.vmem [shape: f32[1,512], index: 2, kind: input, shape index: {}]
  %s3 = inlined_call_operand.vmem [shape: f32[512,90], index: 3, kind: input, shape index: {}]
  %s4 = inlined_call_operand.vmem [shape: f32[1,90], index: 4, kind: input, shape index: {}]
  %s5 = inlined_call_operand.hbm [shape: f32[2,90], index: 5, kind: output, shape index: {}]
  %s6 = sld [smem:[#allocation0]]
  $region30: #{custom_mlp_forward.3} parent=0
    _
  %s8 = ssub.s32 1, %s6
  %s9 = scalar_select 0, %s8, %s6
  $region1: #{custom_mlp_forward.3} parent=0
    #allocation2 [shape = 'u8[1024]{0}', space=vmem, size = 0x400, scoped, tag = 'output window, operand 0, single buffered']
    #allocation3 [shape = 's32[1]{0}', space=sflag, size = 0x4, scoped, tag = 'scoped memory for custom_mlp_forward.3']
    %10 = vsyncpa [#allocation3], 0
    // Predicated region
    $region2: #{custom_mlp_forward.3} parent=1 // pred_check
      _
    $region3: #{custom_mlp_forward.3} parent=1 // pred_check_branch
      %12 = sbr.rel (0) target = $region5
    $region4: #{custom_mlp_forward.3} parent=1 // pred_region
      _
    $region5: #{custom_mlp_forward.3} parent=1 // pred_fallthru
      _
    // Predicated region
    $region6: #{custom_mlp_forward.3} parent=1 // pred_check
      _
    $region7: #{custom_mlp_forward.3} parent=1 // pred_check_branch
      %14 = sbr.rel (0) target = $region9
    $region8: #{custom_mlp_forward.3} parent=1 // pred_region
      _
    $region9: #{custom_mlp_forward.3} parent=1 // pred_fallthru
      _
    // Predicated region
    $region10: #{custom_mlp_forward.3} parent=1 // pred_check
      _
    $region11: #{custom_mlp_forward.3} parent=1 // pred_check_branch
      %16 = sbr.rel (0) target = $region13
    $region12: #{custom_mlp_forward.3} parent=1 // pred_region
      _
    $region13: #{custom_mlp_forward.3} parent=1 // pred_fallthru
      _
    // Predicated region
    $region14: #{custom_mlp_forward.3} parent=1 // pred_check
      _
    $region15: #{custom_mlp_forward.3} parent=1 // pred_check_branch
      %18 = sbr.rel (0) target = $region17
    $region16: #{custom_mlp_forward.3} parent=1 // pred_region
      _
    $region17: #{custom_mlp_forward.3} parent=1 // pred_fallthru
      _
    // Predicated region
    $region18: #{custom_mlp_forward.3} parent=1 // pred_check
      _
    $region19: #{custom_mlp_forward.3} parent=1 // pred_check_branch
      %20 = sbr.rel (0) target = $region21
    $region20: #{custom_mlp_forward.3} parent=1 // pred_region
      _
    $region21: #{custom_mlp_forward.3} parent=1 // pred_fallthru
      _
    %v21 = vld [vmem:[%s0] sm:$0xff]
    %v22 = vld [vmem:[%s1] sm:$0xff]
    %v23 = vld [vmem:[%s1 + $0x8] sm:$0xff]
    %v24 = vld [vmem:[%s1 + $0x10] sm:$0xff]
    %v25 = vld [vmem:[%s1 + $0x18] sm:$0xff]
    %v26 = vld [vmem:[%s1 + $0x20] sm:$0xff]
    %v27 = vld [vmem:[%s1 + $0x28] sm:$0xff]
    %v28 = vld [vmem:[%s1 + $0x30] sm:$0xff]
    %v29 = vld [vmem:[%s1 + $0x38] sm:$0xff]
    %v30 = vld [vmem:[%s1 + $0x40] sm:$0xff]
    %v31 = vld [vmem:[%s1 + $0x48] sm:$0xff]
    %v32 = vld [vmem:[%s1 + $0x50] sm:$0xff]
    %v33 = vld [vmem:[%s1 + $0x58] sm:$0xff]
    %v34 = vld [vmem:[%s1 + $0x60] sm:$0xff]
    %v35 = vld [vmem:[%s1 + $0x68] sm:$0xff]
    %v36 = vld [vmem:[%s1 + $0x70] sm:$0xff]
    %v37 = vld [vmem:[%s1 + $0x78] sm:$0xff]
    %v38 = vld [vmem:[%s1 + $0x80] sm:$0xff]
    %v39 = vld [vmem:[%s1 + $0x88] sm:$0xff]
    %v40 = vld [vmem:[%s1 + $0x90] sm:$0xff]
    %v41 = vld [vmem:[%s1 + $0x98] sm:$0xff]
    %v42 = vld [vmem:[%s1 + $0xa0] sm:$0xff]
    %v43 = vld [vmem:[%s1 + $0xa8] sm:$0xff]
    %v44 = vld [vmem:[%s1 + $0xb0] sm:$0xff]
    %v45 = vld [vmem:[%s1 + $0xb8] sm:$0xff]
    %v46 = vld [vmem:[%s1 + $0xc0] sm:$0xff]
    %v47 = vld [vmem:[%s1 + $0xc8] sm:$0xff]
    %v48 = vld [vmem:[%s1 + $0xd0] sm:$0xff]
    %v49 = vld [vmem:[%s1 + $0xd8] sm:$0xff]
    %v50 = vld [vmem:[%s1 + $0xe0] sm:$0xff]
    %v51 = vld [vmem:[%s1 + $0xe8] sm:$0xff]
    %v52 = vld [vmem:[%s1 + $0xf0] sm:$0xff]
    %v53 = vld [vmem:[%s1 + $0xf8] sm:$0xff]
    %v54 = vld [vmem:[%s1 + $0x100] sm:$0xff]
    %v55 = vld [vmem:[%s1 + $0x108] sm:$0xff]
    %v56 = vld [vmem:[%s1 + $0x110] sm:$0xff]
    %v57 = vld [vmem:[%s1 + $0x118] sm:$0xff]
    %v58 = vld [vmem:[%s1 + $0x120] sm:$0xff]
    %v59 = vld [vmem:[%s1 + $0x128] sm:$0xff]
    %v60 = vld [vmem:[%s1 + $0x130] sm:$0xff]
    %v61 = vld [vmem:[%s1 + $0x138] sm:$0xff]
    %v62 = vld [vmem:[%s1 + $0x140] sm:$0xff]
    %v63 = vld [vmem:[%s1 + $0x148] sm:$0xff]
    %v64 = vld [vmem:[%s1 + $0x150] sm:$0xff]
    %v65 = vld [vmem:[%s1 + $0x158] sm:$0xff]
    %v66 = vld [vmem:[%s1 + $0x160] sm:$0xff]
    %v67 = vld [vmem:[%s1 + $0x168] sm:$0xff]
    %v68 = vld [vmem:[%s1 + $0x170] sm:$0xff]
    %v69 = vld [vmem:[%s1 + $0x178] sm:$0xff]
    %v70 = vld [vmem:[%s1 + $0x180] sm:$0xff]
    %v71 = vld [vmem:[%s1 + $0x188] sm:$0xff]
    %v72 = vld [vmem:[%s1 + $0x190] sm:$0xff]
    %v73 = vld [vmem:[%s1 + $0x198] sm:$0xff]
    %v74 = vld [vmem:[%s1 + $0x1a0] sm:$0xff]
    %v75 = vld [vmem:[%s1 + $0x1a8] sm:$0xff]
    %v76 = vld [vmem:[%s1 + $0x1b0] sm:$0xff]
    %v77 = vld [vmem:[%s1 + $0x1b8] sm:$0xff]
    %v78 = vld [vmem:[%s1 + $0x1c0] sm:$0xff]
    %v79 = vld [vmem:[%s1 + $0x1c8] sm:$0xff]
    %v80 = vld [vmem:[%s1 + $0x1d0] sm:$0xff]
    %v81 = vld [vmem:[%s1 + $0x1d8] sm:$0xff]
    %v82 = vld [vmem:[%s1 + $0x1e0] sm:$0xff]
    %v83 = vld [vmem:[%s1 + $0x1e8] sm:$0xff]
    %v84 = vld [vmem:[%s1 + $0x1f0] sm:$0xff]
    %v85 = vld [vmem:[%s1 + $0x1f8] sm:$0xff]
    %v86 = vld [vmem:[%s1 + $0x200] sm:$0xff]
    %v87 = vld [vmem:[%s1 + $0x208] sm:$0xff]
    %v88 = vld [vmem:[%s1 + $0x210] sm:$0xff]
    %v89 = vld [vmem:[%s1 + $0x218] sm:$0xff]
    %v90 = vld [vmem:[%s1 + $0x220] sm:$0xff]
    %v91 = vld [vmem:[%s1 + $0x228] sm:$0xff]
    %v92 = vld [vmem:[%s1 + $0x230] sm:$0xff]
    %v93 = vld [vmem:[%s1 + $0x238] sm:$0xff]
    %v94 = vld [vmem:[%s1 + $0x240] sm:$0xff]
    %v95 = vld [vmem:[%s1 + $0x248] sm:$0xff]
    %v96 = vld [vmem:[%s1 + $0x250] sm:$0xff]
    %v97 = vld [vmem:[%s1 + $0x258] sm:$0xff]
    %v98 = vld [vmem:[%s1 + $0x260] sm:$0xff]
    %v99 = vld [vmem:[%s1 + $0x268] sm:$0xff]
    %v100 = vld [vmem:[%s1 + $0x270] sm:$0xff]
    %v101 = vld [vmem:[%s1 + $0x278] sm:$0xff]
    %v102 = vld [vmem:[%s1 + $0x280] sm:$0xff]
    %v103 = vld [vmem:[%s1 + $0x288] sm:$0xff]
    %v104 = vld [vmem:[%s1 + $0x290] sm:$0xff]
    %v105 = vld [vmem:[%s1 + $0x298] sm:$0xff]
    %v106 = vld [vmem:[%s1 + $0x2a0] sm:$0xff]
    %v107 = vld [vmem:[%s1 + $0x2a8] sm:$0xff]
    %v108 = vld [vmem:[%s1 + $0x2b0] sm:$0xff]
    %v109 = vld [vmem:[%s1 + $0x2b8] sm:$0xff]
    %v110 = vld [vmem:[%s1 + $0x2c0] sm:$0xff]
    %v111 = vld [vmem:[%s1 + $0x2c8] sm:$0xff]
    %v112 = vld [vmem:[%s1 + $0x2d0] sm:$0xff]
    %v113 = vld [vmem:[%s1 + $0x2d8] sm:$0xff]
    %v114 = vld [vmem:[%s1 + $0x2e0] sm:$0xff]
    %v115 = vld [vmem:[%s1 + $0x2e8] sm:$0xff]
    %v116 = vld [vmem:[%s1 + $0x2f0] sm:$0xff]
    %v117 = vld [vmem:[%s1 + $0x2f8] sm:$0xff]
    %v118 = vld [vmem:[%s1 + $0x300] sm:$0xff]
    %v119 = vld [vmem:[%s1 + $0x308] sm:$0xff]
    %v120 = vld [vmem:[%s1 + $0x310] sm:$0xff]
    %v121 = vld [vmem:[%s1 + $0x318] sm:$0xff]
    %v122 = vld [vmem:[%s1 + $0x320] sm:$0xff]
    %v123 = vld [vmem:[%s1 + $0x328] sm:$0xff]
    %v124 = vld [vmem:[%s1 + $0x330] sm:$0xff]
    %v125 = vld [vmem:[%s1 + $0x338] sm:$0xff]
    %v126 = vld [vmem:[%s1 + $0x340] sm:$0xff]
    %v127 = vld [vmem:[%s1 + $0x348] sm:$0xff]
    %v128 = vld [vmem:[%s1 + $0x350] sm:$0xff]
    %v129 = vld [vmem:[%s1 + $0x358] sm:$0xff]
    %v130 = vld [vmem:[%s1 + $0x360] sm:$0xff]
    %v131 = vld [vmem:[%s1 + $0x368] sm:$0xff]
    %v132 = vld [vmem:[%s1 + $0x370] sm:$0xff]
    %v133 = vld [vmem:[%s1 + $0x378] sm:$0xff]
    %v134 = vld [vmem:[%s1 + $0x380] sm:$0xff]
    %v135 = vld [vmem:[%s1 + $0x388] sm:$0xff]
    %v136 = vld [vmem:[%s1 + $0x390] sm:$0xff]
    %v137 = vld [vmem:[%s1 + $0x398] sm:$0xff]
    %v138 = vld [vmem:[%s1 + $0x3a0] sm:$0xff]
    %v139 = vld [vmem:[%s1 + $0x3a8] sm:$0xff]
    %v140 = vld [vmem:[%s1 + $0x3b0] sm:$0xff]
    %v141 = vld [vmem:[%s1 + $0x3b8] sm:$0xff]
    %v142 = vld [vmem:[%s1 + $0x3c0] sm:$0xff]
    %v143 = vld [vmem:[%s1 + $0x3c8] sm:$0xff]
    %v144 = vld [vmem:[%s1 + $0x3d0] sm:$0xff]
    %v145 = vld [vmem:[%s1 + $0x3d8] sm:$0xff]
    %v146 = vld [vmem:[%s1 + $0x3e0] sm:$0xff]
    %v147 = vld [vmem:[%s1 + $0x3e8] sm:$0xff]
    %v148 = vld [vmem:[%s1 + $0x3f0] sm:$0xff]
    %v149 = vld [vmem:[%s1 + $0x3f8] sm:$0xff]
    %v150 = vld [vmem:[%s1 + $0x400] sm:$0xff]
    %v151 = vld [vmem:[%s1 + $0x408] sm:$0xff]
    %v152 = vld [vmem:[%s1 + $0x410] sm:$0xff]
    %v153 = vld [vmem:[%s1 + $0x418] sm:$0xff]
    %v154 = vld [vmem:[%s1 + $0x420] sm:$0xff]
    %v155 = vld [vmem:[%s1 + $0x428] sm:$0xff]
    %v156 = vld [vmem:[%s1 + $0x430] sm:$0xff]
    %v157 = vld [vmem:[%s1 + $0x438] sm:$0xff]
    %v158 = vld [vmem:[%s1 + $0x440] sm:$0xff]
    %v159 = vld [vmem:[%s1 + $0x448] sm:$0xff]
    %v160 = vld [vmem:[%s1 + $0x450] sm:$0xff]
    %v161 = vld [vmem:[%s1 + $0x458] sm:$0xff]
    %v162 = vld [vmem:[%s1 + $0x460] sm:$0xff]
    %v163 = vld [vmem:[%s1 + $0x468] sm:$0xff]
    %v164 = vld [vmem:[%s1 + $0x470] sm:$0xff]
    %v165 = vld [vmem:[%s1 + $0x478] sm:$0xff]
    %v166 = vld [vmem:[%s1 + $0x480] sm:$0xff]
    %v167 = vld [vmem:[%s1 + $0x488] sm:$0xff]
    %v168 = vld [vmem:[%s1 + $0x490] sm:$0xff]
    %v169 = vld [vmem:[%s1 + $0x498] sm:$0xff]
    %v170 = vld [vmem:[%s1 + $0x4a0] sm:$0xff]
    %v171 = vld [vmem:[%s1 + $0x4a8] sm:$0xff]
    %v172 = vld [vmem:[%s1 + $0x4b0] sm:$0xff]
    %v173 = vld [vmem:[%s1 + $0x4b8] sm:$0xff]
    %v174 = vld [vmem:[%s1 + $0x4c0] sm:$0xff]
    %v175 = vld [vmem:[%s1 + $0x4c8] sm:$0xff]
    %v176 = vld [vmem:[%s1 + $0x4d0] sm:$0xff]
    %v177 = vld [vmem:[%s1 + $0x4d8] sm:$0xff]
    %v178 = vld [vmem:[%s1 + $0x4e0] sm:$0xff]
    %v179 = vld [vmem:[%s1 + $0x4e8] sm:$0xff]
    %v180 = vld [vmem:[%s1 + $0x4f0] sm:$0xff]
    %v181 = vld [vmem:[%s1 + $0x4f8] sm:$0xff]
    %v182 = vld [vmem:[%s1 + $0x500] sm:$0xff]
    %v183 = vld [vmem:[%s1 + $0x508] sm:$0xff]
    %v184 = vld [vmem:[%s1 + $0x510] sm:$0xff]
    %v185 = vld [vmem:[%s1 + $0x518] sm:$0xff]
    %v186 = vld [vmem:[%s1 + $0x520] sm:$0xff]
    %v187 = vld [vmem:[%s1 + $0x528] sm:$0xff]
    %v188 = vld [vmem:[%s1 + $0x530] sm:$0xff]
    %v189 = vld [vmem:[%s1 + $0x538] sm:$0xff]
    %v190 = vld [vmem:[%s1 + $0x540] sm:$0xff]
    %v191 = vld [vmem:[%s1 + $0x548] sm:$0xff]
    %v192 = vld [vmem:[%s1 + $0x550] sm:$0xff]
    %v193 = vld [vmem:[%s1 + $0x558] sm:$0xff]
    %v194 = vld [vmem:[%s1 + $0x560] sm:$0xff]
    %v195 = vld [vmem:[%s1 + $0x568] sm:$0xff]
    %v196 = vld [vmem:[%s1 + $0x570] sm:$0xff]
    %v197 = vld [vmem:[%s1 + $0x578] sm:$0xff]
    %v198 = vld [vmem:[%s1 + $0x580] sm:$0xff]
    %v199 = vld [vmem:[%s1 + $0x588] sm:$0xff]
    %v200 = vld [vmem:[%s1 + $0x590] sm:$0xff]
    %v201 = vld [vmem:[%s1 + $0x598] sm:$0xff]
    %v202 = vld [vmem:[%s1 + $0x5a0] sm:$0xff]
    %v203 = vld [vmem:[%s1 + $0x5a8] sm:$0xff]
    %v204 = vld [vmem:[%s1 + $0x5b0] sm:$0xff]
    %v205 = vld [vmem:[%s1 + $0x5b8] sm:$0xff]
    %v206 = vld [vmem:[%s1 + $0x5c0] sm:$0xff]
    %v207 = vld [vmem:[%s1 + $0x5c8] sm:$0xff]
    %v208 = vld [vmem:[%s1 + $0x5d0] sm:$0xff]
    %v209 = vld [vmem:[%s1 + $0x5d8] sm:$0xff]
    %v210 = vld [vmem:[%s1 + $0x5e0] sm:$0xff]
    %v211 = vld [vmem:[%s1 + $0x5e8] sm:$0xff]
    %v212 = vld [vmem:[%s1 + $0x5f0] sm:$0xff]
    %v213 = vld [vmem:[%s1 + $0x5f8] sm:$0xff]
    %v214 = vld [vmem:[%s1 + $0x600] sm:$0xff]
    %v215 = vld [vmem:[%s1 + $0x608] sm:$0xff]
    %v216 = vld [vmem:[%s1 + $0x610] sm:$0xff]
    %v217 = vld [vmem:[%s1 + $0x618] sm:$0xff]
    %v218 = vld [vmem:[%s1 + $0x620] sm:$0xff]
    %v219 = vld [vmem:[%s1 + $0x628] sm:$0xff]
    %v220 = vld [vmem:[%s1 + $0x630] sm:$0xff]
    %v221 = vld [vmem:[%s1 + $0x638] sm:$0xff]
    %v222 = vld [vmem:[%s1 + $0x640] sm:$0xff]
    %v223 = vld [vmem:[%s1 + $0x648] sm:$0xff]
    %v224 = vld [vmem:[%s1 + $0x650] sm:$0xff]
    %v225 = vld [vmem:[%s1 + $0x658] sm:$0xff]
    %v226 = vld [vmem:[%s1 + $0x660] sm:$0xff]
    %v227 = vld [vmem:[%s1 + $0x668] sm:$0xff]
    %v228 = vld [vmem:[%s1 + $0x670] sm:$0xff]
    %v229 = vld [vmem:[%s1 + $0x678] sm:$0xff]
    %v230 = vld [vmem:[%s1 + $0x680] sm:$0xff]
    %v231 = vld [vmem:[%s1 + $0x688] sm:$0xff]
    %v232 = vld [vmem:[%s1 + $0x690] sm:$0xff]
    %v233 = vld [vmem:[%s1 + $0x698] sm:$0xff]
    %v234 = vld [vmem:[%s1 + $0x6a0] sm:$0xff]
    %v235 = vld [vmem:[%s1 + $0x6a8] sm:$0xff]
    %v236 = vld [vmem:[%s1 + $0x6b0] sm:$0xff]
    %v237 = vld [vmem:[%s1 + $0x6b8] sm:$0xff]
    %v238 = vld [vmem:[%s1 + $0x6c0] sm:$0xff]
    %v239 = vld [vmem:[%s1 + $0x6c8] sm:$0xff]
    %v240 = vld [vmem:[%s1 + $0x6d0] sm:$0xff]
    %v241 = vld [vmem:[%s1 + $0x6d8] sm:$0xff]
    %v242 = vld [vmem:[%s1 + $0x6e0] sm:$0xff]
    %v243 = vld [vmem:[%s1 + $0x6e8] sm:$0xff]
    %v244 = vld [vmem:[%s1 + $0x6f0] sm:$0xff]
    %v245 = vld [vmem:[%s1 + $0x6f8] sm:$0xff]
    %v246 = vld [vmem:[%s1 + $0x700] sm:$0xff]
    %v247 = vld [vmem:[%s1 + $0x708] sm:$0xff]
    %v248 = vld [vmem:[%s1 + $0x710] sm:$0xff]
    %v249 = vld [vmem:[%s1 + $0x718] sm:$0xff]
    %v250 = vld [vmem:[%s1 + $0x720] sm:$0xff]
    %v251 = vld [vmem:[%s1 + $0x728] sm:$0xff]
    %v252 = vld [vmem:[%s1 + $0x730] sm:$0xff]
    %v253 = vld [vmem:[%s1 + $0x738] sm:$0xff]
    %v254 = vld [vmem:[%s1 + $0x740] sm:$0xff]
    %v255 = vld [vmem:[%s1 + $0x748] sm:$0xff]
    %v256 = vld [vmem:[%s1 + $0x750] sm:$0xff]
    %v257 = vld [vmem:[%s1 + $0x758] sm:$0xff]
    %v258 = vld [vmem:[%s1 + $0x760] sm:$0xff]
    %v259 = vld [vmem:[%s1 + $0x768] sm:$0xff]
    %v260 = vld [vmem:[%s1 + $0x770] sm:$0xff]
    %v261 = vld [vmem:[%s1 + $0x778] sm:$0xff]
    %v262 = vld [vmem:[%s1 + $0x780] sm:$0xff]
    %v263 = vld [vmem:[%s1 + $0x788] sm:$0xff]
    %v264 = vld [vmem:[%s1 + $0x790] sm:$0xff]
    %v265 = vld [vmem:[%s1 + $0x798] sm:$0xff]
    %v266 = vld [vmem:[%s1 + $0x7a0] sm:$0xff]
    %v267 = vld [vmem:[%s1 + $0x7a8] sm:$0xff]
    %v268 = vld [vmem:[%s1 + $0x7b0] sm:$0xff]
    %v269 = vld [vmem:[%s1 + $0x7b8] sm:$0xff]
    %v270 = vld [vmem:[%s1 + $0x7c0] sm:$0xff]
    %v271 = vld [vmem:[%s1 + $0x7c8] sm:$0xff]
    %v272 = vld [vmem:[%s1 + $0x7d0] sm:$0xff]
    %v273 = vld [vmem:[%s1 + $0x7d8] sm:$0xff]
    %v274 = vld [vmem:[%s1 + $0x7e0] sm:$0xff]
    %v275 = vld [vmem:[%s1 + $0x7e8] sm:$0xff]
    %v276 = vld [vmem:[%s1 + $0x7f0] sm:$0xff]
    %v277 = vld [vmem:[%s1 + $0x7f8] sm:$0xff]
    %v278 = vld [vmem:[%s2] sm:$0xf]
    %v280 = vlaneseq
    %v281 = vshrl.u32 %v280, 7
    %v282 = vsub.s32 0, %v281
    %v283 = vrot.slane %v278, %v282
    %v284 = vlaneseq
    %v285 = vshrl.u32 %v284, 7
    %v286 = vsub.s32 1, %v285
    %v287 = vrot.slane %v278, %v286
    %v288 = vlaneseq
    %v289 = vshrl.u32 %v288, 7
    %v290 = vsub.s32 2, %v289
    %v291 = vrot.slane %v278, %v290
    %v292 = vlaneseq
    %v293 = vshrl.u32 %v292, 7
    %v294 = vsub.s32 3, %v293
    %v295 = vrot.slane %v278, %v294
    %v301 = vcombine.high %v21, %v21
    %v303 = vunpack.c.l.s4 1983009808
    %v304 = vunpack.c.0.s8 %v303
    %v305 = vlaneseq
    %v306 = vshrl.u32 %v305, 7
    %v307 = vsub.s32 %v304, %v306
    %v308 = vrot.slane %v21, %v307
    %v310 = vunpack.c.l.s4 1983009808
    %v311 = vunpack.c.0.s8 %v310
    %v312 = vlaneseq
    %v313 = vshrl.u32 %v312, 7
    %v314 = vsub.s32 %v311, %v313
    %v315 = vrot.slane %v301, %v314
    %v316 = vcombine.high %v308, %v308
    %v317 = vcombine.high %v315, %v315
    %322 = vmatprep.subr.mxu0 %v23
    %323 = vmatpush1.msra.mxu0 %v22
    %324 = vmatprep.subr.mxu0 %v27
    %325 = vmatpush1.msra.mxu0 %v26
    %326 = vmatprep.subr.mxu0 %v31
    %327 = vmatpush1.msra.mxu0 %v30
    %328 = vmatprep.subr.mxu0 %v35
    %329 = vmatpush1.msra.mxu0 %v34
    %330 = vmatprep.subr.mxu0 %v39
    %331 = vmatpush1.msra.mxu0 %v38
    %332 = vmatprep.subr.mxu0 %v43
    %333 = vmatpush1.msra.mxu0 %v42
    %334 = vmatprep.subr.mxu0 %v47
    %335 = vmatpush1.msra.mxu0 %v46
    %336 = vmatprep.subr.mxu0 %v51
    %337 = vmatpush1.msra.mxu0 %v50
    %338 = vmatprep.subr.mxu0 %v55
    %339 = vmatpush1.msra.mxu0 %v54
    %340 = vmatprep.subr.mxu0 %v59
    %341 = vmatpush1.msra.mxu0 %v58
    %342 = vmatprep.subr.mxu0 %v63
    %343 = vmatpush1.msra.mxu0 %v62
    %344 = vmatprep.subr.mxu0 %v67
    %345 = vmatpush1.msra.mxu0 %v66
    %346 = vmatprep.subr.mxu0 %v71
    %347 = vmatpush1.msra.mxu0 %v70
    %348 = vmatprep.subr.mxu0 %v75
    %349 = vmatpush1.msra.mxu0 %v74
    %350 = vmatprep.subr.mxu0 %v79
    %351 = vmatpush1.msra.mxu0 %v78
    %352 = vmatprep.subr.mxu0 %v83
    %353 = vmatpush1.msra.mxu0 %v82
    %354 = vmatprep.subr.mxu0 %v87
    %355 = vmatpush1.msra.mxu0 %v86
    %356 = vmatprep.subr.mxu0 %v91
    %357 = vmatpush1.msra.mxu0 %v90
    %358 = vmatprep.subr.mxu0 %v95
    %359 = vmatpush1.msra.mxu0 %v94
    %360 = vmatprep.subr.mxu0 %v99
    %361 = vmatpush1.msra.mxu0 %v98
    %362 = vmatprep.subr.mxu0 %v103
    %363 = vmatpush1.msra.mxu0 %v102
    %364 = vmatprep.subr.mxu0 %v107
    %365 = vmatpush1.msra.mxu0 %v106
    %366 = vmatprep.subr.mxu0 %v111
    %367 = vmatpush1.msra.mxu0 %v110
    %368 = vmatprep.subr.mxu0 %v115
    %369 = vmatpush1.msra.mxu0 %v114
    %370 = vmatprep.subr.mxu0 %v119
    %371 = vmatpush1.msra.mxu0 %v118
    %372 = vmatprep.subr.mxu0 %v123
    %373 = vmatpush1.msra.mxu0 %v122
    %374 = vmatprep.subr.mxu0 %v127
    %375 = vmatpush1.msra.mxu0 %v126
    %376 = vmatprep.subr.mxu0 %v131
    %377 = vmatpush1.msra.mxu0 %v130
    %378 = vmatprep.subr.mxu0 %v135
    %379 = vmatpush1.msra.mxu0 %v134
    %380 = vmatprep.subr.mxu0 %v139
    %381 = vmatpush1.msra.mxu0 %v138
    %382 = vmatprep.subr.mxu0 %v143
    %383 = vmatpush1.msra.mxu0 %v142
    %384 = vmatprep.subr.mxu0 %v147
    %385 = vmatpush1.msra.mxu0 %v146
    %386 = vmatprep.mubr.f32.mxu0 %v316
    %387 = vmatmul.mubr.f32.gmra.mrb[0].mxu0 %v308
    %v388 = vpop.f32.mrb[0].mxu0
    %v389 = vadd.f32 %v283, %v388
    %v390 = vpop.f32.mrb[0].mxu0
    %v391 = vadd.f32 %v287, %v390
    %392 = vdwg.mxu0
    %393 = vmatprep.subr.mxu0 %v151
    %394 = vmatpush1.msra.mxu0 %v150
    %395 = vmatprep.subr.mxu0 %v155
    %396 = vmatpush1.msra.mxu0 %v154
    %397 = vmatprep.subr.mxu0 %v159
    %398 = vmatpush1.msra.mxu0 %v158
    %399 = vmatprep.subr.mxu0 %v163
    %400 = vmatpush1.msra.mxu0 %v162
    %401 = vmatprep.subr.mxu0 %v167
    %402 = vmatpush1.msra.mxu0 %v166
    %403 = vmatprep.subr.mxu0 %v171
    %404 = vmatpush1.msra.mxu0 %v170
    %405 = vmatprep.subr.mxu0 %v175
    %406 = vmatpush1.msra.mxu0 %v174
    %407 = vmatprep.subr.mxu0 %v179
    %408 = vmatpush1.msra.mxu0 %v178
    %409 = vmatprep.subr.mxu0 %v183
    %410 = vmatpush1.msra.mxu0 %v182
    %411 = vmatprep.subr.mxu0 %v187
    %412 = vmatpush1.msra.mxu0 %v186
    %413 = vmatprep.subr.mxu0 %v191
    %414 = vmatpush1.msra.mxu0 %v190
    %415 = vmatprep.subr.mxu0 %v195
    %416 = vmatpush1.msra.mxu0 %v194
    %417 = vmatprep.subr.mxu0 %v199
    %418 = vmatpush1.msra.mxu0 %v198
    %419 = vmatprep.subr.mxu0 %v203
    %420 = vmatpush1.msra.mxu0 %v202
    %421 = vmatprep.subr.mxu0 %v207
    %422 = vmatpush1.msra.mxu0 %v206
    %423 = vmatprep.subr.mxu0 %v211
    %424 = vmatpush1.msra.mxu0 %v210
    %425 = vmatprep.subr.mxu0 %v215
    %426 = vmatpush1.msra.mxu0 %v214
    %427 = vmatprep.subr.mxu0 %v219
    %428 = vmatpush1.msra.mxu0 %v218
    %429 = vmatprep.subr.mxu0 %v223
    %430 = vmatpush1.msra.mxu0 %v222
    %431 = vmatprep.subr.mxu0 %v227
    %432 = vmatpush1.msra.mxu0 %v226
    %433 = vmatprep.subr.mxu0 %v231
    %434 = vmatpush1.msra.mxu0 %v230
    %435 = vmatprep.subr.mxu0 %v235
    %436 = vmatpush1.msra.mxu0 %v234
    %437 = vmatprep.subr.mxu0 %v239
    %438 = vmatpush1.msra.mxu0 %v238
    %439 = vmatprep.subr.mxu0 %v243
    %440 = vmatpush1.msra.mxu0 %v242
    %441 = vmatprep.subr.mxu0 %v247
    %442 = vmatpush1.msra.mxu0 %v246
    %443 = vmatprep.subr.mxu0 %v251
    %444 = vmatpush1.msra.mxu0 %v250
    %445 = vmatprep.subr.mxu0 %v255
    %446 = vmatpush1.msra.mxu0 %v254
    %447 = vmatprep.subr.mxu0 %v259
    %448 = vmatpush1.msra.mxu0 %v258
    %449 = vmatprep.subr.mxu0 %v263
    %450 = vmatpush1.msra.mxu0 %v262
    %451 = vmatprep.subr.mxu0 %v267
    %452 = vmatpush1.msra.mxu0 %v266
    %453 = vmatprep.subr.mxu0 %v271
    %454 = vmatpush1.msra.mxu0 %v270
    %455 = vmatprep.subr.mxu0 %v275
    %456 = vmatpush1.msra.mxu0 %v274
    %457 = vmatprep.mubr.f32.mxu0 %v317
    %458 = vmatmul.mubr.f32.gmra.mrb[0].mxu0 %v315
    %v459 = vpop.f32.mrb[0].mxu0
    %v460 = vadd.f32 %v389, %v459
    %v461 = vpop.f32.mrb[0].mxu0
    %v462 = vadd.f32 %v391, %v461
    %463 = vdwg.mxu0
    %464 = vmatprep.subr.mxu0 %v25
    %465 = vmatpush1.msra.mxu0 %v24
    %466 = vmatprep.subr.mxu0 %v29
    %467 = vmatpush1.msra.mxu0 %v28
    %468 = vmatprep.subr.mxu0 %v33
    %469 = vmatpush1.msra.mxu0 %v32
    %470 = vmatprep.subr.mxu0 %v37
    %471 = vmatpush1.msra.mxu0 %v36
    %472 = vmatprep.subr.mxu0 %v41
    %473 = vmatpush1.msra.mxu0 %v40
    %474 = vmatprep.subr.mxu0 %v45
    %475 = vmatpush1.msra.mxu0 %v44
    %476 = vmatprep.subr.mxu0 %v49
    %477 = vmatpush1.msra.mxu0 %v48
    %478 = vmatprep.subr.mxu0 %v53
    %479 = vmatpush1.msra.mxu0 %v52
    %480 = vmatprep.subr.mxu0 %v57
    %481 = vmatpush1.msra.mxu0 %v56
    %482 = vmatprep.subr.mxu0 %v61
    %483 = vmatpush1.msra.mxu0 %v60
    %484 = vmatprep.subr.mxu0 %v65
    %485 = vmatpush1.msra.mxu0 %v64
    %486 = vmatprep.subr.mxu0 %v69
    %487 = vmatpush1.msra.mxu0 %v68
    %488 = vmatprep.subr.mxu0 %v73
    %489 = vmatpush1.msra.mxu0 %v72
    %490 = vmatprep.subr.mxu0 %v77
    %491 = vmatpush1.msra.mxu0 %v76
    %492 = vmatprep.subr.mxu0 %v81
    %493 = vmatpush1.msra.mxu0 %v80
    %494 = vmatprep.subr.mxu0 %v85
    %495 = vmatpush1.msra.mxu0 %v84
    %496 = vmatprep.subr.mxu0 %v89
    %497 = vmatpush1.msra.mxu0 %v88
    %498 = vmatprep.subr.mxu0 %v93
    %499 = vmatpush1.msra.mxu0 %v92
    %500 = vmatprep.subr.mxu0 %v97
    %501 = vmatpush1.msra.mxu0 %v96
    %502 = vmatprep.subr.mxu0 %v101
    %503 = vmatpush1.msra.mxu0 %v100
    %504 = vmatprep.subr.mxu0 %v105
    %505 = vmatpush1.msra.mxu0 %v104
    %506 = vmatprep.subr.mxu0 %v109
    %507 = vmatpush1.msra.mxu0 %v108
    %508 = vmatprep.subr.mxu0 %v113
    %509 = vmatpush1.msra.mxu0 %v112
    %510 = vmatprep.subr.mxu0 %v117
    %511 = vmatpush1.msra.mxu0 %v116
    %512 = vmatprep.subr.mxu0 %v121
    %513 = vmatpush1.msra.mxu0 %v120
    %514 = vmatprep.subr.mxu0 %v125
    %515 = vmatpush1.msra.mxu0 %v124
    %516 = vmatprep.subr.mxu0 %v129
    %517 = vmatpush1.msra.mxu0 %v128
    %518 = vmatprep.subr.mxu0 %v133
    %519 = vmatpush1.msra.mxu0 %v132
    %520 = vmatprep.subr.mxu0 %v137
    %521 = vmatpush1.msra.mxu0 %v136
    %522 = vmatprep.subr.mxu0 %v141
    %523 = vmatpush1.msra.mxu0 %v140
    %524 = vmatprep.subr.mxu0 %v145
    %525 = vmatpush1.msra.mxu0 %v144
    %526 = vmatprep.subr.mxu0 %v149
    %527 = vmatpush1.msra.mxu0 %v148
    %528 = vmatprep.mubr.f32.mxu0 %v316
    %529 = vmatmul.mubr.f32.gmra.mrb[0].mxu0 %v308
    %v530 = vpop.f32.mrb[0].mxu0
    %v531 = vadd.f32 %v291, %v530
    %v532 = vpop.f32.mrb[0].mxu0
    %v533 = vadd.f32 %v295, %v532
    %534 = vdwg.mxu0
    %535 = vmatprep.subr.mxu0 %v153
    %536 = vmatpush1.msra.mxu0 %v152
    %537 = vmatprep.subr.mxu0 %v157
    %538 = vmatpush1.msra.mxu0 %v156
    %539 = vmatprep.subr.mxu0 %v161
    %540 = vmatpush1.msra.mxu0 %v160
    %541 = vmatprep.subr.mxu0 %v165
    %542 = vmatpush1.msra.mxu0 %v164
    %543 = vmatprep.subr.mxu0 %v169
    %544 = vmatpush1.msra.mxu0 %v168
    %545 = vmatprep.subr.mxu0 %v173
    %546 = vmatpush1.msra.mxu0 %v172
    %547 = vmatprep.subr.mxu0 %v177
    %548 = vmatpush1.msra.mxu0 %v176
    %549 = vmatprep.subr.mxu0 %v181
    %550 = vmatpush1.msra.mxu0 %v180
    %551 = vmatprep.subr.mxu0 %v185
    %552 = vmatpush1.msra.mxu0 %v184
    %553 = vmatprep.subr.mxu0 %v189
    %554 = vmatpush1.msra.mxu0 %v188
    %555 = vmatprep.subr.mxu0 %v193
    %556 = vmatpush1.msra.mxu0 %v192
    %557 = vmatprep.subr.mxu0 %v197
    %558 = vmatpush1.msra.mxu0 %v196
    %559 = vmatprep.subr.mxu0 %v201
    %560 = vmatpush1.msra.mxu0 %v200
    %561 = vmatprep.subr.mxu0 %v205
    %562 = vmatpush1.msra.mxu0 %v204
    %563 = vmatprep.subr.mxu0 %v209
    %564 = vmatpush1.msra.mxu0 %v208
    %565 = vmatprep.subr.mxu0 %v213
    %566 = vmatpush1.msra.mxu0 %v212
    %567 = vmatprep.subr.mxu0 %v217
    %568 = vmatpush1.msra.mxu0 %v216
    %569 = vmatprep.subr.mxu0 %v221
    %570 = vmatpush1.msra.mxu0 %v220
    %571 = vmatprep.subr.mxu0 %v225
    %572 = vmatpush1.msra.mxu0 %v224
    %573 = vmatprep.subr.mxu0 %v229
    %574 = vmatpush1.msra.mxu0 %v228
    %575 = vmatprep.subr.mxu0 %v233
    %576 = vmatpush1.msra.mxu0 %v232
    %577 = vmatprep.subr.mxu0 %v237
    %578 = vmatpush1.msra.mxu0 %v236
    %579 = vmatprep.subr.mxu0 %v241
    %580 = vmatpush1.msra.mxu0 %v240
    %581 = vmatprep.subr.mxu0 %v245
    %582 = vmatpush1.msra.mxu0 %v244
    %583 = vmatprep.subr.mxu0 %v249
    %584 = vmatpush1.msra.mxu0 %v248
    %585 = vmatprep.subr.mxu0 %v253
    %586 = vmatpush1.msra.mxu0 %v252
    %587 = vmatprep.subr.mxu0 %v257
    %588 = vmatpush1.msra.mxu0 %v256
    %589 = vmatprep.subr.mxu0 %v261
    %590 = vmatpush1.msra.mxu0 %v260
    %591 = vmatprep.subr.mxu0 %v265
    %592 = vmatpush1.msra.mxu0 %v264
    %593 = vmatprep.subr.mxu0 %v269
    %594 = vmatpush1.msra.mxu0 %v268
    %595 = vmatprep.subr.mxu0 %v273
    %596 = vmatpush1.msra.mxu0 %v272
    %597 = vmatprep.subr.mxu0 %v277
    %598 = vmatpush1.msra.mxu0 %v276
    %599 = vmatprep.mubr.f32.mxu0 %v317
    %600 = vmatmul.mubr.f32.gmra.mrb[0].mxu0 %v315
    %v601 = vpop.f32.mrb[0].mxu0
    %v602 = vadd.f32 %v531, %v601
    %v603 = vpop.f32.mrb[0].mxu0
    %v604 = vadd.f32 %v533, %v603
    %605 = vdwg.mxu0
    %v606 = vmax.f32 %v460, 0.0
    %v607 = vmax.f32 %v462, 0.0
    %v608 = vmax.f32 %v602, 0.0
    %v609 = vmax.f32 %v604, 0.0
    %v610 = vld [vmem:[%s3] sm:$0xff]
    %v611 = vld [vmem:[%s3 + $0x8] sm:$0xff]
    %v612 = vld [vmem:[%s3 + $0x10] sm:$0xff]
    %v613 = vld [vmem:[%s3 + $0x18] sm:$0xff]
    %v614 = vld [vmem:[%s3 + $0x20] sm:$0xff]
    %v615 = vld [vmem:[%s3 + $0x28] sm:$0xff]
    %v616 = vld [vmem:[%s3 + $0x30] sm:$0xff]
    %v617 = vld [vmem:[%s3 + $0x38] sm:$0xff]
    %v618 = vld [vmem:[%s3 + $0x40] sm:$0xff]
    %v619 = vld [vmem:[%s3 + $0x48] sm:$0xff]
    %v620 = vld [vmem:[%s3 + $0x50] sm:$0xff]
    %v621 = vld [vmem:[%s3 + $0x58] sm:$0xff]
    %v622 = vld [vmem:[%s3 + $0x60] sm:$0xff]
    %v623 = vld [vmem:[%s3 + $0x68] sm:$0xff]
    %v624 = vld [vmem:[%s3 + $0x70] sm:$0xff]
    %v625 = vld [vmem:[%s3 + $0x78] sm:$0xff]
    %v626 = vld [vmem:[%s3 + $0x80] sm:$0xff]
    %v627 = vld [vmem:[%s3 + $0x88] sm:$0xff]
    %v628 = vld [vmem:[%s3 + $0x90] sm:$0xff]
    %v629 = vld [vmem:[%s3 + $0x98] sm:$0xff]
    %v630 = vld [vmem:[%s3 + $0xa0] sm:$0xff]
    %v631 = vld [vmem:[%s3 + $0xa8] sm:$0xff]
    %v632 = vld [vmem:[%s3 + $0xb0] sm:$0xff]
    %v633 = vld [vmem:[%s3 + $0xb8] sm:$0xff]
    %v634 = vld [vmem:[%s3 + $0xc0] sm:$0xff]
    %v635 = vld [vmem:[%s3 + $0xc8] sm:$0xff]
    %v636 = vld [vmem:[%s3 + $0xd0] sm:$0xff]
    %v637 = vld [vmem:[%s3 + $0xd8] sm:$0xff]
    %v638 = vld [vmem:[%s3 + $0xe0] sm:$0xff]
    %v639 = vld [vmem:[%s3 + $0xe8] sm:$0xff]
    %v640 = vld [vmem:[%s3 + $0xf0] sm:$0xff]
    %v641 = vld [vmem:[%s3 + $0xf8] sm:$0xff]
    %v642 = vld [vmem:[%s3 + $0x100] sm:$0xff]
    %v643 = vld [vmem:[%s3 + $0x108] sm:$0xff]
    %v644 = vld [vmem:[%s3 + $0x110] sm:$0xff]
    %v645 = vld [vmem:[%s3 + $0x118] sm:$0xff]
    %v646 = vld [vmem:[%s3 + $0x120] sm:$0xff]
    %v647 = vld [vmem:[%s3 + $0x128] sm:$0xff]
    %v648 = vld [vmem:[%s3 + $0x130] sm:$0xff]
    %v649 = vld [vmem:[%s3 + $0x138] sm:$0xff]
    %v650 = vld [vmem:[%s3 + $0x140] sm:$0xff]
    %v651 = vld [vmem:[%s3 + $0x148] sm:$0xff]
    %v652 = vld [vmem:[%s3 + $0x150] sm:$0xff]
    %v653 = vld [vmem:[%s3 + $0x158] sm:$0xff]
    %v654 = vld [vmem:[%s3 + $0x160] sm:$0xff]
    %v655 = vld [vmem:[%s3 + $0x168] sm:$0xff]
    %v656 = vld [vmem:[%s3 + $0x170] sm:$0xff]
    %v657 = vld [vmem:[%s3 + $0x178] sm:$0xff]
    %v658 = vld [vmem:[%s3 + $0x180] sm:$0xff]
    %v659 = vld [vmem:[%s3 + $0x188] sm:$0xff]
    %v660 = vld [vmem:[%s3 + $0x190] sm:$0xff]
    %v661 = vld [vmem:[%s3 + $0x198] sm:$0xff]
    %v662 = vld [vmem:[%s3 + $0x1a0] sm:$0xff]
    %v663 = vld [vmem:[%s3 + $0x1a8] sm:$0xff]
    %v664 = vld [vmem:[%s3 + $0x1b0] sm:$0xff]
    %v665 = vld [vmem:[%s3 + $0x1b8] sm:$0xff]
    %v666 = vld [vmem:[%s3 + $0x1c0] sm:$0xff]
    %v667 = vld [vmem:[%s3 + $0x1c8] sm:$0xff]
    %v668 = vld [vmem:[%s3 + $0x1d0] sm:$0xff]
    %v669 = vld [vmem:[%s3 + $0x1d8] sm:$0xff]
    %v670 = vld [vmem:[%s3 + $0x1e0] sm:$0xff]
    %v671 = vld [vmem:[%s3 + $0x1e8] sm:$0xff]
    %v672 = vld [vmem:[%s3 + $0x1f0] sm:$0xff]
    %v673 = vld [vmem:[%s3 + $0x1f8] sm:$0xff]
    %v674 = vld [vmem:[%s4] sm:$0x1]
    %v676 = vlaneseq
    %v677 = vshrl.u32 %v676, 7
    %v678 = vsub.s32 0, %v677
    %v679 = vrot.slane %v674, %v678
    %681 = vmatprep.subr.mxu0 0.0
    %682 = vmatpush1.msra.mxu0 %v610
    %683 = vmatprep.subr.mxu0 0.0
    %684 = vmatpush1.msra.mxu0 %v611
    %685 = vmatprep.subr.mxu0 0.0
    %686 = vmatpush1.msra.mxu0 %v612
    %687 = vmatprep.subr.mxu0 0.0
    %688 = vmatpush1.msra.mxu0 %v613
    %689 = vmatprep.subr.mxu0 0.0
    %690 = vmatpush1.msra.mxu0 %v614
    %691 = vmatprep.subr.mxu0 0.0
    %692 = vmatpush1.msra.mxu0 %v615
    %693 = vmatprep.subr.mxu0 0.0
    %694 = vmatpush1.msra.mxu0 %v616
    %695 = vmatprep.subr.mxu0 0.0
    %696 = vmatpush1.msra.mxu0 %v617
    %697 = vmatprep.subr.mxu0 0.0
    %698 = vmatpush1.msra.mxu0 %v618
    %699 = vmatprep.subr.mxu0 0.0
    %700 = vmatpush1.msra.mxu0 %v619
    %701 = vmatprep.subr.mxu0 0.0
    %702 = vmatpush1.msra.mxu0 %v620
    %703 = vmatprep.subr.mxu0 0.0
    %704 = vmatpush1.msra.mxu0 %v621
    %705 = vmatprep.subr.mxu0 0.0
    %706 = vmatpush1.msra.mxu0 %v622
    %707 = vmatprep.subr.mxu0 0.0
    %708 = vmatpush1.msra.mxu0 %v623
    %709 = vmatprep.subr.mxu0 0.0
    %710 = vmatpush1.msra.mxu0 %v624
    %711 = vmatprep.subr.mxu0 0.0
    %712 = vmatpush1.msra.mxu0 %v625
    %713 = vmatprep.subr.mxu0 0.0
    %714 = vmatpush1.msra.mxu0 %v626
    %715 = vmatprep.subr.mxu0 0.0
    %716 = vmatpush1.msra.mxu0 %v627
    %717 = vmatprep.subr.mxu0 0.0
    %718 = vmatpush1.msra.mxu0 %v628
    %719 = vmatprep.subr.mxu0 0.0
    %720 = vmatpush1.msra.mxu0 %v629
    %721 = vmatprep.subr.mxu0 0.0
    %722 = vmatpush1.msra.mxu0 %v630
    %723 = vmatprep.subr.mxu0 0.0
    %724 = vmatpush1.msra.mxu0 %v631
    %725 = vmatprep.subr.mxu0 0.0
    %726 = vmatpush1.msra.mxu0 %v632
    %727 = vmatprep.subr.mxu0 0.0
    %728 = vmatpush1.msra.mxu0 %v633
    %729 = vmatprep.subr.mxu0 0.0
    %730 = vmatpush1.msra.mxu0 %v634
    %731 = vmatprep.subr.mxu0 0.0
    %732 = vmatpush1.msra.mxu0 %v635
    %733 = vmatprep.subr.mxu0 0.0
    %734 = vmatpush1.msra.mxu0 %v636
    %735 = vmatprep.subr.mxu0 0.0
    %736 = vmatpush1.msra.mxu0 %v637
    %737 = vmatprep.subr.mxu0 0.0
    %738 = vmatpush1.msra.mxu0 %v638
    %739 = vmatprep.subr.mxu0 0.0
    %740 = vmatpush1.msra.mxu0 %v639
    %741 = vmatprep.subr.mxu0 0.0
    %742 = vmatpush1.msra.mxu0 %v640
    %743 = vmatprep.subr.mxu0 0.0
    %744 = vmatpush1.msra.mxu0 %v641
    %745 = vmatprep.mubr.f32.mxu0 %v607
    %746 = vmatmul.mubr.f32.gmra.mrb[0].mxu0 %v606
    %v747 = vpop.f32.mrb[0].mxu0
    %v748 = vadd.f32 %v679, %v747
    %v749 = vpop.f32.mrb[0].mxu0
    %750 = vdwg.mxu0
    %751 = vmatprep.subr.mxu0 0.0
    %752 = vmatpush1.msra.mxu0 %v642
    %753 = vmatprep.subr.mxu0 0.0
    %754 = vmatpush1.msra.mxu0 %v643
    %755 = vmatprep.subr.mxu0 0.0
    %756 = vmatpush1.msra.mxu0 %v644
    %757 = vmatprep.subr.mxu0 0.0
    %758 = vmatpush1.msra.mxu0 %v645
    %759 = vmatprep.subr.mxu0 0.0
    %760 = vmatpush1.msra.mxu0 %v646
    %761 = vmatprep.subr.mxu0 0.0
    %762 = vmatpush1.msra.mxu0 %v647
    %763 = vmatprep.subr.mxu0 0.0
    %764 = vmatpush1.msra.mxu0 %v648
    %765 = vmatprep.subr.mxu0 0.0
    %766 = vmatpush1.msra.mxu0 %v649
    %767 = vmatprep.subr.mxu0 0.0
    %768 = vmatpush1.msra.mxu0 %v650
    %769 = vmatprep.subr.mxu0 0.0
    %770 = vmatpush1.msra.mxu0 %v651
    %771 = vmatprep.subr.mxu0 0.0
    %772 = vmatpush1.msra.mxu0 %v652
    %773 = vmatprep.subr.mxu0 0.0
    %774 = vmatpush1.msra.mxu0 %v653
    %775 = vmatprep.subr.mxu0 0.0
    %776 = vmatpush1.msra.mxu0 %v654
    %777 = vmatprep.subr.mxu0 0.0
    %778 = vmatpush1.msra.mxu0 %v655
    %779 = vmatprep.subr.mxu0 0.0
    %780 = vmatpush1.msra.mxu0 %v656
    %781 = vmatprep.subr.mxu0 0.0
    %782 = vmatpush1.msra.mxu0 %v657
    %783 = vmatprep.subr.mxu0 0.0
    %784 = vmatpush1.msra.mxu0 %v658
    %785 = vmatprep.subr.mxu0 0.0
    %786 = vmatpush1.msra.mxu0 %v659
    %787 = vmatprep.subr.mxu0 0.0
    %788 = vmatpush1.msra.mxu0 %v660
    %789 = vmatprep.subr.mxu0 0.0
    %790 = vmatpush1.msra.mxu0 %v661
    %791 = vmatprep.subr.mxu0 0.0
    %792 = vmatpush1.msra.mxu0 %v662
    %793 = vmatprep.subr.mxu0 0.0
    %794 = vmatpush1.msra.mxu0 %v663
    %795 = vmatprep.subr.mxu0 0.0
    %796 = vmatpush1.msra.mxu0 %v664
    %797 = vmatprep.subr.mxu0 0.0
    %798 = vmatpush1.msra.mxu0 %v665
    %799 = vmatprep.subr.mxu0 0.0
    %800 = vmatpush1.msra.mxu0 %v666
    %801 = vmatprep.subr.mxu0 0.0
    %802 = vmatpush1.msra.mxu0 %v667
    %803 = vmatprep.subr.mxu0 0.0
    %804 = vmatpush1.msra.mxu0 %v668
    %805 = vmatprep.subr.mxu0 0.0
    %806 = vmatpush1.msra.mxu0 %v669
    %807 = vmatprep.subr.mxu0 0.0
    %808 = vmatpush1.msra.mxu0 %v670
    %809 = vmatprep.subr.mxu0 0.0
    %810 = vmatpush1.msra.mxu0 %v671
    %811 = vmatprep.subr.mxu0 0.0
    %812 = vmatpush1.msra.mxu0 %v672
    %813 = vmatprep.subr.mxu0 0.0
    %814 = vmatpush1.msra.mxu0 %v673
    %815 = vmatprep.mubr.f32.mxu0 %v609
    %816 = vmatmul.mubr.f32.gmra.mrb[0].mxu0 %v608
    %v817 = vpop.f32.mrb[0].mxu0
    %v818 = vadd.f32 %v748, %v817
    %v819 = vpop.f32.mrb[0].mxu0
    %820 = vdwg.mxu0
    %v821 = vxor.u32 %v818, 2147483648
    %v822 = vmul.f32 %v821, 1.442695
    %v823 = vpow.pop %v822
    %v824 = vadd.f32 %v823, 1.0
    %v825 = vrcp.pop %v824
    %v826 = vmul.f32 1.0, %v825
    %vm827 = vcmask 730112
    %828 = vst.msk [vmem:[#allocation2] sm:$0x3] %vm827, %v826
    // Predicated region
    $region22: #{custom_mlp_forward.3} parent=1 // pred_check
      _
    $region23: #{custom_mlp_forward.3} parent=1 // pred_check_branch
      %830 = sbr.rel (0) target = $region25
    $region24: #{custom_mlp_forward.3} parent=1 // pred_region
      %s832 = ssub.s32 32, 32
      %833 = vsyncadd [#allocation3], %s832
      %s835 = sshll.u32 [#allocation2], 4
      %s836 = int_to_ptr.vmem [resolvable:$true] %s835
      %838 = dma.vmem_to_hbm [thread:$0]  %s836, 32, %s5, [#allocation3]
    $region25: #{custom_mlp_forward.3} parent=1 // pred_fallthru
      _
    // Predicated region
    $region26: #{custom_mlp_forward.3} parent=1 // pred_check
      _
    $region27: #{custom_mlp_forward.3} parent=1 // pred_check_branch
      %840 = sbr.rel (0) target = $region29
    $region28: #{custom_mlp_forward.3} parent=1 // pred_region
      %841 = dma.done [#allocation3], 32
    $region29: #{custom_mlp_forward.3} parent=1 // pred_fallthru
      _
    %842 = vsyncpa [#allocation3], 1

// kernel: custom_mlp_forward.2
$region0: #{custom_mlp_forward.2}
  #allocation0 [shape = 'u32[]', space=smem, size = 0x4, offset = 0x4, fixed_abs, tag = 'smem constant byte address 0x4 - core index']
  #allocation1 [shape = 'u32[144,128]{1,0:T(1,128)}', space=vmem, size = 0x12000, scoped, tag = 'internal scratch']
  %s0 = inlined_call_operand.vmem [shape: f32[2,150528], index: 0, kind: input, shape index: {}]
  %s1 = inlined_call_operand.hbm [shape: f32[150528,512], index: 1, kind: input, shape index: {}]
  %s2 = inlined_call_operand.vmem [shape: f32[1,512], index: 2, kind: input, shape index: {}]
  %s3 = inlined_call_operand.vmem [shape: f32[2,512], index: 3, kind: output, shape index: {}]
  %s4 = sld [smem:[#allocation0]]
  $region57: #{custom_mlp_forward.2} parent=0
    _
  %s6 = ssub.s32 1, %s4
  %s7 = scalar_select 0, %s6, %s4
  $region1: #{custom_mlp_forward.2} parent=0
    #allocation2 [shape = 'u8[14680064]{0}', space=vmem, size = 0xe00000, scoped, tag = 'input window, operand 1']
    #allocation3 [shape = 's32[2]{0}', space=sflag, size = 0x8, scoped, tag = 'scoped memory for custom_mlp_forward.2']
    %8 = vsyncpa [#allocation3], 0
    %s9 = scalar_lea.sflag [#allocation3], 1
    %10 = vsyncpa %s9, 0
    loop: start=0, step=1, limit=44
    $region2: #{custom_mlp_forward.2} parent=1 // loop_pre_header
      _
    $region3: #{custom_mlp_forward.2} parent=1 // loop_header
      %s12 = sphi 0, %s16
      %p13 = scmp.ge.s32.totalorder %s12, 44
      %s19 = sphi 0, %s31
      %s20 = sphi 0, %s27
      %s21 = sphi 0, %s19
      %s22 = sphi 0, %s20
      %s23 = sphi 0, %s21
      %s24 = sphi 0, %s22
      %s34 = sphi 0, %s36
      %s37 = sphi 0, %s34
      %s38 = sphi 0, %s37
      %s54 = sphi 0, %s38
      %s62 = sphi 0, %s64
      %s65 = sphi 0, %s62
      %s66 = sphi 0, %s65
      %s82 = sphi 0, %s66
      %s88 = sphi 0, %s90
      %s91 = sphi 0, %s88
      %s92 = sphi 0, %s91
      %s108 = sphi 0, %s92
      %s114 = sphi 0, %s116
      %s117 = sphi 0, %s114
      %s118 = sphi 0, %s117
      %s134 = sphi 0, %s118
    $region4: #{custom_mlp_forward.2} parent=1 // loop_header_branch
      %15 = sbr.rel (%p13) target = $region8
    $region5: #{custom_mlp_forward.2} parent=1 // loop_body
      %s17 = ssub.s32 %s12, 1
      %s18 = ssub.s32 %s12, 2
      %s25 = sadd.s32 1, %s20
      %p26 = scmp.ge.s32.totalorder %s25, 21
      %s27 = scalar_select %p26, 0, %s25
      %s28 = sadd.s32 1, %s19
      %s29 = scalar_select %p26, %s28, %s19
      %p30 = scmp.ge.s32.totalorder %s29, 2
      %s31 = scalar_select %p30, 0, %s29
      %s32 = ssub.s32 %s20, %s27
      %p33 = scmp.eq.s32.totalorder %s32, 0
      %s35 = sadd.s32 %s34, 1
      %s36 = scalar_select %p33, %s34, %s35
      %p39 = pneg %p33
      %p40 = scmp.eq.s32.totalorder %s12, 41
      %p41 = por %p39, %p40
      %p42 = scmp.ne.s32.totalorder %s34, %s37
      %p43 = scmp.eq.s32.totalorder %s12, 0
      %p44 = por %p42, %p43
      %p45 = scmp.ne.s32.totalorder %s34, %s37
      %p46 = scmp.eq.s32.totalorder %s17, 41
      %p47 = por %p45, %p46
      %p48 = scmp.ne.s32.totalorder %s37, %s38
      %p49 = scmp.eq.s32.totalorder %s17, 0
      %p50 = por %p48, %p49
      %p51 = scmp.ne.s32.totalorder %s37, %s38
      %p52 = scmp.eq.s32.totalorder %s18, 41
      %p53 = por %p51, %p52
      %p55 = scmp.ne.s32.totalorder %s38, %s54
      %p56 = scmp.eq.s32.totalorder %s18, 0
      %p57 = por %p55, %p56
      %s58 = ssub.s32 %s20, %s27
      %s59 = ssub.s32 %s19, %s31
      %s60 = sor.u32 %s58, %s59
      %p61 = scmp.eq.s32.totalorder %s60, 0
      %s63 = sadd.s32 %s62, 1
      %s64 = scalar_select %p61, %s62, %s63
      %p67 = pneg %p61
      %p68 = scmp.eq.s32.totalorder %s12, 41
      %p69 = por %p67, %p68
      %p70 = scmp.ne.s32.totalorder %s62, %s65
      %p71 = scmp.eq.s32.totalorder %s12, 0
      %p72 = por %p70, %p71
      %p73 = scmp.ne.s32.totalorder %s62, %s65
      %p74 = scmp.eq.s32.totalorder %s17, 41
      %p75 = por %p73, %p74
      %p76 = scmp.ne.s32.totalorder %s65, %s66
      %p77 = scmp.eq.s32.totalorder %s17, 0
      %p78 = por %p76, %p77
      %p79 = scmp.ne.s32.totalorder %s65, %s66
      %p80 = scmp.eq.s32.totalorder %s18, 41
      %p81 = por %p79, %p80
      %p83 = scmp.ne.s32.totalorder %s66, %s82
      %p84 = scmp.eq.s32.totalorder %s18, 0
      %p85 = por %p83, %p84
      %s86 = ssub.s32 %s19, %s31
      %p87 = scmp.eq.s32.totalorder %s86, 0
      %s89 = sadd.s32 %s88, 1
      %s90 = scalar_select %p87, %s88, %s89
      %p93 = pneg %p87
      %p94 = scmp.eq.s32.totalorder %s12, 41
      %p95 = por %p93, %p94
      %p96 = scmp.ne.s32.totalorder %s88, %s91
      %p97 = scmp.eq.s32.totalorder %s12, 0
      %p98 = por %p96, %p97
      %p99 = scmp.ne.s32.totalorder %s88, %s91
      %p100 = scmp.eq.s32.totalorder %s17, 41
      %p101 = por %p99, %p100
      %p102 = scmp.ne.s32.totalorder %s91, %s92
      %p103 = scmp.eq.s32.totalorder %s17, 0
      %p104 = por %p102, %p103
      %p105 = scmp.ne.s32.totalorder %s91, %s92
      %p106 = scmp.eq.s32.totalorder %s18, 41
      %p107 = por %p105, %p106
      %p109 = scmp.ne.s32.totalorder %s92, %s108
      %p110 = scmp.eq.s32.totalorder %s18, 0
      %p111 = por %p109, %p110
      %s112 = ssub.s32 %s19, %s31
      %p113 = scmp.eq.s32.totalorder %s112, 0
      %s115 = sadd.s32 %s114, 1
      %s116 = scalar_select %p113, %s114, %s115
      %p119 = pneg %p113
      %p120 = scmp.eq.s32.totalorder %s12, 41
      %p121 = por %p119, %p120
      %p122 = scmp.ne.s32.totalorder %s114, %s117
      %p123 = scmp.eq.s32.totalorder %s12, 0
      %p124 = por %p122, %p123
      %p125 = scmp.ne.s32.totalorder %s114, %s117
      %p126 = scmp.eq.s32.totalorder %s17, 41
      %p127 = por %p125, %p126
      %p128 = scmp.ne.s32.totalorder %s117, %s118
      %p129 = scmp.eq.s32.totalorder %s17, 0
      %p130 = por %p128, %p129
      %p131 = scmp.ne.s32.totalorder %s117, %s118
      %p132 = scmp.eq.s32.totalorder %s18, 41
      %p133 = por %p131, %p132
      %p135 = scmp.ne.s32.totalorder %s118, %s134
      %p136 = scmp.eq.s32.totalorder %s18, 0
      %p137 = por %p135, %p136
      %p138 = scmp.le.s32.totalorder 1, %s12
      %p139 = scmp.lt.s32.totalorder %s12, 43
      %p140 = pnand %p138, %p139
      %p141 = pneg %p140
      // Predicated region
      $region9: #{custom_mlp_forward.2} parent=5 // pred_check
        _
      $region10: #{custom_mlp_forward.2} parent=5 // pred_check_branch
        %143 = sbr.rel (%p140) target = $region12
      $region11: #{custom_mlp_forward.2} parent=5 // pred_region
        %s144 = ssub.s32 %s12, 1
      $region12: #{custom_mlp_forward.2} parent=5 // pred_fallthru
        _
      %p145 = scmp.lt.s32.totalorder %s12, 42
      // Predicated region
      $region13: #{custom_mlp_forward.2} parent=5 // pred_check
        %p146 = pneg %p145
      $region14: #{custom_mlp_forward.2} parent=5 // pred_check_branch
        %148 = sbr.rel (%p146) target = $region16
      $region15: #{custom_mlp_forward.2} parent=5 // pred_region
        // Predicated region
        $region17: #{custom_mlp_forward.2} parent=15 // pred_check
          %p149 = pneg %p44
        $region18: #{custom_mlp_forward.2} parent=15 // pred_check_branch
          %151 = sbr.rel (%p149) target = $region20
        $region19: #{custom_mlp_forward.2} parent=15 // pred_region
          %s152 = smul.u32 56, %s20
          %p153 = scmp.lt.s32.totalorder %s152, 1175
          %s154 = scalar_select %p153, %s152, 1175
          %s155 = smul.addr %s154, 2
          %s156 = scalar_lea.vmem %s0, %s155
          %s157 = smul.u32 56, %s20
        $region20: #{custom_mlp_forward.2} parent=15 // pred_fallthru
          _
        // Predicated region
        $region21: #{custom_mlp_forward.2} parent=15 // pred_check
          %p158 = pneg %p72
        $region22: #{custom_mlp_forward.2} parent=15 // pred_check_branch
          %160 = sbr.rel (%p158) target = $region24
        $region23: #{custom_mlp_forward.2} parent=15 // pred_region
          %s161 = sand.u32 %s62, 1
          %s162 = scalar_lea.sflag [#allocation3], %s161
          %s163 = sand.u32 %s62, 1
          %s164 = smul.addr %s163, 14336
          %s165 = scalar_lea.vmem [#allocation2], %s164
          %s166 = smul.u32 896, %s20
          %s167 = smul.u32 2, %s19
          %s169 = ssub.s32 229376, 229376
          %170 = vsyncadd %s162, %s169
          %s171 = smul.addr %s166, 4
          %s172 = sadd.s32 %s167, %s171
          %s173 = smul.addr %s172, 128
          %s174 = scalar_lea.hbm %s1, %s173
          %s175 = sshll.u32 %s165, 4
          %s176 = int_to_ptr.vmem [resolvable:$true] %s175
          %181 = dma.hbm_to_vmem [thread:$0]  %s174, 229376, %s176, %s162, 512, 256, 16
        $region24: #{custom_mlp_forward.2} parent=15 // pred_fallthru
          _
        // Predicated region
        $region25: #{custom_mlp_forward.2} parent=15 // pred_check
          %p182 = pneg %p98
        $region26: #{custom_mlp_forward.2} parent=15 // pred_check_branch
          %184 = sbr.rel (%p182) target = $region28
        $region27: #{custom_mlp_forward.2} parent=15 // pred_region
          %s185 = smul.u32 2, %s19
          %p186 = scmp.lt.s32.totalorder %s185, 3
          %s187 = scalar_select %p186, %s185, 3
          %s188 = scalar_lea.vmem %s2, %s187
          %s189 = smul.u32 2, %s19
        $region28: #{custom_mlp_forward.2} parent=15 // pred_fallthru
          _
      $region16: #{custom_mlp_forward.2} parent=5 // pred_fallthru
        _
      %p190 = scmp.le.s32.totalorder 1, %s12
      %p191 = scmp.lt.s32.totalorder %s12, 43
      %p192 = pnand %p190, %p191
      %p193 = pneg %p192
      // Predicated region
      $region29: #{custom_mlp_forward.2} parent=5 // pred_check
        _
      $region30: #{custom_mlp_forward.2} parent=5 // pred_check_branch
        %195 = sbr.rel (%p192) target = $region32
      $region31: #{custom_mlp_forward.2} parent=5 // pred_region
        %s196 = ssub.s32 %s12, 1
        %s197 = sand.u32 %s65, 1
        %s198 = scalar_lea.sflag [#allocation3], %s197
        %s199 = sand.u32 %s65, 1
        %s200 = smul.addr %s199, 14336
        %s201 = scalar_lea.vmem [#allocation2], %s200
        // Predicated region
        $region33: #{custom_mlp_forward.2} parent=31 // pred_check
          %p202 = pneg %p78
        $region34: #{custom_mlp_forward.2} parent=31 // pred_check_branch
          %204 = sbr.rel (%p202) target = $region36
        $region35: #{custom_mlp_forward.2} parent=31 // pred_region
          %205 = dma.done %s198, 229376
        $region36: #{custom_mlp_forward.2} parent=31 // pred_fallthru
          _
        %s206 = smul.u32 56, %s22
        %p207 = scmp.lt.s32.totalorder %s206, 1175
        %s208 = scalar_select %p207, %s206, 1175
        %s209 = smul.addr %s208, 2
        %s210 = scalar_lea.vmem %s0, %s209
        %p211 = pneg %p50
        %p212 = pneg %p47
        %s213 = sand.u32 %s65, 1
        %s214 = scalar_lea.sflag [#allocation3], %s213
        %s215 = sand.u32 %s65, 1
        %s216 = smul.addr %s215, 14336
        %s217 = scalar_lea.vmem [#allocation2], %s216
        %p218 = pneg %p78
        %p219 = pneg %p75
        %s220 = smul.u32 2, %s21
        %p221 = scmp.lt.s32.totalorder %s220, 3
        %s222 = scalar_select %p221, %s220, 3
        %s223 = scalar_lea.vmem %s2, %s222
        %p224 = pneg %p104
        %p225 = pneg %p101
        %p226 = pneg %p130
        %p227 = pneg %p127
        %s228 = smul.u32 2, %s21
        %p229 = scmp.lt.s32.totalorder %s228, 3
        %s230 = scalar_select %p229, %s228, 3
        %s231 = smul.addr %s230, 2
        %s232 = scalar_lea.vmem %s3, %s231
        %s233 = smul.u32 56, %s22
        %p234 = scmp.lt.s32.totalorder %s233, 1175
        %s235 = scalar_select %p234, %s233, 1175
        %s236 = smul.addr %s235, 2
        %s237 = scalar_lea.vmem %s0, %s236
        %s238 = smul.u32 56, %s22
        %s239 = smul.u32 896, %s22
        %s240 = smul.u32 2, %s21
        %s241 = smul.u32 2, %s21
        %p242 = scmp.lt.s32.totalorder %s241, 3
        %s243 = scalar_select %p242, %s241, 3
        %s244 = scalar_lea.vmem %s2, %s243
        %s245 = smul.u32 2, %s21
        %s246 = smul.u32 2, %s21
        %p247 = scmp.lt.s32.totalorder %s246, 3
        %s248 = scalar_select %p247, %s246, 3
        %s249 = smul.addr %s248, 2
        %s250 = scalar_lea.vmem %s3, %s249
        %s251 = smul.u32 2, %s21
        %p252 = scmp.eq.s32.totalorder %s22, 0
        // Predicated region
        $region37: #{custom_mlp_forward.2} parent=31 // pred_check
          %p253 = pneg %p252
        $region38: #{custom_mlp_forward.2} parent=31 // pred_check_branch
          %255 = sbr.rel (%p253) target = $region40
        $region39: #{custom_mlp_forward.2} parent=31 // pred_region
          %256 = vst [vmem:[%s250] sm:$0xf] 0.0
        $region40: #{custom_mlp_forward.2} parent=31 // pred_fallthru
          _
        %v257 = vld [vmem:[%s250] sm:$0xf]
        %v258 = vld [vmem:[%s237] sm:$0xff]
        %v259 = vld [vmem:[%s237 + $0x8] sm:$0xff]
        %v260 = vld [vmem:[%s237 + $0x10] sm:$0xff]
        %v261 = vld [vmem:[%s237 + $0x18] sm:$0xff]
        %v262 = vld [vmem:[%s237 + $0x20] sm:$0xff]
        %v263 = vld [vmem:[%s237 + $0x28] sm:$0xff]
        %v264 = vld [vmem:[%s237 + $0x30] sm:$0xff]
        %v265 = vld [vmem:[%s237 + $0x38] sm:$0xff]
        %v266 = vld [vmem:[%s237 + $0x40] sm:$0xff]
        %v267 = vld [vmem:[%s237 + $0x48] sm:$0xff]
        %v268 = vld [vmem:[%s237 + $0x50] sm:$0xff]
        %v269 = vld [vmem:[%s237 + $0x58] sm:$0xff]
        %v270 = vld [vmem:[%s237 + $0x60] sm:$0xff]
        %v271 = vld [vmem:[%s237 + $0x68] sm:$0xff]
        %v272 = vld [vmem:[%s201] sm:$0xff]
        %v273 = vld [vmem:[%s201 + $0x8] sm:$0xff]
        %v274 = vld [vmem:[%s201 + $0x10] sm:$0xff]
        %v275 = vld [vmem:[%s201 + $0x18] sm:$0xff]
        %v276 = vld [vmem:[%s201 + $0x20] sm:$0xff]
        %v277 = vld [vmem:[%s201 + $0x28] sm:$0xff]
        %v278 = vld [vmem:[%s201 + $0x30] sm:$0xff]
        %v279 = vld [vmem:[%s201 + $0x38] sm:$0xff]
        %v280 = vld [vmem:[%s201 + $0x40] sm:$0xff]
        %v281 = vld [vmem:[%s201 + $0x48] sm:$0xff]
        %v282 = vld [vmem:[%s201 + $0x50] sm:$0xff]
        %v283 = vld [vmem:[%s201 + $0x58] sm:$0xff]
        %v284 = vld [vmem:[%s201 + $0x60] sm:$0xff]
        %v285 = vld [vmem:[%s201 + $0x68] sm:$0xff]
        %v286 = vld [vmem:[%s201 + $0x70] sm:$0xff]
        %v287 = vld [vmem:[%s201 + $0x78] sm:$0xff]
        %v288 = vld [vmem:[%s201 + $0x80] sm:$0xff]
        %v289 = vld [vmem:[%s201 + $0x88] sm:$0xff]
        %v290 = vld [vmem:[%s201 + $0x90] sm:$0xff]
        %v291 = vld [vmem:[%s201 + $0x98] sm:$0xff]
        %v292 = vld [vmem:[%s201 + $0xa0] sm:$0xff]
        %v293 = vld [vmem:[%s201 + $0xa8] sm:$0xff]
        %v294 = vld [vmem:[%s201 + $0xb0] sm:$0xff]
        %v295 = vld [vmem:[%s201 + $0xb8] sm:$0xff]
        %v296 = vld [vmem:[%s201 + $0xc0] sm:$0xff]
        %v297 = vld [vmem:[%s201 + $0xc8] sm:$0xff]
        %v298 = vld [vmem:[%s201 + $0xd0] sm:$0xff]
        %v299 = vld [vmem:[%s201 + $0xd8] sm:$0xff]
        %v300 = vld [vmem:[%s201 + $0xe0] sm:$0xff]
        %v301 = vld [vmem:[%s201 + $0xe8] sm:$0xff]
        %v302 = vld [vmem:[%s201 + $0xf0] sm:$0xff]
        %v303 = vld [vmem:[%s201 + $0xf8] sm:$0xff]
        %v304 = vld [vmem:[%s201 + $0x100] sm:$0xff]
        %v305 = vld [vmem:[%s201 + $0x108] sm:$0xff]
        %v306 = vld [vmem:[%s201 + $0x110] sm:$0xff]
        %v307 = vld [vmem:[%s201 + $0x118] sm:$0xff]
        %v308 = vld [vmem:[%s201 + $0x120] sm:$0xff]
        %v309 = vld [vmem:[%s201 + $0x128] sm:$0xff]
        %v310 = vld [vmem:[%s201 + $0x130] sm:$0xff]
        %v311 = vld [vmem:[%s201 + $0x138] sm:$0xff]
        %v312 = vld [vmem:[%s201 + $0x140] sm:$0xff]
        %v313 = vld [vmem:[%s201 + $0x148] sm:$0xff]
        %v314 = vld [vmem:[%s201 + $0x150] sm:$0xff]
        %v315 = vld [vmem:[%s201 + $0x158] sm:$0xff]
        %v316 = vld [vmem:[%s201 + $0x160] sm:$0xff]
        %v317 = vld [vmem:[%s201 + $0x168] sm:$0xff]
        %v318 = vld [vmem:[%s201 + $0x170] sm:$0xff]
        %v319 = vld [vmem:[%s201 + $0x178] sm:$0xff]
        %v320 = vld [vmem:[%s201 + $0x180] sm:$0xff]
        %v321 = vld [vmem:[%s201 + $0x188] sm:$0xff]
        %v322 = vld [vmem:[%s201 + $0x190] sm:$0xff]
        %v323 = vld [vmem:[%s201 + $0x198] sm:$0xff]
        %v324 = vld [vmem:[%s201 + $0x1a0] sm:$0xff]
        %v325 = vld [vmem:[%s201 + $0x1a8] sm:$0xff]
        %v326 = vld [vmem:[%s201 + $0x1b0] sm:$0xff]
        %v327 = vld [vmem:[%s201 + $0x1b8] sm:$0xff]
        %v328 = vld [vmem:[%s201 + $0x1c0] sm:$0xff]
        %v329 = vld [vmem:[%s201 + $0x1c8] sm:$0xff]
        %v330 = vld [vmem:[%s201 + $0x1d0] sm:$0xff]
        %v331 = vld [vmem:[%s201 + $0x1d8] sm:$0xff]
        %v332 = vld [vmem:[%s201 + $0x1e0] sm:$0xff]
        %v333 = vld [vmem:[%s201 + $0x1e8] sm:$0xff]
        %v334 = vld [vmem:[%s201 + $0x1f0] sm:$0xff]
        %v335 = vld [vmem:[%s201 + $0x1f8] sm:$0xff]
        %v336 = vld [vmem:[%s201 + $0x200] sm:$0xff]
        %v337 = vld [vmem:[%s201 + $0x208] sm:$0xff]
        %v338 = vld [vmem:[%s201 + $0x210] sm:$0xff]
        %v339 = vld [vmem:[%s201 + $0x218] sm:$0xff]
        %v340 = vld [vmem:[%s201 + $0x220] sm:$0xff]
        %v341 = vld [vmem:[%s201 + $0x228] sm:$0xff]
        %v342 = vld [vmem:[%s201 + $0x230] sm:$0xff]
        %v343 = vld [vmem:[%s201 + $0x238] sm:$0xff]
        %v344 = vld [vmem:[%s201 + $0x240] sm:$0xff]
        %v345 = vld [vmem:[%s201 + $0x248] sm:$0xff]
        %v346 = vld [vmem:[%s201 + $0x250] sm:$0xff]
        %v347 = vld [vmem:[%s201 + $0x258] sm:$0xff]
        %v348 = vld [vmem:[%s201 + $0x260] sm:$0xff]
        %v349 = vld [vmem:[%s201 + $0x268] sm:$0xff]
        %v350 = vld [vmem:[%s201 + $0x270] sm:$0xff]
        %v351 = vld [vmem:[%s201 + $0x278] sm:$0xff]
        %v352 = vld [vmem:[%s201 + $0x280] sm:$0xff]
        %v353 = vld [vmem:[%s201 + $0x288] sm:$0xff]
        %v354 = vld [vmem:[%s201 + $0x290] sm:$0xff]
        %v355 = vld [vmem:[%s201 + $0x298] sm:$0xff]
        %v356 = vld [vmem:[%s201 + $0x2a0] sm:$0xff]
        %v357 = vld [vmem:[%s201 + $0x2a8] sm:$0xff]
        %v358 = vld [vmem:[%s201 + $0x2b0] sm:$0xff]
        %v359 = vld [vmem:[%s201 + $0x2b8] sm:$0xff]
        %v360 = vld [vmem:[%s201 + $0x2c0] sm:$0xff]
        %v361 = vld [vmem:[%s201 + $0x2c8] sm:$0xff]
        %v362 = vld [vmem:[%s201 + $0x2d0] sm:$0xff]
        %v363 = vld [vmem:[%s201 + $0x2d8] sm:$0xff]
        %v364 = vld [vmem:[%s201 + $0x2e0] sm:$0xff]
        %v365 = vld [vmem:[%s201 + $0x2e8] sm:$0xff]
        %v366 = vld [vmem:[%s201 + $0x2f0] sm:$0xff]
        %v367 = vld [vmem:[%s201 + $0x2f8] sm:$0xff]
        %v368 = vld [vmem:[%s201 + $0x300] sm:$0xff]
        %v369 = vld [vmem:[%s201 + $0x308] sm:$0xff]
        %v370 = vld [vmem:[%s201 + $0x310] sm:$0xff]
        %v371 = vld [vmem:[%s201 + $0x318] sm:$0xff]
        %v372 = vld [vmem:[%s201 + $0x320] sm:$0xff]
        %v373 = vld [vmem:[%s201 + $0x328] sm:$0xff]
        %v374 = vld [vmem:[%s201 + $0x330] sm:$0xff]
        %v375 = vld [vmem:[%s201 + $0x338] sm:$0xff]
        %v376 = vld [vmem:[%s201 + $0x340] sm:$0xff]
        %v377 = vld [vmem:[%s201 + $0x348] sm:$0xff]
        %v378 = vld [vmem:[%s201 + $0x350] sm:$0xff]
        %v379 = vld [vmem:[%s201 + $0x358] sm:$0xff]
        %v380 = vld [vmem:[%s201 + $0x360] sm:$0xff]
        %v381 = vld [vmem:[%s201 + $0x368] sm:$0xff]
        %v382 = vld [vmem:[%s201 + $0x370] sm:$0xff]
        %v383 = vld [vmem:[%s201 + $0x378] sm:$0xff]
        %v384 = vld [vmem:[%s201 + $0x380] sm:$0xff]
        %v385 = vld [vmem:[%s201 + $0x388] sm:$0xff]
        %v386 = vld [vmem:[%s201 + $0x390] sm:$0xff]
        %v387 = vld [vmem:[%s201 + $0x398] sm:$0xff]
        %v388 = vld [vmem:[%s201 + $0x3a0] sm:$0xff]
        %v389 = vld [vmem:[%s201 + $0x3a8] sm:$0xff]
        %v390 = vld [vmem:[%s201 + $0x3b0] sm:$0xff]
        %v391 = vld [vmem:[%s201 + $0x3b8] sm:$0xff]
        %v392 = vld [vmem:[%s201 + $0x3c0] sm:$0xff]
        %v393 = vld [vmem:[%s201 + $0x3c8] sm:$0xff]
        %v394 = vld [vmem:[%s201 + $0x3d0] sm:$0xff]
        %v395 = vld [vmem:[%s201 + $0x3d8] sm:$0xff]
        %v396 = vld [vmem:[%s201 + $0x3e0] sm:$0xff]
        %v397 = vld [vmem:[%s201 + $0x3e8] sm:$0xff]
        %v398 = vld [vmem:[%s201 + $0x3f0] sm:$0xff]
        %v399 = vld [vmem:[%s201 + $0x3f8] sm:$0xff]
        %v400 = vld [vmem:[%s201 + $0x400] sm:$0xff]
        %v401 = vld [vmem:[%s201 + $0x408] sm:$0xff]
        %v402 = vld [vmem:[%s201 + $0x410] sm:$0xff]
        %v403 = vld [vmem:[%s201 + $0x418] sm:$0xff]
        %v404 = vld [vmem:[%s201 + $0x420] sm:$0xff]
        %v405 = vld [vmem:[%s201 + $0x428] sm:$0xff]
        %v406 = vld [vmem:[%s201 + $0x430] sm:$0xff]
        %v407 = vld [vmem:[%s201 + $0x438] sm:$0xff]
        %v408 = vld [vmem:[%s201 + $0x440] sm:$0xff]
        %v409 = vld [vmem:[%s201 + $0x448] sm:$0xff]
        %v410 = vld [vmem:[%s201 + $0x450] sm:$0xff]
        %v411 = vld [vmem:[%s201 + $0x458] sm:$0xff]
        %v412 = vld [vmem:[%s201 + $0x460] sm:$0xff]
        %v413 = vld [vmem:[%s201 + $0x468] sm:$0xff]
        %v414 = vld [vmem:[%s201 + $0x470] sm:$0xff]
        %v415 = vld [vmem:[%s201 + $0x478] sm:$0xff]
        %v416 = vld [vmem:[%s201 + $0x480] sm:$0xff]
        %v417 = vld [vmem:[%s201 + $0x488] sm:$0xff]
        %v418 = vld [vmem:[%s201 + $0x490] sm:$0xff]
        %v419 = vld [vmem:[%s201 + $0x498] sm:$0xff]
        %v420 = vld [vmem:[%s201 + $0x4a0] sm:$0xff]
        %v421 = vld [vmem:[%s201 + $0x4a8] sm:$0xff]
        %v422 = vld [vmem:[%s201 + $0x4b0] sm:$0xff]
        %v423 = vld [vmem:[%s201 + $0x4b8] sm:$0xff]
        %v424 = vld [vmem:[%s201 + $0x4c0] sm:$0xff]
        %v425 = vld [vmem:[%s201 + $0x4c8] sm:$0xff]
        %v426 = vld [vmem:[%s201 + $0x4d0] sm:$0xff]
        %v427 = vld [vmem:[%s201 + $0x4d8] sm:$0xff]
        %v428 = vld [vmem:[%s201 + $0x4e0] sm:$0xff]
        %v429 = vld [vmem:[%s201 + $0x4e8] sm:$0xff]
        %v430 = vld [vmem:[%s201 + $0x4f0] sm:$0xff]
        %v431 = vld [vmem:[%s201 + $0x4f8] sm:$0xff]
        %v432 = vld [vmem:[%s201 + $0x500] sm:$0xff]
        %v433 = vld [vmem:[%s201 + $0x508] sm:$0xff]
        %v434 = vld [vmem:[%s201 + $0x510] sm:$0xff]
        %v435 = vld [vmem:[%s201 + $0x518] sm:$0xff]
        %v436 = vld [vmem:[%s201 + $0x520] sm:$0xff]
        %v437 = vld [vmem:[%s201 + $0x528] sm:$0xff]
        %v438 = vld [vmem:[%s201 + $0x530] sm:$0xff]
        %v439 = vld [vmem:[%s201 + $0x538] sm:$0xff]
        %v440 = vld [vmem:[%s201 + $0x540] sm:$0xff]
        %v441 = vld [vmem:[%s201 + $0x548] sm:$0xff]
        %v442 = vld [vmem:[%s201 + $0x550] sm:$0xff]
        %v443 = vld [vmem:[%s201 + $0x558] sm:$0xff]
        %v444 = vld [vmem:[%s201 + $0x560] sm:$0xff]
        %v445 = vld [vmem:[%s201 + $0x568] sm:$0xff]
        %v446 = vld [vmem:[%s201 + $0x570] sm:$0xff]
        %v447 = vld [vmem:[%s201 + $0x578] sm:$0xff]
        %v448 = vld [vmem:[%s201 + $0x580] sm:$0xff]
        %v449 = vld [vmem:[%s201 + $0x588] sm:$0xff]
        %v450 = vld [vmem:[%s201 + $0x590] sm:$0xff]
        %v451 = vld [vmem:[%s201 + $0x598] sm:$0xff]
        %v452 = vld [vmem:[%s201 + $0x5a0] sm:$0xff]
        %v453 = vld [vmem:[%s201 + $0x5a8] sm:$0xff]
        %v454 = vld [vmem:[%s201 + $0x5b0] sm:$0xff]
        %v455 = vld [vmem:[%s201 + $0x5b8] sm:$0xff]
        %v456 = vld [vmem:[%s201 + $0x5c0] sm:$0xff]
        %v457 = vld [vmem:[%s201 + $0x5c8] sm:$0xff]
        %v458 = vld [vmem:[%s201 + $0x5d0] sm:$0xff]
        %v459 = vld [vmem:[%s201 + $0x5d8] sm:$0xff]
        %v460 = vld [vmem:[%s201 + $0x5e0] sm:$0xff]
        %v461 = vld [vmem:[%s201 + $0x5e8] sm:$0xff]
        %v462 = vld [vmem:[%s201 + $0x5f0] sm:$0xff]
        %v463 = vld [vmem:[%s201 + $0x5f8] sm:$0xff]
        %v464 = vld [vmem:[%s201 + $0x600] sm:$0xff]
        %v465 = vld [vmem:[%s201 + $0x608] sm:$0xff]
        %v466 = vld [vmem:[%s201 + $0x610] sm:$0xff]
        %v467 = vld [vmem:[%s201 + $0x618] sm:$0xff]
        %v468 = vld [vmem:[%s201 + $0x620] sm:$0xff]
        %v469 = vld [vmem:[%s201 + $0x628] sm:$0xff]
        %v470 = vld [vmem:[%s201 + $0x630] sm:$0xff]
        %v471 = vld [vmem:[%s201 + $0x638] sm:$0xff]
        %v472 = vld [vmem:[%s201 + $0x640] sm:$0xff]
        %v473 = vld [vmem:[%s201 + $0x648] sm:$0xff]
        %v474 = vld [vmem:[%s201 + $0x650] sm:$0xff]
        %v475 = vld [vmem:[%s201 + $0x658] sm:$0xff]
        %v476 = vld [vmem:[%s201 + $0x660] sm:$0xff]
        %v477 = vld [vmem:[%s201 + $0x668] sm:$0xff]
        %v478 = vld [vmem:[%s201 + $0x670] sm:$0xff]
        %v479 = vld [vmem:[%s201 + $0x678] sm:$0xff]
        %v480 = vld [vmem:[%s201 + $0x680] sm:$0xff]
        %v481 = vld [vmem:[%s201 + $0x688] sm:$0xff]
        %v482 = vld [vmem:[%s201 + $0x690] sm:$0xff]
        %v483 = vld [vmem:[%s201 + $0x698] sm:$0xff]
        %v484 = vld [vmem:[%s201 + $0x6a0] sm:$0xff]
        %v485 = vld [vmem:[%s201 + $0x6a8] sm:$0xff]
        %v486 = vld [vmem:[%s201 + $0x6b0] sm:$0xff]
        %v487 = vld [vmem:[%s201 + $0x6b8] sm:$0xff]
        %v488 = vld [vmem:[%s201 + $0x6c0] sm:$0xff]
        %v489 = vld [vmem:[%s201 + $0x6c8] sm:$0xff]
        %v490 = vld [vmem:[%s201 + $0x6d0] sm:$0xff]
        %v491 = vld [vmem:[%s201 + $0x6d8] sm:$0xff]
        %v492 = vld [vmem:[%s201 + $0x6e0] sm:$0xff]
        %v493 = vld [vmem:[%s201 + $0x6e8] sm:$0xff]
        %v494 = vld [vmem:[%s201 + $0x6f0] sm:$0xff]
        %v495 = vld [vmem:[%s201 + $0x6f8] sm:$0xff]
        %v496 = vld [vmem:[%s201 + $0x700] sm:$0xff]
        %v497 = vld [vmem:[%s201 + $0x708] sm:$0xff]
        %v498 = vld [vmem:[%s201 + $0x710] sm:$0xff]
        %v499 = vld [vmem:[%s201 + $0x718] sm:$0xff]
        %v500 = vld [vmem:[%s201 + $0x720] sm:$0xff]
        %v501 = vld [vmem:[%s201 + $0x728] sm:$0xff]
        %v502 = vld [vmem:[%s201 + $0x730] sm:$0xff]
        %v503 = vld [vmem:[%s201 + $0x738] sm:$0xff]
        %v504 = vld [vmem:[%s201 + $0x740] sm:$0xff]
        %v505 = vld [vmem:[%s201 + $0x748] sm:$0xff]
        %v506 = vld [vmem:[%s201 + $0x750] sm:$0xff]
        %v507 = vld [vmem:[%s201 + $0x758] sm:$0xff]
        %v508 = vld [vmem:[%s201 + $0x760] sm:$0xff]
        %v509 = vld [vmem:[%s201 + $0x768] sm:$0xff]
        %v510 = vld [vmem:[%s201 + $0x770] sm:$0xff]
        %v511 = vld [vmem:[%s201 + $0x778] sm:$0xff]
        %v512 = vld [vmem:[%s201 + $0x780] sm:$0xff]
        %v513 = vld [vmem:[%s201 + $0x788] sm:$0xff]
        %v514 = vld [vmem:[%s201 + $0x790] sm:$0xff]
        %v515 = vld [vmem:[%s201 + $0x798] sm:$0xff]
        %v516 = vld [vmem:[%s201 + $0x7a0] sm:$0xff]
        %v517 = vld [vmem:[%s201 + $0x7a8] sm:$0xff]
        %v518 = vld [vmem:[%s201 + $0x7b0] sm:$0xff]
        %v519 = vld [vmem:[%s201 + $0x7b8] sm:$0xff]
        %v520 = vld [vmem:[%s201 + $0x7c0] sm:$0xff]
        %v521 = vld [vmem:[%s201 + $0x7c8] sm:$0xff]
        %v522 = vld [vmem:[%s201 + $0x7d0] sm:$0xff]
        %v523 = vld [vmem:[%s201 + $0x7d8] sm:$0xff]
        %v524 = vld [vmem:[%s201 + $0x7e0] sm:$0xff]
        %v525 = vld [vmem:[%s201 + $0x7e8] sm:$0xff]
        %v526 = vld [vmem:[%s201 + $0x7f0] sm:$0xff]
        %v527 = vld [vmem:[%s201 + $0x7f8] sm:$0xff]
        %v528 = vld [vmem:[%s201 + $0x800] sm:$0xff]
        %v529 = vld [vmem:[%s201 + $0x808] sm:$0xff]
        %v530 = vld [vmem:[%s201 + $0x810] sm:$0xff]
        %v531 = vld [vmem:[%s201 + $0x818] sm:$0xff]
        %v532 = vld [vmem:[%s201 + $0x820] sm:$0xff]
        %v533 = vld [vmem:[%s201 + $0x828] sm:$0xff]
        %v534 = vld [vmem:[%s201 + $0x830] sm:$0xff]
        %v535 = vld [vmem:[%s201 + $0x838] sm:$0xff]
        %v536 = vld [vmem:[%s201 + $0x840] sm:$0xff]
        %v537 = vld [vmem:[%s201 + $0x848] sm:$0xff]
        %v538 = vld [vmem:[%s201 + $0x850] sm:$0xff]
        %v539 = vld [vmem:[%s201 + $0x858] sm:$0xff]
        %v540 = vld [vmem:[%s201 + $0x860] sm:$0xff]
        %v541 = vld [vmem:[%s201 + $0x868] sm:$0xff]
        %v542 = vld [vmem:[%s201 + $0x870] sm:$0xff]
        %v543 = vld [vmem:[%s201 + $0x878] sm:$0xff]
        %v544 = vld [vmem:[%s201 + $0x880] sm:$0xff]
        %v545 = vld [vmem:[%s201 + $0x888] sm:$0xff]
        %v546 = vld [vmem:[%s201 + $0x890] sm:$0xff]
        %v547 = vld [vmem:[%s201 + $0x898] sm:$0xff]
        %v548 = vld [vmem:[%s201 + $0x8a0] sm:$0xff]
        %v549 = vld [vmem:[%s201 + $0x8a8] sm:$0xff]
        %v550 = vld [vmem:[%s201 + $0x8b0] sm:$0xff]
        %v551 = vld [vmem:[%s201 + $0x8b8] sm:$0xff]
        %v552 = vld [vmem:[%s201 + $0x8c0] sm:$0xff]
        %v553 = vld [vmem:[%s201 + $0x8c8] sm:$0xff]
        %v554 = vld [vmem:[%s201 + $0x8d0] sm:$0xff]
        %v555 = vld [vmem:[%s201 + $0x8d8] sm:$0xff]
        %v556 = vld [vmem:[%s201 + $0x8e0] sm:$0xff]
        %v557 = vld [vmem:[%s201 + $0x8e8] sm:$0xff]
        %v558 = vld [vmem:[%s201 + $0x8f0] sm:$0xff]
        %v559 = vld [vmem:[%s201 + $0x8f8] sm:$0xff]
        %v560 = vld [vmem:[%s201 + $0x900] sm:$0xff]
        %v561 = vld [vmem:[%s201 + $0x908] sm:$0xff]
        %v562 = vld [vmem:[%s201 + $0x910] sm:$0xff]
        %v563 = vld [vmem:[%s201 + $0x918] sm:$0xff]
        %v564 = vld [vmem:[%s201 + $0x920] sm:$0xff]
        %v565 = vld [vmem:[%s201 + $0x928] sm:$0xff]
        %v566 = vld [vmem:[%s201 + $0x930] sm:$0xff]
        %v567 = vld [vmem:[%s201 + $0x938] sm:$0xff]
        %v568 = vld [vmem:[%s201 + $0x940] sm:$0xff]
        %v569 = vld [vmem:[%s201 + $0x948] sm:$0xff]
        %v570 = vld [vmem:[%s201 + $0x950] sm:$0xff]
        %v571 = vld [vmem:[%s201 + $0x958] sm:$0xff]
        %v572 = vld [vmem:[%s201 + $0x960] sm:$0xff]
        %v573 = vld [vmem:[%s201 + $0x968] sm:$0xff]
        %v574 = vld [vmem:[%s201 + $0x970] sm:$0xff]
        %v575 = vld [vmem:[%s201 + $0x978] sm:$0xff]
        %v576 = vld [vmem:[%s201 + $0x980] sm:$0xff]
        %v577 = vld [vmem:[%s201 + $0x988] sm:$0xff]
        %v578 = vld [vmem:[%s201 + $0x990] sm:$0xff]
        %v579 = vld [vmem:[%s201 + $0x998] sm:$0xff]
        %v580 = vld [vmem:[%s201 + $0x9a0] sm:$0xff]
        %v581 = vld [vmem:[%s201 + $0x9a8] sm:$0xff]
        %v582 = vld [vmem:[%s201 + $0x9b0] sm:$0xff]
        %v583 = vld [vmem:[%s201 + $0x9b8] sm:$0xff]
        %v584 = vld [vmem:[%s201 + $0x9c0] sm:$0xff]
        %v585 = vld [vmem:[%s201 + $0x9c8] sm:$0xff]
        %v586 = vld [vmem:[%s201 + $0x9d0] sm:$0xff]
        %v587 = vld [vmem:[%s201 + $0x9d8] sm:$0xff]
        %v588 = vld [vmem:[%s201 + $0x9e0] sm:$0xff]
        %v589 = vld [vmem:[%s201 + $0x9e8] sm:$0xff]
        %v590 = vld [vmem:[%s201 + $0x9f0] sm:$0xff]
        %v591 = vld [vmem:[%s201 + $0x9f8] sm:$0xff]
        %v592 = vld [vmem:[%s201 + $0xa00] sm:$0xff]
        %v593 = vld [vmem:[%s201 + $0xa08] sm:$0xff]
        %v594 = vld [vmem:[%s201 + $0xa10] sm:$0xff]
        %v595 = vld [vmem:[%s201 + $0xa18] sm:$0xff]
        %v596 = vld [vmem:[%s201 + $0xa20] sm:$0xff]
        %v597 = vld [vmem:[%s201 + $0xa28] sm:$0xff]
        %v598 = vld [vmem:[%s201 + $0xa30] sm:$0xff]
        %v599 = vld [vmem:[%s201 + $0xa38] sm:$0xff]
        %v600 = vld [vmem:[%s201 + $0xa40] sm:$0xff]
        %v601 = vld [vmem:[%s201 + $0xa48] sm:$0xff]
        %v602 = vld [vmem:[%s201 + $0xa50] sm:$0xff]
        %v603 = vld [vmem:[%s201 + $0xa58] sm:$0xff]
        %v604 = vld [vmem:[%s201 + $0xa60] sm:$0xff]
        %v605 = vld [vmem:[%s201 + $0xa68] sm:$0xff]
        %v606 = vld [vmem:[%s201 + $0xa70] sm:$0xff]
        %v607 = vld [vmem:[%s201 + $0xa78] sm:$0xff]
        %v608 = vld [vmem:[%s201 + $0xa80] sm:$0xff]
        %v609 = vld [vmem:[%s201 + $0xa88] sm:$0xff]
        %v610 = vld [vmem:[%s201 + $0xa90] sm:$0xff]
        %v611 = vld [vmem:[%s201 + $0xa98] sm:$0xff]
        %v612 = vld [vmem:[%s201 + $0xaa0] sm:$0xff]
        %v613 = vld [vmem:[%s201 + $0xaa8] sm:$0xff]
        %v614 = vld [vmem:[%s201 + $0xab0] sm:$0xff]
        %v615 = vld [vmem:[%s201 + $0xab8] sm:$0xff]
        %v616 = vld [vmem:[%s201 + $0xac0] sm:$0xff]
        %v617 = vld [vmem:[%s201 + $0xac8] sm:$0xff]
        %v618 = vld [vmem:[%s201 + $0xad0] sm:$0xff]
        %v619 = vld [vmem:[%s201 + $0xad8] sm:$0xff]
        %v620 = vld [vmem:[%s201 + $0xae0] sm:$0xff]
        %v621 = vld [vmem:[%s201 + $0xae8] sm:$0xff]
        %v622 = vld [vmem:[%s201 + $0xaf0] sm:$0xff]
        %v623 = vld [vmem:[%s201 + $0xaf8] sm:$0xff]
        %v624 = vld [vmem:[%s201 + $0xb00] sm:$0xff]
        %v625 = vld [vmem:[%s201 + $0xb08] sm:$0xff]
        %v626 = vld [vmem:[%s201 + $0xb10] sm:$0xff]
        %v627 = vld [vmem:[%s201 + $0xb18] sm:$0xff]
        %v628 = vld [vmem:[%s201 + $0xb20] sm:$0xff]
        %v629 = vld [vmem:[%s201 + $0xb28] sm:$0xff]
        %v630 = vld [vmem:[%s201 + $0xb30] sm:$0xff]
        %v631 = vld [vmem:[%s201 + $0xb38] sm:$0xff]
        %v632 = vld [vmem:[%s201 + $0xb40] sm:$0xff]
        %v633 = vld [vmem:[%s201 + $0xb48] sm:$0xff]
        %v634 = vld [vmem:[%s201 + $0xb50] sm:$0xff]
        %v635 = vld [vmem:[%s201 + $0xb58] sm:$0xff]
        %v636 = vld [vmem:[%s201 + $0xb60] sm:$0xff]
        %v637 = vld [vmem:[%s201 + $0xb68] sm:$0xff]
        %v638 = vld [vmem:[%s201 + $0xb70] sm:$0xff]
        %v639 = vld [vmem:[%s201 + $0xb78] sm:$0xff]
        %v640 = vld [vmem:[%s201 + $0xb80] sm:$0xff]
        %v641 = vld [vmem:[%s201 + $0xb88] sm:$0xff]
        %v642 = vld [vmem:[%s201 + $0xb90] sm:$0xff]
        %v643 = vld [vmem:[%s201 + $0xb98] sm:$0xff]
        %v644 = vld [vmem:[%s201 + $0xba0] sm:$0xff]
        %v645 = vld [vmem:[%s201 + $0xba8] sm:$0xff]
        %v646 = vld [vmem:[%s201 + $0xbb0] sm:$0xff]
        %v647 = vld [vmem:[%s201 + $0xbb8] sm:$0xff]
        %v648 = vld [vmem:[%s201 + $0xbc0] sm:$0xff]
        %v649 = vld [vmem:[%s201 + $0xbc8] sm:$0xff]
        %v650 = vld [vmem:[%s201 + $0xbd0] sm:$0xff]
        %v651 = vld [vmem:[%s201 + $0xbd8] sm:$0xff]
        %v652 = vld [vmem:[%s201 + $0xbe0] sm:$0xff]
        %v653 = vld [vmem:[%s201 + $0xbe8] sm:$0xff]
        %v654 = vld [vmem:[%s201 + $0xbf0] sm:$0xff]
        %v655 = vld [vmem:[%s201 + $0xbf8] sm:$0xff]
        %v656 = vld [vmem:[%s201 + $0xc00] sm:$0xff]
        %v657 = vld [vmem:[%s201 + $0xc08] sm:$0xff]
        %v658 = vld [vmem:[%s201 + $0xc10] sm:$0xff]
        %v659 = vld [vmem:[%s201 + $0xc18] sm:$0xff]
        %v660 = vld [vmem:[%s201 + $0xc20] sm:$0xff]
        %v661 = vld [vmem:[%s201 + $0xc28] sm:$0xff]
        %v662 = vld [vmem:[%s201 + $0xc30] sm:$0xff]
        %v663 = vld [vmem:[%s201 + $0xc38] sm:$0xff]
        %v664 = vld [vmem:[%s201 + $0xc40] sm:$0xff]
        %v665 = vld [vmem:[%s201 + $0xc48] sm:$0xff]
        %v666 = vld [vmem:[%s201 + $0xc50] sm:$0xff]
        %v667 = vld [vmem:[%s201 + $0xc58] sm:$0xff]
        %v668 = vld [vmem:[%s201 + $0xc60] sm:$0xff]
        %v669 = vld [vmem:[%s201 + $0xc68] sm:$0xff]
        %v670 = vld [vmem:[%s201 + $0xc70] sm:$0xff]
        %v671 = vld [vmem:[%s201 + $0xc78] sm:$0xff]
        %v672 = vld [vmem:[%s201 + $0xc80] sm:$0xff]
        %v673 = vld [vmem:[%s201 + $0xc88] sm:$0xff]
        %v674 = vld [vmem:[%s201 + $0xc90] sm:$0xff]
        %v675 = vld [vmem:[%s201 + $0xc98] sm:$0xff]
        %v676 = vld [vmem:[%s201 + $0xca0] sm:$0xff]
        %v677 = vld [vmem:[%s201 + $0xca8] sm:$0xff]
        %v678 = vld [vmem:[%s201 + $0xcb0] sm:$0xff]
        %v679 = vld [vmem:[%s201 + $0xcb8] sm:$0xff]
        %v680 = vld [vmem:[%s201 + $0xcc0] sm:$0xff]
        %v681 = vld [vmem:[%s201 + $0xcc8] sm:$0xff]
        %v682 = vld [vmem:[%s201 + $0xcd0] sm:$0xff]
        %v683 = vld [vmem:[%s201 + $0xcd8] sm:$0xff]
        %v684 = vld [vmem:[%s201 + $0xce0] sm:$0xff]
        %v685 = vld [vmem:[%s201 + $0xce8] sm:$0xff]
        %v686 = vld [vmem:[%s201 + $0xcf0] sm:$0xff]
        %v687 = vld [vmem:[%s201 + $0xcf8] sm:$0xff]
        %v688 = vld [vmem:[%s201 + $0xd00] sm:$0xff]
        %v689 = vld [vmem:[%s201 + $0xd08] sm:$0xff]
        %v690 = vld [vmem:[%s201 + $0xd10] sm:$0xff]
        %v691 = vld [vmem:[%s201 + $0xd18] sm:$0xff]
        %v692 = vld [vmem:[%s201 + $0xd20] sm:$0xff]
        %v693 = vld [vmem:[%s201 + $0xd28] sm:$0xff]
        %v694 = vld [vmem:[%s201 + $0xd30] sm:$0xff]
        %v695 = vld [vmem:[%s201 + $0xd38] sm:$0xff]
        %v696 = vld [vmem:[%s201 + $0xd40] sm:$0xff]
        %v697 = vld [vmem:[%s201 + $0xd48] sm:$0xff]
        %v698 = vld [vmem:[%s201 + $0xd50] sm:$0xff]
        %v699 = vld [vmem:[%s201 + $0xd58] sm:$0xff]
        %v700 = vld [vmem:[%s201 + $0xd60] sm:$0xff]
        %v701 = vld [vmem:[%s201 + $0xd68] sm:$0xff]
        %v702 = vld [vmem:[%s201 + $0xd70] sm:$0xff]
        %v703 = vld [vmem:[%s201 + $0xd78] sm:$0xff]
        %v704 = vld [vmem:[%s201 + $0xd80] sm:$0xff]
        %v705 = vld [vmem:[%s201 + $0xd88] sm:$0xff]
        %v706 = vld [vmem:[%s201 + $0xd90] sm:$0xff]
        %v707 = vld [vmem:[%s201 + $0xd98] sm:$0xff]
        %v708 = vld [vmem:[%s201 + $0xda0] sm:$0xff]
        %v709 = vld [vmem:[%s201 + $0xda8] sm:$0xff]
        %v710 = vld [vmem:[%s201 + $0xdb0] sm:$0xff]
        %v711 = vld [vmem:[%s201 + $0xdb8] sm:$0xff]
        %v712 = vld [vmem:[%s201 + $0xdc0] sm:$0xff]
        %v713 = vld [vmem:[%s201 + $0xdc8] sm:$0xff]
        %v714 = vld [vmem:[%s201 + $0xdd0] sm:$0xff]
        %v715 = vld [vmem:[%s201 + $0xdd8] sm:$0xff]
        %v716 = vld [vmem:[%s201 + $0xde0] sm:$0xff]
        %v717 = vld [vmem:[%s201 + $0xde8] sm:$0xff]
        %v718 = vld [vmem:[%s201 + $0xdf0] sm:$0xff]
        %v719 = vld [vmem:[%s201 + $0xdf8] sm:$0xff]
        %v720 = vld [vmem:[%s201 + $0xe00] sm:$0xff]
        %v721 = vld [vmem:[%s201 + $0xe08] sm:$0xff]
        %v722 = vld [vmem:[%s201 + $0xe10] sm:$0xff]
        %v723 = vld [vmem:[%s201 + $0xe18] sm:$0xff]
        %v724 = vld [vmem:[%s201 + $0xe20] sm:$0xff]
        %v725 = vld [vmem:[%s201 + $0xe28] sm:$0xff]
        %v726 = vld [vmem:[%s201 + $0xe30] sm:$0xff]
        %v727 = vld [vmem:[%s201 + $0xe38] sm:$0xff]
        %v728 = vld [vmem:[%s201 + $0xe40] sm:$0xff]
        %v729 = vld [vmem:[%s201 + $0xe48] sm:$0xff]
        %v730 = vld [vmem:[%s201 + $0xe50] sm:$0xff]
        %v731 = vld [vmem:[%s201 + $0xe58] sm:$0xff]
        %v732 = vld [vmem:[%s201 + $0xe60] sm:$0xff]
        %v733 = vld [vmem:[%s201 + $0xe68] sm:$0xff]
        %v734 = vld [vmem:[%s201 + $0xe70] sm:$0xff]
        %v735 = vld [vmem:[%s201 + $0xe78] sm:$0xff]
        %v736 = vld [vmem:[%s201 + $0xe80] sm:$0xff]
        %v737 = vld [vmem:[%s201 + $0xe88] sm:$0xff]
        %v738 = vld [vmem:[%s201 + $0xe90] sm:$0xff]
        %v739 = vld [vmem:[%s201 + $0xe98] sm:$0xff]
        %v740 = vld [vmem:[%s201 + $0xea0] sm:$0xff]
        %v741 = vld [vmem:[%s201 + $0xea8] sm:$0xff]
        %v742 = vld [vmem:[%s201 + $0xeb0] sm:$0xff]
        %v743 = vld [vmem:[%s201 + $0xeb8] sm:$0xff]
        %v744 = vld [vmem:[%s201 + $0xec0] sm:$0xff]
        %v745 = vld [vmem:[%s201 + $0xec8] sm:$0xff]
        %v746 = vld [vmem:[%s201 + $0xed0] sm:$0xff]
        %v747 = vld [vmem:[%s201 + $0xed8] sm:$0xff]
        %v748 = vld [vmem:[%s201 + $0xee0] sm:$0xff]
        %v749 = vld [vmem:[%s201 + $0xee8] sm:$0xff]
        %v750 = vld [vmem:[%s201 + $0xef0] sm:$0xff]
        %v751 = vld [vmem:[%s201 + $0xef8] sm:$0xff]
        %v752 = vld [vmem:[%s201 + $0xf00] sm:$0xff]
        %v753 = vld [vmem:[%s201 + $0xf08] sm:$0xff]
        %v754 = vld [vmem:[%s201 + $0xf10] sm:$0xff]
        %v755 = vld [vmem:[%s201 + $0xf18] sm:$0xff]
        %v756 = vld [vmem:[%s201 + $0xf20] sm:$0xff]
        %v757 = vld [vmem:[%s201 + $0xf28] sm:$0xff]
        %v758 = vld [vmem:[%s201 + $0xf30] sm:$0xff]
        %v759 = vld [vmem:[%s201 + $0xf38] sm:$0xff]
        %v760 = vld [vmem:[%s201 + $0xf40] sm:$0xff]
        %v761 = vld [vmem:[%s201 + $0xf48] sm:$0xff]
        %v762 = vld [vmem:[%s201 + $0xf50] sm:$0xff]
        %v763 = vld [vmem:[%s201 + $0xf58] sm:$0xff]
        %v764 = vld [vmem:[%s201 + $0xf60] sm:$0xff]
        %v765 = vld [vmem:[%s201 + $0xf68] sm:$0xff]
        %v766 = vld [vmem:[%s201 + $0xf70] sm:$0xff]
        %v767 = vld [vmem:[%s201 + $0xf78] sm:$0xff]
        %v768 = vld [vmem:[%s201 + $0xf80] sm:$0xff]
        %v769 = vld [vmem:[%s201 + $0xf88] sm:$0xff]
        %v770 = vld [vmem:[%s201 + $0xf90] sm:$0xff]
        %v771 = vld [vmem:[%s201 + $0xf98] sm:$0xff]
        %v772 = vld [vmem:[%s201 + $0xfa0] sm:$0xff]
        %v773 = vld [vmem:[%s201 + $0xfa8] sm:$0xff]
        %v774 = vld [vmem:[%s201 + $0xfb0] sm:$0xff]
        %v775 = vld [vmem:[%s201 + $0xfb8] sm:$0xff]
        %v776 = vld [vmem:[%s201 + $0xfc0] sm:$0xff]
        %v777 = vld [vmem:[%s201 + $0xfc8] sm:$0xff]
        %v778 = vld [vmem:[%s201 + $0xfd0] sm:$0xff]
        %v779 = vld [vmem:[%s201 + $0xfd8] sm:$0xff]
        %v780 = vld [vmem:[%s201 + $0xfe0] sm:$0xff]
        %v781 = vld [vmem:[%s201 + $0xfe8] sm:$0xff]
        %v782 = vld [vmem:[%s201 + $0xff0] sm:$0xff]
        %v783 = vld [vmem:[%s201 + $0xff8] sm:$0xff]
        %v784 = vld [vmem:[%s201 + $0x1000] sm:$0xff]
        %v785 = vld [vmem:[%s201 + $0x1008] sm:$0xff]
        %v786 = vld [vmem:[%s201 + $0x1010] sm:$0xff]
        %v787 = vld [vmem:[%s201 + $0x1018] sm:$0xff]
        %v788 = vld [vmem:[%s201 + $0x1020] sm:$0xff]
        %v789 = vld [vmem:[%s201 + $0x1028] sm:$0xff]
        %v790 = vld [vmem:[%s201 + $0x1030] sm:$0xff]
        %v791 = vld [vmem:[%s201 + $0x1038] sm:$0xff]
        %v792 = vld [vmem:[%s201 + $0x1040] sm:$0xff]
        %v793 = vld [vmem:[%s201 + $0x1048] sm:$0xff]
        %v794 = vld [vmem:[%s201 + $0x1050] sm:$0xff]
        %v795 = vld [vmem:[%s201 + $0x1058] sm:$0xff]
        %v796 = vld [vmem:[%s201 + $0x1060] sm:$0xff]
        %v797 = vld [vmem:[%s201 + $0x1068] sm:$0xff]
        %v798 = vld [vmem:[%s201 + $0x1070] sm:$0xff]
        %v799 = vld [vmem:[%s201 + $0x1078] sm:$0xff]
        %v800 = vld [vmem:[%s201 + $0x1080] sm:$0xff]
        %v801 = vld [vmem:[%s201 + $0x1088] sm:$0xff]
        %v802 = vld [vmem:[%s201 + $0x1090] sm:$0xff]
        %v803 = vld [vmem:[%s201 + $0x1098] sm:$0xff]
        %v804 = vld [vmem:[%s201 + $0x10a0] sm:$0xff]
        %v805 = vld [vmem:[%s201 + $0x10a8] sm:$0xff]
        %v806 = vld [vmem:[%s201 + $0x10b0] sm:$0xff]
        %v807 = vld [vmem:[%s201 + $0x10b8] sm:$0xff]
        %v808 = vld [vmem:[%s201 + $0x10c0] sm:$0xff]
        %v809 = vld [vmem:[%s201 + $0x10c8] sm:$0xff]
        %v810 = vld [vmem:[%s201 + $0x10d0] sm:$0xff]
        %v811 = vld [vmem:[%s201 + $0x10d8] sm:$0xff]
        %v812 = vld [vmem:[%s201 + $0x10e0] sm:$0xff]
        %v813 = vld [vmem:[%s201 + $0x10e8] sm:$0xff]
        %v814 = vld [vmem:[%s201 + $0x10f0] sm:$0xff]
        %v815 = vld [vmem:[%s201 + $0x10f8] sm:$0xff]
        %v816 = vld [vmem:[%s201 + $0x1100] sm:$0xff]
        %v817 = vld [vmem:[%s201 + $0x1108] sm:$0xff]
        %v818 = vld [vmem:[%s201 + $0x1110] sm:$0xff]
        %v819 = vld [vmem:[%s201 + $0x1118] sm:$0xff]
        %v820 = vld [vmem:[%s201 + $0x1120] sm:$0xff]
        %v821 = vld [vmem:[%s201 + $0x1128] sm:$0xff]
        %v822 = vld [vmem:[%s201 + $0x1130] sm:$0xff]
        %v823 = vld [vmem:[%s201 + $0x1138] sm:$0xff]
        %v824 = vld [vmem:[%s201 + $0x1140] sm:$0xff]
        %v825 = vld [vmem:[%s201 + $0x1148] sm:$0xff]
        %v826 = vld [vmem:[%s201 + $0x1150] sm:$0xff]
        %v827 = vld [vmem:[%s201 + $0x1158] sm:$0xff]
        %v828 = vld [vmem:[%s201 + $0x1160] sm:$0xff]
        %v829 = vld [vmem:[%s201 + $0x1168] sm:$0xff]
        %v830 = vld [vmem:[%s201 + $0x1170] sm:$0xff]
        %v831 = vld [vmem:[%s201 + $0x1178] sm:$0xff]
        %v832 = vld [vmem:[%s201 + $0x1180] sm:$0xff]
        %v833 = vld [vmem:[%s201 + $0x1188] sm:$0xff]
        %v834 = vld [vmem:[%s201 + $0x1190] sm:$0xff]
        %v835 = vld [vmem:[%s201 + $0x1198] sm:$0xff]
        %v836 = vld [vmem:[%s201 + $0x11a0] sm:$0xff]
        %v837 = vld [vmem:[%s201 + $0x11a8] sm:$0xff]
        %v838 = vld [vmem:[%s201 + $0x11b0] sm:$0xff]
        %v839 = vld [vmem:[%s201 + $0x11b8] sm:$0xff]
        %v840 = vld [vmem:[%s201 + $0x11c0] sm:$0xff]
        %v841 = vld [vmem:[%s201 + $0x11c8] sm:$0xff]
        %v842 = vld [vmem:[%s201 + $0x11d0] sm:$0xff]
        %v843 = vld [vmem:[%s201 + $0x11d8] sm:$0xff]
        %v844 = vld [vmem:[%s201 + $0x11e0] sm:$0xff]
        %v845 = vld [vmem:[%s201 + $0x11e8] sm:$0xff]
        %v846 = vld [vmem:[%s201 + $0x11f0] sm:$0xff]
        %v847 = vld [vmem:[%s201 + $0x11f8] sm:$0xff]
        %v848 = vld [vmem:[%s201 + $0x1200] sm:$0xff]
        %v849 = vld [vmem:[%s201 + $0x1208] sm:$0xff]
        %v850 = vld [vmem:[%s201 + $0x1210] sm:$0xff]
        %v851 = vld [vmem:[%s201 + $0x1218] sm:$0xff]
        %v852 = vld [vmem:[%s201 + $0x1220] sm:$0xff]
        %v853 = vld [vmem:[%s201 + $0x1228] sm:$0xff]
        %v854 = vld [vmem:[%s201 + $0x1230] sm:$0xff]
        %v855 = vld [vmem:[%s201 + $0x1238] sm:$0xff]
        %v856 = vld [vmem:[%s201 + $0x1240] sm:$0xff]
        %v857 = vld [vmem:[%s201 + $0x1248] sm:$0xff]
        %v858 = vld [vmem:[%s201 + $0x1250] sm:$0xff]
        %v859 = vld [vmem:[%s201 + $0x1258] sm:$0xff]
        %v860 = vld [vmem:[%s201 + $0x1260] sm:$0xff]
        %v861 = vld [vmem:[%s201 + $0x1268] sm:$0xff]
        %v862 = vld [vmem:[%s201 + $0x1270] sm:$0xff]
        %v863 = vld [vmem:[%s201 + $0x1278] sm:$0xff]
        %v864 = vld [vmem:[%s201 + $0x1280] sm:$0xff]
        %v865 = vld [vmem:[%s201 + $0x1288] sm:$0xff]
        %v866 = vld [vmem:[%s201 + $0x1290] sm:$0xff]
        %v867 = vld [vmem:[%s201 + $0x1298] sm:$0xff]
        %v868 = vld [vmem:[%s201 + $0x12a0] sm:$0xff]
        %v869 = vld [vmem:[%s201 + $0x12a8] sm:$0xff]
        %v870 = vld [vmem:[%s201 + $0x12b0] sm:$0xff]
        %v871 = vld [vmem:[%s201 + $0x12b8] sm:$0xff]
        %v872 = vld [vmem:[%s201 + $0x12c0] sm:$0xff]
        %v873 = vld [vmem:[%s201 + $0x12c8] sm:$0xff]
        %v874 = vld [vmem:[%s201 + $0x12d0] sm:$0xff]
        %v875 = vld [vmem:[%s201 + $0x12d8] sm:$0xff]
        %v876 = vld [vmem:[%s201 + $0x12e0] sm:$0xff]
        %v877 = vld [vmem:[%s201 + $0x12e8] sm:$0xff]
        %v878 = vld [vmem:[%s201 + $0x12f0] sm:$0xff]
        %v879 = vld [vmem:[%s201 + $0x12f8] sm:$0xff]
        %v880 = vld [vmem:[%s201 + $0x1300] sm:$0xff]
        %v881 = vld [vmem:[%s201 + $0x1308] sm:$0xff]
        %v882 = vld [vmem:[%s201 + $0x1310] sm:$0xff]
        %v883 = vld [vmem:[%s201 + $0x1318] sm:$0xff]
        %v884 = vld [vmem:[%s201 + $0x1320] sm:$0xff]
        %v885 = vld [vmem:[%s201 + $0x1328] sm:$0xff]
        %v886 = vld [vmem:[%s201 + $0x1330] sm:$0xff]
        %v887 = vld [vmem:[%s201 + $0x1338] sm:$0xff]
        %v888 = vld [vmem:[%s201 + $0x1340] sm:$0xff]
        %v889 = vld [vmem:[%s201 + $0x1348] sm:$0xff]
        %v890 = vld [vmem:[%s201 + $0x1350] sm:$0xff]
        %v891 = vld [vmem:[%s201 + $0x1358] sm:$0xff]
        %v892 = vld [vmem:[%s201 + $0x1360] sm:$0xff]
        %v893 = vld [vmem:[%s201 + $0x1368] sm:$0xff]
        %v894 = vld [vmem:[%s201 + $0x1370] sm:$0xff]
        %v895 = vld [vmem:[%s201 + $0x1378] sm:$0xff]
        %v896 = vld [vmem:[%s201 + $0x1380] sm:$0xff]
        %v897 = vld [vmem:[%s201 + $0x1388] sm:$0xff]
        %v898 = vld [vmem:[%s201 + $0x1390] sm:$0xff]
        %v899 = vld [vmem:[%s201 + $0x1398] sm:$0xff]
        %v900 = vld [vmem:[%s201 + $0x13a0] sm:$0xff]
        %v901 = vld [vmem:[%s201 + $0x13a8] sm:$0xff]
        %v902 = vld [vmem:[%s201 + $0x13b0] sm:$0xff]
        %v903 = vld [vmem:[%s201 + $0x13b8] sm:$0xff]
        %v904 = vld [vmem:[%s201 + $0x13c0] sm:$0xff]
        %v905 = vld [vmem:[%s201 + $0x13c8] sm:$0xff]
        %v906 = vld [vmem:[%s201 + $0x13d0] sm:$0xff]
        %v907 = vld [vmem:[%s201 + $0x13d8] sm:$0xff]
        %v908 = vld [vmem:[%s201 + $0x13e0] sm:$0xff]
        %v909 = vld [vmem:[%s201 + $0x13e8] sm:$0xff]
        %v910 = vld [vmem:[%s201 + $0x13f0] sm:$0xff]
        %v911 = vld [vmem:[%s201 + $0x13f8] sm:$0xff]
        %v912 = vld [vmem:[%s201 + $0x1400] sm:$0xff]
        %v913 = vld [vmem:[%s201 + $0x1408] sm:$0xff]
        %v914 = vld [vmem:[%s201 + $0x1410] sm:$0xff]
        %v915 = vld [vmem:[%s201 + $0x1418] sm:$0xff]
        %v916 = vld [vmem:[%s201 + $0x1420] sm:$0xff]
        %v917 = vld [vmem:[%s201 + $0x1428] sm:$0xff]
        %v918 = vld [vmem:[%s201 + $0x1430] sm:$0xff]
        %v919 = vld [vmem:[%s201 + $0x1438] sm:$0xff]
        %v920 = vld [vmem:[%s201 + $0x1440] sm:$0xff]
        %v921 = vld [vmem:[%s201 + $0x1448] sm:$0xff]
        %v922 = vld [vmem:[%s201 + $0x1450] sm:$0xff]
        %v923 = vld [vmem:[%s201 + $0x1458] sm:$0xff]
        %v924 = vld [vmem:[%s201 + $0x1460] sm:$0xff]
        %v925 = vld [vmem:[%s201 + $0x1468] sm:$0xff]
        %v926 = vld [vmem:[%s201 + $0x1470] sm:$0xff]
        %v927 = vld [vmem:[%s201 + $0x1478] sm:$0xff]
        %v928 = vld [vmem:[%s201 + $0x1480] sm:$0xff]
        %v929 = vld [vmem:[%s201 + $0x1488] sm:$0xff]
        %v930 = vld [vmem:[%s201 + $0x1490] sm:$0xff]
        %v931 = vld [vmem:[%s201 + $0x1498] sm:$0xff]
        %v932 = vld [vmem:[%s201 + $0x14a0] sm:$0xff]
        %v933 = vld [vmem:[%s201 + $0x14a8] sm:$0xff]
        %v934 = vld [vmem:[%s201 + $0x14b0] sm:$0xff]
        %v935 = vld [vmem:[%s201 + $0x14b8] sm:$0xff]
        %v936 = vld [vmem:[%s201 + $0x14c0] sm:$0xff]
        %v937 = vld [vmem:[%s201 + $0x14c8] sm:$0xff]
        %v938 = vld [vmem:[%s201 + $0x14d0] sm:$0xff]
        %v939 = vld [vmem:[%s201 + $0x14d8] sm:$0xff]
        %v940 = vld [vmem:[%s201 + $0x14e0] sm:$0xff]
        %v941 = vld [vmem:[%s201 + $0x14e8] sm:$0xff]
        %v942 = vld [vmem:[%s201 + $0x14f0] sm:$0xff]
        %v943 = vld [vmem:[%s201 + $0x14f8] sm:$0xff]
        %v944 = vld [vmem:[%s201 + $0x1500] sm:$0xff]
        %v945 = vld [vmem:[%s201 + $0x1508] sm:$0xff]
        %v946 = vld [vmem:[%s201 + $0x1510] sm:$0xff]
        %v947 = vld [vmem:[%s201 + $0x1518] sm:$0xff]
        %v948 = vld [vmem:[%s201 + $0x1520] sm:$0xff]
        %v949 = vld [vmem:[%s201 + $0x1528] sm:$0xff]
        %v950 = vld [vmem:[%s201 + $0x1530] sm:$0xff]
        %v951 = vld [vmem:[%s201 + $0x1538] sm:$0xff]
        %v952 = vld [vmem:[%s201 + $0x1540] sm:$0xff]
        %v953 = vld [vmem:[%s201 + $0x1548] sm:$0xff]
        %v954 = vld [vmem:[%s201 + $0x1550] sm:$0xff]
        %v955 = vld [vmem:[%s201 + $0x1558] sm:$0xff]
        %v956 = vld [vmem:[%s201 + $0x1560] sm:$0xff]
        %v957 = vld [vmem:[%s201 + $0x1568] sm:$0xff]
        %v958 = vld [vmem:[%s201 + $0x1570] sm:$0xff]
        %v959 = vld [vmem:[%s201 + $0x1578] sm:$0xff]
        %v960 = vld [vmem:[%s201 + $0x1580] sm:$0xff]
        %v961 = vld [vmem:[%s201 + $0x1588] sm:$0xff]
        %v962 = vld [vmem:[%s201 + $0x1590] sm:$0xff]
        %v963 = vld [vmem:[%s201 + $0x1598] sm:$0xff]
        %v964 = vld [vmem:[%s201 + $0x15a0] sm:$0xff]
        %v965 = vld [vmem:[%s201 + $0x15a8] sm:$0xff]
        %v966 = vld [vmem:[%s201 + $0x15b0] sm:$0xff]
        %v967 = vld [vmem:[%s201 + $0x15b8] sm:$0xff]
        %v968 = vld [vmem:[%s201 + $0x15c0] sm:$0xff]
        %v969 = vld [vmem:[%s201 + $0x15c8] sm:$0xff]
        %v970 = vld [vmem:[%s201 + $0x15d0] sm:$0xff]
        %v971 = vld [vmem:[%s201 + $0x15d8] sm:$0xff]
        %v972 = vld [vmem:[%s201 + $0x15e0] sm:$0xff]
        %v973 = vld [vmem:[%s201 + $0x15e8] sm:$0xff]
        %v974 = vld [vmem:[%s201 + $0x15f0] sm:$0xff]
        %v975 = vld [vmem:[%s201 + $0x15f8] sm:$0xff]
        %v976 = vld [vmem:[%s201 + $0x1600] sm:$0xff]
        %v977 = vld [vmem:[%s201 + $0x1608] sm:$0xff]
        %v978 = vld [vmem:[%s201 + $0x1610] sm:$0xff]
        %v979 = vld [vmem:[%s201 + $0x1618] sm:$0xff]
        %v980 = vld [vmem:[%s201 + $0x1620] sm:$0xff]
        %v981 = vld [vmem:[%s201 + $0x1628] sm:$0xff]
        %v982 = vld [vmem:[%s201 + $0x1630] sm:$0xff]
        %v983 = vld [vmem:[%s201 + $0x1638] sm:$0xff]
        %v984 = vld [vmem:[%s201 + $0x1640] sm:$0xff]
        %v985 = vld [vmem:[%s201 + $0x1648] sm:$0xff]
        %v986 = vld [vmem:[%s201 + $0x1650] sm:$0xff]
        %v987 = vld [vmem:[%s201 + $0x1658] sm:$0xff]
        %v988 = vld [vmem:[%s201 + $0x1660] sm:$0xff]
        %v989 = vld [vmem:[%s201 + $0x1668] sm:$0xff]
        %v990 = vld [vmem:[%s201 + $0x1670] sm:$0xff]
        %v991 = vld [vmem:[%s201 + $0x1678] sm:$0xff]
        %v992 = vld [vmem:[%s201 + $0x1680] sm:$0xff]
        %v993 = vld [vmem:[%s201 + $0x1688] sm:$0xff]
        %v994 = vld [vmem:[%s201 + $0x1690] sm:$0xff]
        %v995 = vld [vmem:[%s201 + $0x1698] sm:$0xff]
        %v996 = vld [vmem:[%s201 + $0x16a0] sm:$0xff]
        %v997 = vld [vmem:[%s201 + $0x16a8] sm:$0xff]
        %v998 = vld [vmem:[%s201 + $0x16b0] sm:$0xff]
        %v999 = vld [vmem:[%s201 + $0x16b8] sm:$0xff]
        %v1000 = vld [vmem:[%s201 + $0x16c0] sm:$0xff]
        %v1001 = vld [vmem:[%s201 + $0x16c8] sm:$0xff]
        %v1002 = vld [vmem:[%s201 + $0x16d0] sm:$0xff]
        %v1003 = vld [vmem:[%s201 + $0x16d8] sm:$0xff]
        %v1004 = vld [vmem:[%s201 + $0x16e0] sm:$0xff]
        %v1005 = vld [vmem:[%s201 + $0x16e8] sm:$0xff]
        %v1006 = vld [vmem:[%s201 + $0x16f0] sm:$0xff]
        %v1007 = vld [vmem:[%s201 + $0x16f8] sm:$0xff]
        %v1008 = vld [vmem:[%s201 + $0x1700] sm:$0xff]
        %v1009 = vld [vmem:[%s201 + $0x1708] sm:$0xff]
        %v1010 = vld [vmem:[%s201 + $0x1710] sm:$0xff]
        %v1011 = vld [vmem:[%s201 + $0x1718] sm:$0xff]
        %v1012 = vld [vmem:[%s201 + $0x1720] sm:$0xff]
        %v1013 = vld [vmem:[%s201 + $0x1728] sm:$0xff]
        %v1014 = vld [vmem:[%s201 + $0x1730] sm:$0xff]
        %v1015 = vld [vmem:[%s201 + $0x1738] sm:$0xff]
        %v1016 = vld [vmem:[%s201 + $0x1740] sm:$0xff]
        %v1017 = vld [vmem:[%s201 + $0x1748] sm:$0xff]
        %v1018 = vld [vmem:[%s201 + $0x1750] sm:$0xff]
        %v1019 = vld [vmem:[%s201 + $0x1758] sm:$0xff]
        %v1020 = vld [vmem:[%s201 + $0x1760] sm:$0xff]
        %v1021 = vld [vmem:[%s201 + $0x1768] sm:$0xff]
        %v1022 = vld [vmem:[%s201 + $0x1770] sm:$0xff]
        %v1023 = vld [vmem:[%s201 + $0x1778] sm:$0xff]
        %v1024 = vld [vmem:[%s201 + $0x1780] sm:$0xff]
        %v1025 = vld [vmem:[%s201 + $0x1788] sm:$0xff]
        %v1026 = vld [vmem:[%s201 + $0x1790] sm:$0xff]
        %v1027 = vld [vmem:[%s201 + $0x1798] sm:$0xff]
        %v1028 = vld [vmem:[%s201 + $0x17a0] sm:$0xff]
        %v1029 = vld [vmem:[%s201 + $0x17a8] sm:$0xff]
        %v1030 = vld [vmem:[%s201 + $0x17b0] sm:$0xff]
        %v1031 = vld [vmem:[%s201 + $0x17b8] sm:$0xff]
        %v1032 = vld [vmem:[%s201 + $0x17c0] sm:$0xff]
        %v1033 = vld [vmem:[%s201 + $0x17c8] sm:$0xff]
        %v1034 = vld [vmem:[%s201 + $0x17d0] sm:$0xff]
        %v1035 = vld [vmem:[%s201 + $0x17d8] sm:$0xff]
        %v1036 = vld [vmem:[%s201 + $0x17e0] sm:$0xff]
        %v1037 = vld [vmem:[%s201 + $0x17e8] sm:$0xff]
        %v1038 = vld [vmem:[%s201 + $0x17f0] sm:$0xff]
        %v1039 = vld [vmem:[%s201 + $0x17f8] sm:$0xff]
        %v1040 = vld [vmem:[%s201 + $0x1800] sm:$0xff]
        %v1041 = vld [vmem:[%s201 + $0x1808] sm:$0xff]
        %v1042 = vld [vmem:[%s201 + $0x1810] sm:$0xff]
        %v1043 = vld [vmem:[%s201 + $0x1818] sm:$0xff]
        %v1044 = vld [vmem:[%s201 + $0x1820] sm:$0xff]
        %v1045 = vld [vmem:[%s201 + $0x1828] sm:$0xff]
        %v1046 = vld [vmem:[%s201 + $0x1830] sm:$0xff]
        %v1047 = vld [vmem:[%s201 + $0x1838] sm:$0xff]
        %v1048 = vld [vmem:[%s201 + $0x1840] sm:$0xff]
        %v1049 = vld [vmem:[%s201 + $0x1848] sm:$0xff]
        %v1050 = vld [vmem:[%s201 + $0x1850] sm:$0xff]
        %v1051 = vld [vmem:[%s201 + $0x1858] sm:$0xff]
        %v1052 = vld [vmem:[%s201 + $0x1860] sm:$0xff]
        %v1053 = vld [vmem:[%s201 + $0x1868] sm:$0xff]
        %v1054 = vld [vmem:[%s201 + $0x1870] sm:$0xff]
        %v1055 = vld [vmem:[%s201 + $0x1878] sm:$0xff]
        %v1056 = vld [vmem:[%s201 + $0x1880] sm:$0xff]
        %v1057 = vld [vmem:[%s201 + $0x1888] sm:$0xff]
        %v1058 = vld [vmem:[%s201 + $0x1890] sm:$0xff]
        %v1059 = vld [vmem:[%s201 + $0x1898] sm:$0xff]
        %v1060 = vld [vmem:[%s201 + $0x18a0] sm:$0xff]
        %v1061 = vld [vmem:[%s201 + $0x18a8] sm:$0xff]
        %v1062 = vld [vmem:[%s201 + $0x18b0] sm:$0xff]
        %v1063 = vld [vmem:[%s201 + $0x18b8] sm:$0xff]
        %v1064 = vld [vmem:[%s201 + $0x18c0] sm:$0xff]
        %v1065 = vld [vmem:[%s201 + $0x18c8] sm:$0xff]
        %v1066 = vld [vmem:[%s201 + $0x18d0] sm:$0xff]
        %v1067 = vld [vmem:[%s201 + $0x18d8] sm:$0xff]
        %v1068 = vld [vmem:[%s201 + $0x18e0] sm:$0xff]
        %v1069 = vld [vmem:[%s201 + $0x18e8] sm:$0xff]
        %v1070 = vld [vmem:[%s201 + $0x18f0] sm:$0xff]
        %v1071 = vld [vmem:[%s201 + $0x18f8] sm:$0xff]
        %v1072 = vld [vmem:[%s201 + $0x1900] sm:$0xff]
        %v1073 = vld [vmem:[%s201 + $0x1908] sm:$0xff]
        %v1074 = vld [vmem:[%s201 + $0x1910] sm:$0xff]
        %v1075 = vld [vmem:[%s201 + $0x1918] sm:$0xff]
        %v1076 = vld [vmem:[%s201 + $0x1920] sm:$0xff]
        %v1077 = vld [vmem:[%s201 + $0x1928] sm:$0xff]
        %v1078 = vld [vmem:[%s201 + $0x1930] sm:$0xff]
        %v1079 = vld [vmem:[%s201 + $0x1938] sm:$0xff]
        %v1080 = vld [vmem:[%s201 + $0x1940] sm:$0xff]
        %v1081 = vld [vmem:[%s201 + $0x1948] sm:$0xff]
        %v1082 = vld [vmem:[%s201 + $0x1950] sm:$0xff]
        %v1083 = vld [vmem:[%s201 + $0x1958] sm:$0xff]
        %v1084 = vld [vmem:[%s201 + $0x1960] sm:$0xff]
        %v1085 = vld [vmem:[%s201 + $0x1968] sm:$0xff]
        %v1086 = vld [vmem:[%s201 + $0x1970] sm:$0xff]
        %v1087 = vld [vmem:[%s201 + $0x1978] sm:$0xff]
        %v1088 = vld [vmem:[%s201 + $0x1980] sm:$0xff]
        %v1089 = vld [vmem:[%s201 + $0x1988] sm:$0xff]
        %v1090 = vld [vmem:[%s201 + $0x1990] sm:$0xff]
        %v1091 = vld [vmem:[%s201 + $0x1998] sm:$0xff]
        %v1092 = vld [vmem:[%s201 + $0x19a0] sm:$0xff]
        %v1093 = vld [vmem:[%s201 + $0x19a8] sm:$0xff]
        %v1094 = vld [vmem:[%s201 + $0x19b0] sm:$0xff]
        %v1095 = vld [vmem:[%s201 + $0x19b8] sm:$0xff]
        %v1096 = vld [vmem:[%s201 + $0x19c0] sm:$0xff]
        %v1097 = vld [vmem:[%s201 + $0x19c8] sm:$0xff]
        %v1098 = vld [vmem:[%s201 + $0x19d0] sm:$0xff]
        %v1099 = vld [vmem:[%s201 + $0x19d8] sm:$0xff]
        %v1100 = vld [vmem:[%s201 + $0x19e0] sm:$0xff]
        %v1101 = vld [vmem:[%s201 + $0x19e8] sm:$0xff]
        %v1102 = vld [vmem:[%s201 + $0x19f0] sm:$0xff]
        %v1103 = vld [vmem:[%s201 + $0x19f8] sm:$0xff]
        %v1104 = vld [vmem:[%s201 + $0x1a00] sm:$0xff]
        %v1105 = vld [vmem:[%s201 + $0x1a08] sm:$0xff]
        %v1106 = vld [vmem:[%s201 + $0x1a10] sm:$0xff]
        %v1107 = vld [vmem:[%s201 + $0x1a18] sm:$0xff]
        %v1108 = vld [vmem:[%s201 + $0x1a20] sm:$0xff]
        %v1109 = vld [vmem:[%s201 + $0x1a28] sm:$0xff]
        %v1110 = vld [vmem:[%s201 + $0x1a30] sm:$0xff]
        %v1111 = vld [vmem:[%s201 + $0x1a38] sm:$0xff]
        %v1112 = vld [vmem:[%s201 + $0x1a40] sm:$0xff]
        %v1113 = vld [vmem:[%s201 + $0x1a48] sm:$0xff]
        %v1114 = vld [vmem:[%s201 + $0x1a50] sm:$0xff]
        %v1115 = vld [vmem:[%s201 + $0x1a58] sm:$0xff]
        %v1116 = vld [vmem:[%s201 + $0x1a60] sm:$0xff]
        %v1117 = vld [vmem:[%s201 + $0x1a68] sm:$0xff]
        %v1118 = vld [vmem:[%s201 + $0x1a70] sm:$0xff]
        %v1119 = vld [vmem:[%s201 + $0x1a78] sm:$0xff]
        %v1120 = vld [vmem:[%s201 + $0x1a80] sm:$0xff]
        %v1121 = vld [vmem:[%s201 + $0x1a88] sm:$0xff]
        %v1122 = vld [vmem:[%s201 + $0x1a90] sm:$0xff]
        %v1123 = vld [vmem:[%s201 + $0x1a98] sm:$0xff]
        %v1124 = vld [vmem:[%s201 + $0x1aa0] sm:$0xff]
        %v1125 = vld [vmem:[%s201 + $0x1aa8] sm:$0xff]
        %v1126 = vld [vmem:[%s201 + $0x1ab0] sm:$0xff]
        %v1127 = vld [vmem:[%s201 + $0x1ab8] sm:$0xff]
        %v1128 = vld [vmem:[%s201 + $0x1ac0] sm:$0xff]
        %v1129 = vld [vmem:[%s201 + $0x1ac8] sm:$0xff]
        %v1130 = vld [vmem:[%s201 + $0x1ad0] sm:$0xff]
        %v1131 = vld [vmem:[%s201 + $0x1ad8] sm:$0xff]
        %v1132 = vld [vmem:[%s201 + $0x1ae0] sm:$0xff]
        %v1133 = vld [vmem:[%s201 + $0x1ae8] sm:$0xff]
        %v1134 = vld [vmem:[%s201 + $0x1af0] sm:$0xff]
        %v1135 = vld [vmem:[%s201 + $0x1af8] sm:$0xff]
        %v1136 = vld [vmem:[%s201 + $0x1b00] sm:$0xff]
        %v1137 = vld [vmem:[%s201 + $0x1b08] sm:$0xff]
        %v1138 = vld [vmem:[%s201 + $0x1b10] sm:$0xff]
        %v1139 = vld [vmem:[%s201 + $0x1b18] sm:$0xff]
        %v1140 = vld [vmem:[%s201 + $0x1b20] sm:$0xff]
        %v1141 = vld [vmem:[%s201 + $0x1b28] sm:$0xff]
        %v1142 = vld [vmem:[%s201 + $0x1b30] sm:$0xff]
        %v1143 = vld [vmem:[%s201 + $0x1b38] sm:$0xff]
        %v1144 = vld [vmem:[%s201 + $0x1b40] sm:$0xff]
        %v1145 = vld [vmem:[%s201 + $0x1b48] sm:$0xff]
        %v1146 = vld [vmem:[%s201 + $0x1b50] sm:$0xff]
        %v1147 = vld [vmem:[%s201 + $0x1b58] sm:$0xff]
        %v1148 = vld [vmem:[%s201 + $0x1b60] sm:$0xff]
        %v1149 = vld [vmem:[%s201 + $0x1b68] sm:$0xff]
        %v1150 = vld [vmem:[%s201 + $0x1b70] sm:$0xff]
        %v1151 = vld [vmem:[%s201 + $0x1b78] sm:$0xff]
        %v1152 = vld [vmem:[%s201 + $0x1b80] sm:$0xff]
        %v1153 = vld [vmem:[%s201 + $0x1b88] sm:$0xff]
        %v1154 = vld [vmem:[%s201 + $0x1b90] sm:$0xff]
        %v1155 = vld [vmem:[%s201 + $0x1b98] sm:$0xff]
        %v1156 = vld [vmem:[%s201 + $0x1ba0] sm:$0xff]
        %v1157 = vld [vmem:[%s201 + $0x1ba8] sm:$0xff]
        %v1158 = vld [vmem:[%s201 + $0x1bb0] sm:$0xff]
        %v1159 = vld [vmem:[%s201 + $0x1bb8] sm:$0xff]
        %v1160 = vld [vmem:[%s201 + $0x1bc0] sm:$0xff]
        %v1161 = vld [vmem:[%s201 + $0x1bc8] sm:$0xff]
        %v1162 = vld [vmem:[%s201 + $0x1bd0] sm:$0xff]
        %v1163 = vld [vmem:[%s201 + $0x1bd8] sm:$0xff]
        %v1164 = vld [vmem:[%s201 + $0x1be0] sm:$0xff]
        %v1165 = vld [vmem:[%s201 + $0x1be8] sm:$0xff]
        %v1166 = vld [vmem:[%s201 + $0x1bf0] sm:$0xff]
        %v1167 = vld [vmem:[%s201 + $0x1bf8] sm:$0xff]
        %v1168 = vld [vmem:[%s201 + $0x1c00] sm:$0xff]
        %v1169 = vld [vmem:[%s201 + $0x1c08] sm:$0xff]
        %v1170 = vld [vmem:[%s201 + $0x1c10] sm:$0xff]
        %v1171 = vld [vmem:[%s201 + $0x1c18] sm:$0xff]
        %v1172 = vld [vmem:[%s201 + $0x1c20] sm:$0xff]
        %v1173 = vld [vmem:[%s201 + $0x1c28] sm:$0xff]
        %v1174 = vld [vmem:[%s201 + $0x1c30] sm:$0xff]
        %v1175 = vld [vmem:[%s201 + $0x1c38] sm:$0xff]
        %v1176 = vld [vmem:[%s201 + $0x1c40] sm:$0xff]
        %v1177 = vld [vmem:[%s201 + $0x1c48] sm:$0xff]
        %v1178 = vld [vmem:[%s201 + $0x1c50] sm:$0xff]
        %v1179 = vld [vmem:[%s201 + $0x1c58] sm:$0xff]
        %v1180 = vld [vmem:[%s201 + $0x1c60] sm:$0xff]
        %v1181 = vld [vmem:[%s201 + $0x1c68] sm:$0xff]
        %v1182 = vld [vmem:[%s201 + $0x1c70] sm:$0xff]
        %v1183 = vld [vmem:[%s201 + $0x1c78] sm:$0xff]
        %v1184 = vld [vmem:[%s201 + $0x1c80] sm:$0xff]
        %v1185 = vld [vmem:[%s201 + $0x1c88] sm:$0xff]
        %v1186 = vld [vmem:[%s201 + $0x1c90] sm:$0xff]
        %v1187 = vld [vmem:[%s201 + $0x1c98] sm:$0xff]
        %v1188 = vld [vmem:[%s201 + $0x1ca0] sm:$0xff]
        %v1189 = vld [vmem:[%s201 + $0x1ca8] sm:$0xff]
        %v1190 = vld [vmem:[%s201 + $0x1cb0] sm:$0xff]
        %v1191 = vld [vmem:[%s201 + $0x1cb8] sm:$0xff]
        %v1192 = vld [vmem:[%s201 + $0x1cc0] sm:$0xff]
        %v1193 = vld [vmem:[%s201 + $0x1cc8] sm:$0xff]
        %v1194 = vld [vmem:[%s201 + $0x1cd0] sm:$0xff]
        %v1195 = vld [vmem:[%s201 + $0x1cd8] sm:$0xff]
        %v1196 = vld [vmem:[%s201 + $0x1ce0] sm:$0xff]
        %v1197 = vld [vmem:[%s201 + $0x1ce8] sm:$0xff]
        %v1198 = vld [vmem:[%s201 + $0x1cf0] sm:$0xff]
        %v1199 = vld [vmem:[%s201 + $0x1cf8] sm:$0xff]
        %v1200 = vld [vmem:[%s201 + $0x1d00] sm:$0xff]
        %v1201 = vld [vmem:[%s201 + $0x1d08] sm:$0xff]
        %v1202 = vld [vmem:[%s201 + $0x1d10] sm:$0xff]
        %v1203 = vld [vmem:[%s201 + $0x1d18] sm:$0xff]
        %v1204 = vld [vmem:[%s201 + $0x1d20] sm:$0xff]
        %v1205 = vld [vmem:[%s201 + $0x1d28] sm:$0xff]
        %v1206 = vld [vmem:[%s201 + $0x1d30] sm:$0xff]
        %v1207 = vld [vmem:[%s201 + $0x1d38] sm:$0xff]
        %v1208 = vld [vmem:[%s201 + $0x1d40] sm:$0xff]
        %v1209 = vld [vmem:[%s201 + $0x1d48] sm:$0xff]
        %v1210 = vld [vmem:[%s201 + $0x1d50] sm:$0xff]
        %v1211 = vld [vmem:[%s201 + $0x1d58] sm:$0xff]
        %v1212 = vld [vmem:[%s201 + $0x1d60] sm:$0xff]
        %v1213 = vld [vmem:[%s201 + $0x1d68] sm:$0xff]
        %v1214 = vld [vmem:[%s201 + $0x1d70] sm:$0xff]
        %v1215 = vld [vmem:[%s201 + $0x1d78] sm:$0xff]
        %v1216 = vld [vmem:[%s201 + $0x1d80] sm:$0xff]
        %v1217 = vld [vmem:[%s201 + $0x1d88] sm:$0xff]
        %v1218 = vld [vmem:[%s201 + $0x1d90] sm:$0xff]
        %v1219 = vld [vmem:[%s201 + $0x1d98] sm:$0xff]
        %v1220 = vld [vmem:[%s201 + $0x1da0] sm:$0xff]
        %v1221 = vld [vmem:[%s201 + $0x1da8] sm:$0xff]
        %v1222 = vld [vmem:[%s201 + $0x1db0] sm:$0xff]
        %v1223 = vld [vmem:[%s201 + $0x1db8] sm:$0xff]
        %v1224 = vld [vmem:[%s201 + $0x1dc0] sm:$0xff]
        %v1225 = vld [vmem:[%s201 + $0x1dc8] sm:$0xff]
        %v1226 = vld [vmem:[%s201 + $0x1dd0] sm:$0xff]
        %v1227 = vld [vmem:[%s201 + $0x1dd8] sm:$0xff]
        %v1228 = vld [vmem:[%s201 + $0x1de0] sm:$0xff]
        %v1229 = vld [vmem:[%s201 + $0x1de8] sm:$0xff]
        %v1230 = vld [vmem:[%s201 + $0x1df0] sm:$0xff]
        %v1231 = vld [vmem:[%s201 + $0x1df8] sm:$0xff]
        %v1232 = vld [vmem:[%s201 + $0x1e00] sm:$0xff]
        %v1233 = vld [vmem:[%s201 + $0x1e08] sm:$0xff]
        %v1234 = vld [vmem:[%s201 + $0x1e10] sm:$0xff]
        %v1235 = vld [vmem:[%s201 + $0x1e18] sm:$0xff]
        %v1236 = vld [vmem:[%s201 + $0x1e20] sm:$0xff]
        %v1237 = vld [vmem:[%s201 + $0x1e28] sm:$0xff]
        %v1238 = vld [vmem:[%s201 + $0x1e30] sm:$0xff]
        %v1239 = vld [vmem:[%s201 + $0x1e38] sm:$0xff]
        %v1240 = vld [vmem:[%s201 + $0x1e40] sm:$0xff]
        %v1241 = vld [vmem:[%s201 + $0x1e48] sm:$0xff]
        %v1242 = vld [vmem:[%s201 + $0x1e50] sm:$0xff]
        %v1243 = vld [vmem:[%s201 + $0x1e58] sm:$0xff]
        %v1244 = vld [vmem:[%s201 + $0x1e60] sm:$0xff]
        %v1245 = vld [vmem:[%s201 + $0x1e68] sm:$0xff]
        %v1246 = vld [vmem:[%s201 + $0x1e70] sm:$0xff]
        %v1247 = vld [vmem:[%s201 + $0x1e78] sm:$0xff]
        %v1248 = vld [vmem:[%s201 + $0x1e80] sm:$0xff]
        %v1249 = vld [vmem:[%s201 + $0x1e88] sm:$0xff]
        %v1250 = vld [vmem:[%s201 + $0x1e90] sm:$0xff]
        %v1251 = vld [vmem:[%s201 + $0x1e98] sm:$0xff]
        %v1252 = vld [vmem:[%s201 + $0x1ea0] sm:$0xff]
        %v1253 = vld [vmem:[%s201 + $0x1ea8] sm:$0xff]
        %v1254 = vld [vmem:[%s201 + $0x1eb0] sm:$0xff]
        %v1255 = vld [vmem:[%s201 + $0x1eb8] sm:$0xff]
        %v1256 = vld [vmem:[%s201 + $0x1ec0] sm:$0xff]
        %v1257 = vld [vmem:[%s201 + $0x1ec8] sm:$0xff]
        %v1258 = vld [vmem:[%s201 + $0x1ed0] sm:$0xff]
        %v1259 = vld [vmem:[%s201 + $0x1ed8] sm:$0xff]
        %v1260 = vld [vmem:[%s201 + $0x1ee0] sm:$0xff]
        %v1261 = vld [vmem:[%s201 + $0x1ee8] sm:$0xff]
        %v1262 = vld [vmem:[%s201 + $0x1ef0] sm:$0xff]
        %v1263 = vld [vmem:[%s201 + $0x1ef8] sm:$0xff]
        %v1264 = vld [vmem:[%s201 + $0x1f00] sm:$0xff]
        %v1265 = vld [vmem:[%s201 + $0x1f08] sm:$0xff]
        %v1266 = vld [vmem:[%s201 + $0x1f10] sm:$0xff]
        %v1267 = vld [vmem:[%s201 + $0x1f18] sm:$0xff]
        %v1268 = vld [vmem:[%s201 + $0x1f20] sm:$0xff]
        %v1269 = vld [vmem:[%s201 + $0x1f28] sm:$0xff]
        %v1270 = vld [vmem:[%s201 + $0x1f30] sm:$0xff]
        %v1271 = vld [vmem:[%s201 + $0x1f38] sm:$0xff]
        %v1272 = vld [vmem:[%s201 + $0x1f40] sm:$0xff]
        %v1273 = vld [vmem:[%s201 + $0x1f48] sm:$0xff]
        %v1274 = vld [vmem:[%s201 + $0x1f50] sm:$0xff]
        %v1275 = vld [vmem:[%s201 + $0x1f58] sm:$0xff]
        %v1276 = vld [vmem:[%s201 + $0x1f60] sm:$0xff]
        %v1277 = vld [vmem:[%s201 + $0x1f68] sm:$0xff]
        %v1278 = vld [vmem:[%s201 + $0x1f70] sm:$0xff]
        %v1279 = vld [vmem:[%s201 + $0x1f78] sm:$0xff]
        %v1280 = vld [vmem:[%s201 + $0x1f80] sm:$0xff]
        %v1281 = vld [vmem:[%s201 + $0x1f88] sm:$0xff]
        %v1282 = vld [vmem:[%s201 + $0x1f90] sm:$0xff]
        %v1283 = vld [vmem:[%s201 + $0x1f98] sm:$0xff]
        %v1284 = vld [vmem:[%s201 + $0x1fa0] sm:$0xff]
        %v1285 = vld [vmem:[%s201 + $0x1fa8] sm:$0xff]
        %v1286 = vld [vmem:[%s201 + $0x1fb0] sm:$0xff]
        %v1287 = vld [vmem:[%s201 + $0x1fb8] sm:$0xff]
        %v1288 = vld [vmem:[%s201 + $0x1fc0] sm:$0xff]
        %v1289 = vld [vmem:[%s201 + $0x1fc8] sm:$0xff]
        %v1290 = vld [vmem:[%s201 + $0x1fd0] sm:$0xff]
        %v1291 = vld [vmem:[%s201 + $0x1fd8] sm:$0xff]
        %v1292 = vld [vmem:[%s201 + $0x1fe0] sm:$0xff]
        %v1293 = vld [vmem:[%s201 + $0x1fe8] sm:$0xff]
        %v1294 = vld [vmem:[%s201 + $0x1ff0] sm:$0xff]
        %v1295 = vld [vmem:[%s201 + $0x1ff8] sm:$0xff]
        %v1296 = vld [vmem:[%s201 + $0x2000] sm:$0xff]
        %v1297 = vld [vmem:[%s201 + $0x2008] sm:$0xff]
        %v1298 = vld [vmem:[%s201 + $0x2010] sm:$0xff]
        %v1299 = vld [vmem:[%s201 + $0x2018] sm:$0xff]
        %v1300 = vld [vmem:[%s201 + $0x2020] sm:$0xff]
        %v1301 = vld [vmem:[%s201 + $0x2028] sm:$0xff]
        %v1302 = vld [vmem:[%s201 + $0x2030] sm:$0xff]
        %v1303 = vld [vmem:[%s201 + $0x2038] sm:$0xff]
        %v1304 = vld [vmem:[%s201 + $0x2040] sm:$0xff]
        %v1305 = vld [vmem:[%s201 + $0x2048] sm:$0xff]
        %v1306 = vld [vmem:[%s201 + $0x2050] sm:$0xff]
        %v1307 = vld [vmem:[%s201 + $0x2058] sm:$0xff]
        %v1308 = vld [vmem:[%s201 + $0x2060] sm:$0xff]
        %v1309 = vld [vmem:[%s201 + $0x2068] sm:$0xff]
        %v1310 = vld [vmem:[%s201 + $0x2070] sm:$0xff]
        %v1311 = vld [vmem:[%s201 + $0x2078] sm:$0xff]
        %v1312 = vld [vmem:[%s201 + $0x2080] sm:$0xff]
        %v1313 = vld [vmem:[%s201 + $0x2088] sm:$0xff]
        %v1314 = vld [vmem:[%s201 + $0x2090] sm:$0xff]
        %v1315 = vld [vmem:[%s201 + $0x2098] sm:$0xff]
        %v1316 = vld [vmem:[%s201 + $0x20a0] sm:$0xff]
        %v1317 = vld [vmem:[%s201 + $0x20a8] sm:$0xff]
        %v1318 = vld [vmem:[%s201 + $0x20b0] sm:$0xff]
        %v1319 = vld [vmem:[%s201 + $0x20b8] sm:$0xff]
        %v1320 = vld [vmem:[%s201 + $0x20c0] sm:$0xff]
        %v1321 = vld [vmem:[%s201 + $0x20c8] sm:$0xff]
        %v1322 = vld [vmem:[%s201 + $0x20d0] sm:$0xff]
        %v1323 = vld [vmem:[%s201 + $0x20d8] sm:$0xff]
        %v1324 = vld [vmem:[%s201 + $0x20e0] sm:$0xff]
        %v1325 = vld [vmem:[%s201 + $0x20e8] sm:$0xff]
        %v1326 = vld [vmem:[%s201 + $0x20f0] sm:$0xff]
        %v1327 = vld [vmem:[%s201 + $0x20f8] sm:$0xff]
        %v1328 = vld [vmem:[%s201 + $0x2100] sm:$0xff]
        %v1329 = vld [vmem:[%s201 + $0x2108] sm:$0xff]
        %v1330 = vld [vmem:[%s201 + $0x2110] sm:$0xff]
        %v1331 = vld [vmem:[%s201 + $0x2118] sm:$0xff]
        %v1332 = vld [vmem:[%s201 + $0x2120] sm:$0xff]
        %v1333 = vld [vmem:[%s201 + $0x2128] sm:$0xff]
        %v1334 = vld [vmem:[%s201 + $0x2130] sm:$0xff]
        %v1335 = vld [vmem:[%s201 + $0x2138] sm:$0xff]
        %v1336 = vld [vmem:[%s201 + $0x2140] sm:$0xff]
        %v1337 = vld [vmem:[%s201 + $0x2148] sm:$0xff]
        %v1338 = vld [vmem:[%s201 + $0x2150] sm:$0xff]
        %v1339 = vld [vmem:[%s201 + $0x2158] sm:$0xff]
        %v1340 = vld [vmem:[%s201 + $0x2160] sm:$0xff]
        %v1341 = vld [vmem:[%s201 + $0x2168] sm:$0xff]
        %v1342 = vld [vmem:[%s201 + $0x2170] sm:$0xff]
        %v1343 = vld [vmem:[%s201 + $0x2178] sm:$0xff]
        %v1344 = vld [vmem:[%s201 + $0x2180] sm:$0xff]
        %v1345 = vld [vmem:[%s201 + $0x2188] sm:$0xff]
        %v1346 = vld [vmem:[%s201 + $0x2190] sm:$0xff]
        %v1347 = vld [vmem:[%s201 + $0x2198] sm:$0xff]
        %v1348 = vld [vmem:[%s201 + $0x21a0] sm:$0xff]
        %v1349 = vld [vmem:[%s201 + $0x21a8] sm:$0xff]
        %v1350 = vld [vmem:[%s201 + $0x21b0] sm:$0xff]
        %v1351 = vld [vmem:[%s201 + $0x21b8] sm:$0xff]
        %v1352 = vld [vmem:[%s201 + $0x21c0] sm:$0xff]
        %v1353 = vld [vmem:[%s201 + $0x21c8] sm:$0xff]
        %v1354 = vld [vmem:[%s201 + $0x21d0] sm:$0xff]
        %v1355 = vld [vmem:[%s201 + $0x21d8] sm:$0xff]
        %v1356 = vld [vmem:[%s201 + $0x21e0] sm:$0xff]
        %v1357 = vld [vmem:[%s201 + $0x21e8] sm:$0xff]
        %v1358 = vld [vmem:[%s201 + $0x21f0] sm:$0xff]
        %v1359 = vld [vmem:[%s201 + $0x21f8] sm:$0xff]
        %v1360 = vld [vmem:[%s201 + $0x2200] sm:$0xff]
        %v1361 = vld [vmem:[%s201 + $0x2208] sm:$0xff]
        %v1362 = vld [vmem:[%s201 + $0x2210] sm:$0xff]
        %v1363 = vld [vmem:[%s201 + $0x2218] sm:$0xff]
        %v1364 = vld [vmem:[%s201 + $0x2220] sm:$0xff]
        %v1365 = vld [vmem:[%s201 + $0x2228] sm:$0xff]
        %v1366 = vld [vmem:[%s201 + $0x2230] sm:$0xff]
        %v1367 = vld [vmem:[%s201 + $0x2238] sm:$0xff]
        %v1368 = vld [vmem:[%s201 + $0x2240] sm:$0xff]
        %v1369 = vld [vmem:[%s201 + $0x2248] sm:$0xff]
        %v1370 = vld [vmem:[%s201 + $0x2250] sm:$0xff]
        %v1371 = vld [vmem:[%s201 + $0x2258] sm:$0xff]
        %v1372 = vld [vmem:[%s201 + $0x2260] sm:$0xff]
        %v1373 = vld [vmem:[%s201 + $0x2268] sm:$0xff]
        %v1374 = vld [vmem:[%s201 + $0x2270] sm:$0xff]
        %v1375 = vld [vmem:[%s201 + $0x2278] sm:$0xff]
        %v1376 = vld [vmem:[%s201 + $0x2280] sm:$0xff]
        %v1377 = vld [vmem:[%s201 + $0x2288] sm:$0xff]
        %v1378 = vld [vmem:[%s201 + $0x2290] sm:$0xff]
        %v1379 = vld [vmem:[%s201 + $0x2298] sm:$0xff]
        %v1380 = vld [vmem:[%s201 + $0x22a0] sm:$0xff]
        %v1381 = vld [vmem:[%s201 + $0x22a8] sm:$0xff]
        %v1382 = vld [vmem:[%s201 + $0x22b0] sm:$0xff]
        %v1383 = vld [vmem:[%s201 + $0x22b8] sm:$0xff]
        %v1384 = vld [vmem:[%s201 + $0x22c0] sm:$0xff]
        %v1385 = vld [vmem:[%s201 + $0x22c8] sm:$0xff]
        %v1386 = vld [vmem:[%s201 + $0x22d0] sm:$0xff]
        %v1387 = vld [vmem:[%s201 + $0x22d8] sm:$0xff]
        %v1388 = vld [vmem:[%s201 + $0x22e0] sm:$0xff]
        %v1389 = vld [vmem:[%s201 + $0x22e8] sm:$0xff]
        %v1390 = vld [vmem:[%s201 + $0x22f0] sm:$0xff]
        %v1391 = vld [vmem:[%s201 + $0x22f8] sm:$0xff]
        %v1392 = vld [vmem:[%s201 + $0x2300] sm:$0xff]
        %v1393 = vld [vmem:[%s201 + $0x2308] sm:$0xff]
        %v1394 = vld [vmem:[%s201 + $0x2310] sm:$0xff]
        %v1395 = vld [vmem:[%s201 + $0x2318] sm:$0xff]
        %v1396 = vld [vmem:[%s201 + $0x2320] sm:$0xff]
        %v1397 = vld [vmem:[%s201 + $0x2328] sm:$0xff]
        %v1398 = vld [vmem:[%s201 + $0x2330] sm:$0xff]
        %v1399 = vld [vmem:[%s201 + $0x2338] sm:$0xff]
        %v1400 = vld [vmem:[%s201 + $0x2340] sm:$0xff]
        %v1401 = vld [vmem:[%s201 + $0x2348] sm:$0xff]
        %v1402 = vld [vmem:[%s201 + $0x2350] sm:$0xff]
        %v1403 = vld [vmem:[%s201 + $0x2358] sm:$0xff]
        %v1404 = vld [vmem:[%s201 + $0x2360] sm:$0xff]
        %v1405 = vld [vmem:[%s201 + $0x2368] sm:$0xff]
        %v1406 = vld [vmem:[%s201 + $0x2370] sm:$0xff]
        %v1407 = vld [vmem:[%s201 + $0x2378] sm:$0xff]
        %v1408 = vld [vmem:[%s201 + $0x2380] sm:$0xff]
        %v1409 = vld [vmem:[%s201 + $0x2388] sm:$0xff]
        %v1410 = vld [vmem:[%s201 + $0x2390] sm:$0xff]
        %v1411 = vld [vmem:[%s201 + $0x2398] sm:$0xff]
        %v1412 = vld [vmem:[%s201 + $0x23a0] sm:$0xff]
        %v1413 = vld [vmem:[%s201 + $0x23a8] sm:$0xff]
        %v1414 = vld [vmem:[%s201 + $0x23b0] sm:$0xff]
        %v1415 = vld [vmem:[%s201 + $0x23b8] sm:$0xff]
        %v1416 = vld [vmem:[%s201 + $0x23c0] sm:$0xff]
        %v1417 = vld [vmem:[%s201 + $0x23c8] sm:$0xff]
        %v1418 = vld [vmem:[%s201 + $0x23d0] sm:$0xff]
        %v1419 = vld [vmem:[%s201 + $0x23d8] sm:$0xff]
        %v1420 = vld [vmem:[%s201 + $0x23e0] sm:$0xff]
        %v1421 = vld [vmem:[%s201 + $0x23e8] sm:$0xff]
        %v1422 = vld [vmem:[%s201 + $0x23f0] sm:$0xff]
        %v1423 = vld [vmem:[%s201 + $0x23f8] sm:$0xff]
        %v1424 = vld [vmem:[%s201 + $0x2400] sm:$0xff]
        %v1425 = vld [vmem:[%s201 + $0x2408] sm:$0xff]
        %v1426 = vld [vmem:[%s201 + $0x2410] sm:$0xff]
        %v1427 = vld [vmem:[%s201 + $0x2418] sm:$0xff]
        %v1428 = vld [vmem:[%s201 + $0x2420] sm:$0xff]
        %v1429 = vld [vmem:[%s201 + $0x2428] sm:$0xff]
        %v1430 = vld [vmem:[%s201 + $0x2430] sm:$0xff]
        %v1431 = vld [vmem:[%s201 + $0x2438] sm:$0xff]
        %v1432 = vld [vmem:[%s201 + $0x2440] sm:$0xff]
        %v1433 = vld [vmem:[%s201 + $0x2448] sm:$0xff]
        %v1434 = vld [vmem:[%s201 + $0x2450] sm:$0xff]
        %v1435 = vld [vmem:[%s201 + $0x2458] sm:$0xff]
        %v1436 = vld [vmem:[%s201 + $0x2460] sm:$0xff]
        %v1437 = vld [vmem:[%s201 + $0x2468] sm:$0xff]
        %v1438 = vld [vmem:[%s201 + $0x2470] sm:$0xff]
        %v1439 = vld [vmem:[%s201 + $0x2478] sm:$0xff]
        %v1440 = vld [vmem:[%s201 + $0x2480] sm:$0xff]
        %v1441 = vld [vmem:[%s201 + $0x2488] sm:$0xff]
        %v1442 = vld [vmem:[%s201 + $0x2490] sm:$0xff]
        %v1443 = vld [vmem:[%s201 + $0x2498] sm:$0xff]
        %v1444 = vld [vmem:[%s201 + $0x24a0] sm:$0xff]
        %v1445 = vld [vmem:[%s201 + $0x24a8] sm:$0xff]
        %v1446 = vld [vmem:[%s201 + $0x24b0] sm:$0xff]
        %v1447 = vld [vmem:[%s201 + $0x24b8] sm:$0xff]
        %v1448 = vld [vmem:[%s201 + $0x24c0] sm:$0xff]
        %v1449 = vld [vmem:[%s201 + $0x24c8] sm:$0xff]
        %v1450 = vld [vmem:[%s201 + $0x24d0] sm:$0xff]
        %v1451 = vld [vmem:[%s201 + $0x24d8] sm:$0xff]
        %v1452 = vld [vmem:[%s201 + $0x24e0] sm:$0xff]
        %v1453 = vld [vmem:[%s201 + $0x24e8] sm:$0xff]
        %v1454 = vld [vmem:[%s201 + $0x24f0] sm:$0xff]
        %v1455 = vld [vmem:[%s201 + $0x24f8] sm:$0xff]
        %v1456 = vld [vmem:[%s201 + $0x2500] sm:$0xff]
        %v1457 = vld [vmem:[%s201 + $0x2508] sm:$0xff]
        %v1458 = vld [vmem:[%s201 + $0x2510] sm:$0xff]
        %v1459 = vld [vmem:[%s201 + $0x2518] sm:$0xff]
        %v1460 = vld [vmem:[%s201 + $0x2520] sm:$0xff]
        %v1461 = vld [vmem:[%s201 + $0x2528] sm:$0xff]
        %v1462 = vld [vmem:[%s201 + $0x2530] sm:$0xff]
        %v1463 = vld [vmem:[%s201 + $0x2538] sm:$0xff]
        %v1464 = vld [vmem:[%s201 + $0x2540] sm:$0xff]
        %v1465 = vld [vmem:[%s201 + $0x2548] sm:$0xff]
        %v1466 = vld [vmem:[%s201 + $0x2550] sm:$0xff]
        %v1467 = vld [vmem:[%s201 + $0x2558] sm:$0xff]
        %v1468 = vld [vmem:[%s201 + $0x2560] sm:$0xff]
        %v1469 = vld [vmem:[%s201 + $0x2568] sm:$0xff]
        %v1470 = vld [vmem:[%s201 + $0x2570] sm:$0xff]
        %v1471 = vld [vmem:[%s201 + $0x2578] sm:$0xff]
        %v1472 = vld [vmem:[%s201 + $0x2580] sm:$0xff]
        %v1473 = vld [vmem:[%s201 + $0x2588] sm:$0xff]
        %v1474 = vld [vmem:[%s201 + $0x2590] sm:$0xff]
        %v1475 = vld [vmem:[%s201 + $0x2598] sm:$0xff]
        %v1476 = vld [vmem:[%s201 + $0x25a0] sm:$0xff]
        %v1477 = vld [vmem:[%s201 + $0x25a8] sm:$0xff]
        %v1478 = vld [vmem:[%s201 + $0x25b0] sm:$0xff]
        %v1479 = vld [vmem:[%s201 + $0x25b8] sm:$0xff]
        %v1480 = vld [vmem:[%s201 + $0x25c0] sm:$0xff]
        %v1481 = vld [vmem:[%s201 + $0x25c8] sm:$0xff]
        %v1482 = vld [vmem:[%s201 + $0x25d0] sm:$0xff]
        %v1483 = vld [vmem:[%s201 + $0x25d8] sm:$0xff]
        %v1484 = vld [vmem:[%s201 + $0x25e0] sm:$0xff]
        %v1485 = vld [vmem:[%s201 + $0x25e8] sm:$0xff]
        %v1486 = vld [vmem:[%s201 + $0x25f0] sm:$0xff]
        %v1487 = vld [vmem:[%s201 + $0x25f8] sm:$0xff]
        %v1488 = vld [vmem:[%s201 + $0x2600] sm:$0xff]
        %v1489 = vld [vmem:[%s201 + $0x2608] sm:$0xff]
        %v1490 = vld [vmem:[%s201 + $0x2610] sm:$0xff]
        %v1491 = vld [vmem:[%s201 + $0x2618] sm:$0xff]
        %v1492 = vld [vmem:[%s201 + $0x2620] sm:$0xff]
        %v1493 = vld [vmem:[%s201 + $0x2628] sm:$0xff]
        %v1494 = vld [vmem:[%s201 + $0x2630] sm:$0xff]
        %v1495 = vld [vmem:[%s201 + $0x2638] sm:$0xff]
        %v1496 = vld [vmem:[%s201 + $0x2640] sm:$0xff]
        %v1497 = vld [vmem:[%s201 + $0x2648] sm:$0xff]
        %v1498 = vld [vmem:[%s201 + $0x2650] sm:$0xff]
        %v1499 = vld [vmem:[%s201 + $0x2658] sm:$0xff]
        %v1500 = vld [vmem:[%s201 + $0x2660] sm:$0xff]
        %v1501 = vld [vmem:[%s201 + $0x2668] sm:$0xff]
        %v1502 = vld [vmem:[%s201 + $0x2670] sm:$0xff]
        %v1503 = vld [vmem:[%s201 + $0x2678] sm:$0xff]
        %v1504 = vld [vmem:[%s201 + $0x2680] sm:$0xff]
        %v1505 = vld [vmem:[%s201 + $0x2688] sm:$0xff]
        %v1506 = vld [vmem:[%s201 + $0x2690] sm:$0xff]
        %v1507 = vld [vmem:[%s201 + $0x2698] sm:$0xff]
        %v1508 = vld [vmem:[%s201 + $0x26a0] sm:$0xff]
        %v1509 = vld [vmem:[%s201 + $0x26a8] sm:$0xff]
        %v1510 = vld [vmem:[%s201 + $0x26b0] sm:$0xff]
        %v1511 = vld [vmem:[%s201 + $0x26b8] sm:$0xff]
        %v1512 = vld [vmem:[%s201 + $0x26c0] sm:$0xff]
        %v1513 = vld [vmem:[%s201 + $0x26c8] sm:$0xff]
        %v1514 = vld [vmem:[%s201 + $0x26d0] sm:$0xff]
        %v1515 = vld [vmem:[%s201 + $0x26d8] sm:$0xff]
        %v1516 = vld [vmem:[%s201 + $0x26e0] sm:$0xff]
        %v1517 = vld [vmem:[%s201 + $0x26e8] sm:$0xff]
        %v1518 = vld [vmem:[%s201 + $0x26f0] sm:$0xff]
        %v1519 = vld [vmem:[%s201 + $0x26f8] sm:$0xff]
        %v1520 = vld [vmem:[%s201 + $0x2700] sm:$0xff]
        %v1521 = vld [vmem:[%s201 + $0x2708] sm:$0xff]
        %v1522 = vld [vmem:[%s201 + $0x2710] sm:$0xff]
        %v1523 = vld [vmem:[%s201 + $0x2718] sm:$0xff]
        %v1524 = vld [vmem:[%s201 + $0x2720] sm:$0xff]
        %v1525 = vld [vmem:[%s201 + $0x2728] sm:$0xff]
        %v1526 = vld [vmem:[%s201 + $0x2730] sm:$0xff]
        %v1527 = vld [vmem:[%s201 + $0x2738] sm:$0xff]
        %v1528 = vld [vmem:[%s201 + $0x2740] sm:$0xff]
        %v1529 = vld [vmem:[%s201 + $0x2748] sm:$0xff]
        %v1530 = vld [vmem:[%s201 + $0x2750] sm:$0xff]
        %v1531 = vld [vmem:[%s201 + $0x2758] sm:$0xff]
        %v1532 = vld [vmem:[%s201 + $0x2760] sm:$0xff]
        %v1533 = vld [vmem:[%s201 + $0x2768] sm:$0xff]
        %v1534 = vld [vmem:[%s201 + $0x2770] sm:$0xff]
        %v1535 = vld [vmem:[%s201 + $0x2778] sm:$0xff]
        %v1536 = vld [vmem:[%s201 + $0x2780] sm:$0xff]
        %v1537 = vld [vmem:[%s201 + $0x2788] sm:$0xff]
        %v1538 = vld [vmem:[%s201 + $0x2790] sm:$0xff]
        %v1539 = vld [vmem:[%s201 + $0x2798] sm:$0xff]
        %v1540 = vld [vmem:[%s201 + $0x27a0] sm:$0xff]
        %v1541 = vld [vmem:[%s201 + $0x27a8] sm:$0xff]
        %v1542 = vld [vmem:[%s201 + $0x27b0] sm:$0xff]
        %v1543 = vld [vmem:[%s201 + $0x27b8] sm:$0xff]
        %v1544 = vld [vmem:[%s201 + $0x27c0] sm:$0xff]
        %v1545 = vld [vmem:[%s201 + $0x27c8] sm:$0xff]
        %v1546 = vld [vmem:[%s201 + $0x27d0] sm:$0xff]
        %v1547 = vld [vmem:[%s201 + $0x27d8] sm:$0xff]
        %v1548 = vld [vmem:[%s201 + $0x27e0] sm:$0xff]
        %v1549 = vld [vmem:[%s201 + $0x27e8] sm:$0xff]
        %v1550 = vld [vmem:[%s201 + $0x27f0] sm:$0xff]
        %v1551 = vld [vmem:[%s201 + $0x27f8] sm:$0xff]
        %v1552 = vld [vmem:[%s201 + $0x2800] sm:$0xff]
        %v1553 = vld [vmem:[%s201 + $0x2808] sm:$0xff]
        %v1554 = vld [vmem:[%s201 + $0x2810] sm:$0xff]
        %v1555 = vld [vmem:[%s201 + $0x2818] sm:$0xff]
        %v1556 = vld [vmem:[%s201 + $0x2820] sm:$0xff]
        %v1557 = vld [vmem:[%s201 + $0x2828] sm:$0xff]
        %v1558 = vld [vmem:[%s201 + $0x2830] sm:$0xff]
        %v1559 = vld [vmem:[%s201 + $0x2838] sm:$0xff]
        %v1560 = vld [vmem:[%s201 + $0x2840] sm:$0xff]
        %v1561 = vld [vmem:[%s201 + $0x2848] sm:$0xff]
        %v1562 = vld [vmem:[%s201 + $0x2850] sm:$0xff]
        %v1563 = vld [vmem:[%s201 + $0x2858] sm:$0xff]
        %v1564 = vld [vmem:[%s201 + $0x2860] sm:$0xff]
        %v1565 = vld [vmem:[%s201 + $0x2868] sm:$0xff]
        %v1566 = vld [vmem:[%s201 + $0x2870] sm:$0xff]
        %v1567 = vld [vmem:[%s201 + $0x2878] sm:$0xff]
        %v1568 = vld [vmem:[%s201 + $0x2880] sm:$0xff]
        %v1569 = vld [vmem:[%s201 + $0x2888] sm:$0xff]
        %v1570 = vld [vmem:[%s201 + $0x2890] sm:$0xff]
        %v1571 = vld [vmem:[%s201 + $0x2898] sm:$0xff]
        %v1572 = vld [vmem:[%s201 + $0x28a0] sm:$0xff]
        %v1573 = vld [vmem:[%s201 + $0x28a8] sm:$0xff]
        %v1574 = vld [vmem:[%s201 + $0x28b0] sm:$0xff]
        %v1575 = vld [vmem:[%s201 + $0x28b8] sm:$0xff]
        %v1576 = vld [vmem:[%s201 + $0x28c0] sm:$0xff]
        %v1577 = vld [vmem:[%s201 + $0x28c8] sm:$0xff]
        %v1578 = vld [vmem:[%s201 + $0x28d0] sm:$0xff]
        %v1579 = vld [vmem:[%s201 + $0x28d8] sm:$0xff]
        %v1580 = vld [vmem:[%s201 + $0x28e0] sm:$0xff]
        %v1581 = vld [vmem:[%s201 + $0x28e8] sm:$0xff]
        %v1582 = vld [vmem:[%s201 + $0x28f0] sm:$0xff]
        %v1583 = vld [vmem:[%s201 + $0x28f8] sm:$0xff]
        %v1584 = vld [vmem:[%s201 + $0x2900] sm:$0xff]
        %v1585 = vld [vmem:[%s201 + $0x2908] sm:$0xff]
        %v1586 = vld [vmem:[%s201 + $0x2910] sm:$0xff]
        %v1587 = vld [vmem:[%s201 + $0x2918] sm:$0xff]
        %v1588 = vld [vmem:[%s201 + $0x2920] sm:$0xff]
        %v1589 = vld [vmem:[%s201 + $0x2928] sm:$0xff]
        %v1590 = vld [vmem:[%s201 + $0x2930] sm:$0xff]
        %v1591 = vld [vmem:[%s201 + $0x2938] sm:$0xff]
        %v1592 = vld [vmem:[%s201 + $0x2940] sm:$0xff]
        %v1593 = vld [vmem:[%s201 + $0x2948] sm:$0xff]
        %v1594 = vld [vmem:[%s201 + $0x2950] sm:$0xff]
        %v1595 = vld [vmem:[%s201 + $0x2958] sm:$0xff]
        %v1596 = vld [vmem:[%s201 + $0x2960] sm:$0xff]
        %v1597 = vld [vmem:[%s201 + $0x2968] sm:$0xff]
        %v1598 = vld [vmem:[%s201 + $0x2970] sm:$0xff]
        %v1599 = vld [vmem:[%s201 + $0x2978] sm:$0xff]
        %v1600 = vld [vmem:[%s201 + $0x2980] sm:$0xff]
        %v1601 = vld [vmem:[%s201 + $0x2988] sm:$0xff]
        %v1602 = vld [vmem:[%s201 + $0x2990] sm:$0xff]
        %v1603 = vld [vmem:[%s201 + $0x2998] sm:$0xff]
        %v1604 = vld [vmem:[%s201 + $0x29a0] sm:$0xff]
        %v1605 = vld [vmem:[%s201 + $0x29a8] sm:$0xff]
        %v1606 = vld [vmem:[%s201 + $0x29b0] sm:$0xff]
        %v1607 = vld [vmem:[%s201 + $0x29b8] sm:$0xff]
        %v1608 = vld [vmem:[%s201 + $0x29c0] sm:$0xff]
        %v1609 = vld [vmem:[%s201 + $0x29c8] sm:$0xff]
        %v1610 = vld [vmem:[%s201 + $0x29d0] sm:$0xff]
        %v1611 = vld [vmem:[%s201 + $0x29d8] sm:$0xff]
        %v1612 = vld [vmem:[%s201 + $0x29e0] sm:$0xff]
        %v1613 = vld [vmem:[%s201 + $0x29e8] sm:$0xff]
        %v1614 = vld [vmem:[%s201 + $0x29f0] sm:$0xff]
        %v1615 = vld [vmem:[%s201 + $0x29f8] sm:$0xff]
        %v1616 = vld [vmem:[%s201 + $0x2a00] sm:$0xff]
        %v1617 = vld [vmem:[%s201 + $0x2a08] sm:$0xff]
        %v1618 = vld [vmem:[%s201 + $0x2a10] sm:$0xff]
        %v1619 = vld [vmem:[%s201 + $0x2a18] sm:$0xff]
        %v1620 = vld [vmem:[%s201 + $0x2a20] sm:$0xff]
        %v1621 = vld [vmem:[%s201 + $0x2a28] sm:$0xff]
        %v1622 = vld [vmem:[%s201 + $0x2a30] sm:$0xff]
        %v1623 = vld [vmem:[%s201 + $0x2a38] sm:$0xff]
        %v1624 = vld [vmem:[%s201 + $0x2a40] sm:$0xff]
        %v1625 = vld [vmem:[%s201 + $0x2a48] sm:$0xff]
        %v1626 = vld [vmem:[%s201 + $0x2a50] sm:$0xff]
        %v1627 = vld [vmem:[%s201 + $0x2a58] sm:$0xff]
        %v1628 = vld [vmem:[%s201 + $0x2a60] sm:$0xff]
        %v1629 = vld [vmem:[%s201 + $0x2a68] sm:$0xff]
        %v1630 = vld [vmem:[%s201 + $0x2a70] sm:$0xff]
        %v1631 = vld [vmem:[%s201 + $0x2a78] sm:$0xff]
        %v1632 = vld [vmem:[%s201 + $0x2a80] sm:$0xff]
        %v1633 = vld [vmem:[%s201 + $0x2a88] sm:$0xff]
        %v1634 = vld [vmem:[%s201 + $0x2a90] sm:$0xff]
        %v1635 = vld [vmem:[%s201 + $0x2a98] sm:$0xff]
        %v1636 = vld [vmem:[%s201 + $0x2aa0] sm:$0xff]
        %v1637 = vld [vmem:[%s201 + $0x2aa8] sm:$0xff]
        %v1638 = vld [vmem:[%s201 + $0x2ab0] sm:$0xff]
        %v1639 = vld [vmem:[%s201 + $0x2ab8] sm:$0xff]
        %v1640 = vld [vmem:[%s201 + $0x2ac0] sm:$0xff]
        %v1641 = vld [vmem:[%s201 + $0x2ac8] sm:$0xff]
        %v1642 = vld [vmem:[%s201 + $0x2ad0] sm:$0xff]
        %v1643 = vld [vmem:[%s201 + $0x2ad8] sm:$0xff]
        %v1644 = vld [vmem:[%s201 + $0x2ae0] sm:$0xff]
        %v1645 = vld [vmem:[%s201 + $0x2ae8] sm:$0xff]
        %v1646 = vld [vmem:[%s201 + $0x2af0] sm:$0xff]
        %v1647 = vld [vmem:[%s201 + $0x2af8] sm:$0xff]
        %v1648 = vld [vmem:[%s201 + $0x2b00] sm:$0xff]
        %v1649 = vld [vmem:[%s201 + $0x2b08] sm:$0xff]
        %v1650 = vld [vmem:[%s201 + $0x2b10] sm:$0xff]
        %v1651 = vld [vmem:[%s201 + $0x2b18] sm:$0xff]
        %v1652 = vld [vmem:[%s201 + $0x2b20] sm:$0xff]
        %v1653 = vld [vmem:[%s201 + $0x2b28] sm:$0xff]
        %v1654 = vld [vmem:[%s201 + $0x2b30] sm:$0xff]
        %v1655 = vld [vmem:[%s201 + $0x2b38] sm:$0xff]
        %v1656 = vld [vmem:[%s201 + $0x2b40] sm:$0xff]
        %v1657 = vld [vmem:[%s201 + $0x2b48] sm:$0xff]
        %v1658 = vld [vmem:[%s201 + $0x2b50] sm:$0xff]
        %v1659 = vld [vmem:[%s201 + $0x2b58] sm:$0xff]
        %v1660 = vld [vmem:[%s201 + $0x2b60] sm:$0xff]
        %v1661 = vld [vmem:[%s201 + $0x2b68] sm:$0xff]
        %v1662 = vld [vmem:[%s201 + $0x2b70] sm:$0xff]
        %v1663 = vld [vmem:[%s201 + $0x2b78] sm:$0xff]
        %v1664 = vld [vmem:[%s201 + $0x2b80] sm:$0xff]
        %v1665 = vld [vmem:[%s201 + $0x2b88] sm:$0xff]
        %v1666 = vld [vmem:[%s201 + $0x2b90] sm:$0xff]
        %v1667 = vld [vmem:[%s201 + $0x2b98] sm:$0xff]
        %v1668 = vld [vmem:[%s201 + $0x2ba0] sm:$0xff]
        %v1669 = vld [vmem:[%s201 + $0x2ba8] sm:$0xff]
        %v1670 = vld [vmem:[%s201 + $0x2bb0] sm:$0xff]
        %v1671 = vld [vmem:[%s201 + $0x2bb8] sm:$0xff]
        %v1672 = vld [vmem:[%s201 + $0x2bc0] sm:$0xff]
        %v1673 = vld [vmem:[%s201 + $0x2bc8] sm:$0xff]
        %v1674 = vld [vmem:[%s201 + $0x2bd0] sm:$0xff]
        %v1675 = vld [vmem:[%s201 + $0x2bd8] sm:$0xff]
        %v1676 = vld [vmem:[%s201 + $0x2be0] sm:$0xff]
        %v1677 = vld [vmem:[%s201 + $0x2be8] sm:$0xff]
        %v1678 = vld [vmem:[%s201 + $0x2bf0] sm:$0xff]
        %v1679 = vld [vmem:[%s201 + $0x2bf8] sm:$0xff]
        %v1680 = vld [vmem:[%s201 + $0x2c00] sm:$0xff]
        %v1681 = vld [vmem:[%s201 + $0x2c08] sm:$0xff]
        %v1682 = vld [vmem:[%s201 + $0x2c10] sm:$0xff]
        %v1683 = vld [vmem:[%s201 + $0x2c18] sm:$0xff]
        %v1684 = vld [vmem:[%s201 + $0x2c20] sm:$0xff]
        %v1685 = vld [vmem:[%s201 + $0x2c28] sm:$0xff]
        %v1686 = vld [vmem:[%s201 + $0x2c30] sm:$0xff]
        %v1687 = vld [vmem:[%s201 + $0x2c38] sm:$0xff]
        %v1688 = vld [vmem:[%s201 + $0x2c40] sm:$0xff]
        %v1689 = vld [vmem:[%s201 + $0x2c48] sm:$0xff]
        %v1690 = vld [vmem:[%s201 + $0x2c50] sm:$0xff]
        %v1691 = vld [vmem:[%s201 + $0x2c58] sm:$0xff]
        %v1692 = vld [vmem:[%s201 + $0x2c60] sm:$0xff]
        %v1693 = vld [vmem:[%s201 + $0x2c68] sm:$0xff]
        %v1694 = vld [vmem:[%s201 + $0x2c70] sm:$0xff]
        %v1695 = vld [vmem:[%s201 + $0x2c78] sm:$0xff]
        %v1696 = vld [vmem:[%s201 + $0x2c80] sm:$0xff]
        %v1697 = vld [vmem:[%s201 + $0x2c88] sm:$0xff]
        %v1698 = vld [vmem:[%s201 + $0x2c90] sm:$0xff]
        %v1699 = vld [vmem:[%s201 + $0x2c98] sm:$0xff]
        %v1700 = vld [vmem:[%s201 + $0x2ca0] sm:$0xff]
        %v1701 = vld [vmem:[%s201 + $0x2ca8] sm:$0xff]
        %v1702 = vld [vmem:[%s201 + $0x2cb0] sm:$0xff]
        %v1703 = vld [vmem:[%s201 + $0x2cb8] sm:$0xff]
        %v1704 = vld [vmem:[%s201 + $0x2cc0] sm:$0xff]
        %v1705 = vld [vmem:[%s201 + $0x2cc8] sm:$0xff]
        %v1706 = vld [vmem:[%s201 + $0x2cd0] sm:$0xff]
        %v1707 = vld [vmem:[%s201 + $0x2cd8] sm:$0xff]
        %v1708 = vld [vmem:[%s201 + $0x2ce0] sm:$0xff]
        %v1709 = vld [vmem:[%s201 + $0x2ce8] sm:$0xff]
        %v1710 = vld [vmem:[%s201 + $0x2cf0] sm:$0xff]
        %v1711 = vld [vmem:[%s201 + $0x2cf8] sm:$0xff]
        %v1712 = vld [vmem:[%s201 + $0x2d00] sm:$0xff]
        %v1713 = vld [vmem:[%s201 + $0x2d08] sm:$0xff]
        %v1714 = vld [vmem:[%s201 + $0x2d10] sm:$0xff]
        %v1715 = vld [vmem:[%s201 + $0x2d18] sm:$0xff]
        %v1716 = vld [vmem:[%s201 + $0x2d20] sm:$0xff]
        %v1717 = vld [vmem:[%s201 + $0x2d28] sm:$0xff]
        %v1718 = vld [vmem:[%s201 + $0x2d30] sm:$0xff]
        %v1719 = vld [vmem:[%s201 + $0x2d38] sm:$0xff]
        %v1720 = vld [vmem:[%s201 + $0x2d40] sm:$0xff]
        %v1721 = vld [vmem:[%s201 + $0x2d48] sm:$0xff]
        %v1722 = vld [vmem:[%s201 + $0x2d50] sm:$0xff]
        %v1723 = vld [vmem:[%s201 + $0x2d58] sm:$0xff]
        %v1724 = vld [vmem:[%s201 + $0x2d60] sm:$0xff]
        %v1725 = vld [vmem:[%s201 + $0x2d68] sm:$0xff]
        %v1726 = vld [vmem:[%s201 + $0x2d70] sm:$0xff]
        %v1727 = vld [vmem:[%s201 + $0x2d78] sm:$0xff]
        %v1728 = vld [vmem:[%s201 + $0x2d80] sm:$0xff]
        %v1729 = vld [vmem:[%s201 + $0x2d88] sm:$0xff]
        %v1730 = vld [vmem:[%s201 + $0x2d90] sm:$0xff]
        %v1731 = vld [vmem:[%s201 + $0x2d98] sm:$0xff]
        %v1732 = vld [vmem:[%s201 + $0x2da0] sm:$0xff]
        %v1733 = vld [vmem:[%s201 + $0x2da8] sm:$0xff]
        %v1734 = vld [vmem:[%s201 + $0x2db0] sm:$0xff]
        %v1735 = vld [vmem:[%s201 + $0x2db8] sm:$0xff]
        %v1736 = vld [vmem:[%s201 + $0x2dc0] sm:$0xff]
        %v1737 = vld [vmem:[%s201 + $0x2dc8] sm:$0xff]
        %v1738 = vld [vmem:[%s201 + $0x2dd0] sm:$0xff]
        %v1739 = vld [vmem:[%s201 + $0x2dd8] sm:$0xff]
        %v1740 = vld [vmem:[%s201 + $0x2de0] sm:$0xff]
        %v1741 = vld [vmem:[%s201 + $0x2de8] sm:$0xff]
        %v1742 = vld [vmem:[%s201 + $0x2df0] sm:$0xff]
        %v1743 = vld [vmem:[%s201 + $0x2df8] sm:$0xff]
        %v1744 = vld [vmem:[%s201 + $0x2e00] sm:$0xff]
        %v1745 = vld [vmem:[%s201 + $0x2e08] sm:$0xff]
        %v1746 = vld [vmem:[%s201 + $0x2e10] sm:$0xff]
        %v1747 = vld [vmem:[%s201 + $0x2e18] sm:$0xff]
        %v1748 = vld [vmem:[%s201 + $0x2e20] sm:$0xff]
        %v1749 = vld [vmem:[%s201 + $0x2e28] sm:$0xff]
        %v1750 = vld [vmem:[%s201 + $0x2e30] sm:$0xff]
        %v1751 = vld [vmem:[%s201 + $0x2e38] sm:$0xff]
        %v1752 = vld [vmem:[%s201 + $0x2e40] sm:$0xff]
        %v1753 = vld [vmem:[%s201 + $0x2e48] sm:$0xff]
        %v1754 = vld [vmem:[%s201 + $0x2e50] sm:$0xff]
        %v1755 = vld [vmem:[%s201 + $0x2e58] sm:$0xff]
        %v1756 = vld [vmem:[%s201 + $0x2e60] sm:$0xff]
        %v1757 = vld [vmem:[%s201 + $0x2e68] sm:$0xff]
        %v1758 = vld [vmem:[%s201 + $0x2e70] sm:$0xff]
        %v1759 = vld [vmem:[%s201 + $0x2e78] sm:$0xff]
        %v1760 = vld [vmem:[%s201 + $0x2e80] sm:$0xff]
        %v1761 = vld [vmem:[%s201 + $0x2e88] sm:$0xff]
        %v1762 = vld [vmem:[%s201 + $0x2e90] sm:$0xff]
        %v1763 = vld [vmem:[%s201 + $0x2e98] sm:$0xff]
        %v1764 = vld [vmem:[%s201 + $0x2ea0] sm:$0xff]
        %v1765 = vld [vmem:[%s201 + $0x2ea8] sm:$0xff]
        %v1766 = vld [vmem:[%s201 + $0x2eb0] sm:$0xff]
        %v1767 = vld [vmem:[%s201 + $0x2eb8] sm:$0xff]
        %v1768 = vld [vmem:[%s201 + $0x2ec0] sm:$0xff]
        %v1769 = vld [vmem:[%s201 + $0x2ec8] sm:$0xff]
        %v1770 = vld [vmem:[%s201 + $0x2ed0] sm:$0xff]
        %v1771 = vld [vmem:[%s201 + $0x2ed8] sm:$0xff]
        %v1772 = vld [vmem:[%s201 + $0x2ee0] sm:$0xff]
        %v1773 = vld [vmem:[%s201 + $0x2ee8] sm:$0xff]
        %v1774 = vld [vmem:[%s201 + $0x2ef0] sm:$0xff]
        %v1775 = vld [vmem:[%s201 + $0x2ef8] sm:$0xff]
        %v1776 = vld [vmem:[%s201 + $0x2f00] sm:$0xff]
        %v1777 = vld [vmem:[%s201 + $0x2f08] sm:$0xff]
        %v1778 = vld [vmem:[%s201 + $0x2f10] sm:$0xff]
        %v1779 = vld [vmem:[%s201 + $0x2f18] sm:$0xff]
        %v1780 = vld [vmem:[%s201 + $0x2f20] sm:$0xff]
        %v1781 = vld [vmem:[%s201 + $0x2f28] sm:$0xff]
        %v1782 = vld [vmem:[%s201 + $0x2f30] sm:$0xff]
        %v1783 = vld [vmem:[%s201 + $0x2f38] sm:$0xff]
        %v1784 = vld [vmem:[%s201 + $0x2f40] sm:$0xff]
        %v1785 = vld [vmem:[%s201 + $0x2f48] sm:$0xff]
        %v1786 = vld [vmem:[%s201 + $0x2f50] sm:$0xff]
        %v1787 = vld [vmem:[%s201 + $0x2f58] sm:$0xff]
        %v1788 = vld [vmem:[%s201 + $0x2f60] sm:$0xff]
        %v1789 = vld [vmem:[%s201 + $0x2f68] sm:$0xff]
        %v1790 = vld [vmem:[%s201 + $0x2f70] sm:$0xff]
        %v1791 = vld [vmem:[%s201 + $0x2f78] sm:$0xff]
        %v1792 = vld [vmem:[%s201 + $0x2f80] sm:$0xff]
        %v1793 = vld [vmem:[%s201 + $0x2f88] sm:$0xff]
        %v1794 = vld [vmem:[%s201 + $0x2f90] sm:$0xff]
        %v1795 = vld [vmem:[%s201 + $0x2f98] sm:$0xff]
        %v1796 = vld [vmem:[%s201 + $0x2fa0] sm:$0xff]
        %v1797 = vld [vmem:[%s201 + $0x2fa8] sm:$0xff]
        %v1798 = vld [vmem:[%s201 + $0x2fb0] sm:$0xff]
        %v1799 = vld [vmem:[%s201 + $0x2fb8] sm:$0xff]
        %v1800 = vld [vmem:[%s201 + $0x2fc0] sm:$0xff]
        %v1801 = vld [vmem:[%s201 + $0x2fc8] sm:$0xff]
        %v1802 = vld [vmem:[%s201 + $0x2fd0] sm:$0xff]
        %v1803 = vld [vmem:[%s201 + $0x2fd8] sm:$0xff]
        %v1804 = vld [vmem:[%s201 + $0x2fe0] sm:$0xff]
        %v1805 = vld [vmem:[%s201 + $0x2fe8] sm:$0xff]
        %v1806 = vld [vmem:[%s201 + $0x2ff0] sm:$0xff]
        %v1807 = vld [vmem:[%s201 + $0x2ff8] sm:$0xff]
        %v1808 = vld [vmem:[%s201 + $0x3000] sm:$0xff]
        %v1809 = vld [vmem:[%s201 + $0x3008] sm:$0xff]
        %v1810 = vld [vmem:[%s201 + $0x3010] sm:$0xff]
        %v1811 = vld [vmem:[%s201 + $0x3018] sm:$0xff]
        %v1812 = vld [vmem:[%s201 + $0x3020] sm:$0xff]
        %v1813 = vld [vmem:[%s201 + $0x3028] sm:$0xff]
        %v1814 = vld [vmem:[%s201 + $0x3030] sm:$0xff]
        %v1815 = vld [vmem:[%s201 + $0x3038] sm:$0xff]
        %v1816 = vld [vmem:[%s201 + $0x3040] sm:$0xff]
        %v1817 = vld [vmem:[%s201 + $0x3048] sm:$0xff]
        %v1818 = vld [vmem:[%s201 + $0x3050] sm:$0xff]
        %v1819 = vld [vmem:[%s201 + $0x3058] sm:$0xff]
        %v1820 = vld [vmem:[%s201 + $0x3060] sm:$0xff]
        %v1821 = vld [vmem:[%s201 + $0x3068] sm:$0xff]
        %v1822 = vld [vmem:[%s201 + $0x3070] sm:$0xff]
        %v1823 = vld [vmem:[%s201 + $0x3078] sm:$0xff]
        %v1824 = vld [vmem:[%s201 + $0x3080] sm:$0xff]
        %v1825 = vld [vmem:[%s201 + $0x3088] sm:$0xff]
        %v1826 = vld [vmem:[%s201 + $0x3090] sm:$0xff]
        %v1827 = vld [vmem:[%s201 + $0x3098] sm:$0xff]
        %v1828 = vld [vmem:[%s201 + $0x30a0] sm:$0xff]
        %v1829 = vld [vmem:[%s201 + $0x30a8] sm:$0xff]
        %v1830 = vld [vmem:[%s201 + $0x30b0] sm:$0xff]
        %v1831 = vld [vmem:[%s201 + $0x30b8] sm:$0xff]
        %v1832 = vld [vmem:[%s201 + $0x30c0] sm:$0xff]
        %v1833 = vld [vmem:[%s201 + $0x30c8] sm:$0xff]
        %v1834 = vld [vmem:[%s201 + $0x30d0] sm:$0xff]
        %v1835 = vld [vmem:[%s201 + $0x30d8] sm:$0xff]
        %v1836 = vld [vmem:[%s201 + $0x30e0] sm:$0xff]
        %v1837 = vld [vmem:[%s201 + $0x30e8] sm:$0xff]
        %v1838 = vld [vmem:[%s201 + $0x30f0] sm:$0xff]
        %v1839 = vld [vmem:[%s201 + $0x30f8] sm:$0xff]
        %v1840 = vld [vmem:[%s201 + $0x3100] sm:$0xff]
        %v1841 = vld [vmem:[%s201 + $0x3108] sm:$0xff]
        %v1842 = vld [vmem:[%s201 + $0x3110] sm:$0xff]
        %v1843 = vld [vmem:[%s201 + $0x3118] sm:$0xff]
        %v1844 = vld [vmem:[%s201 + $0x3120] sm:$0xff]
        %v1845 = vld [vmem:[%s201 + $0x3128] sm:$0xff]
        %v1846 = vld [vmem:[%s201 + $0x3130] sm:$0xff]
        %v1847 = vld [vmem:[%s201 + $0x3138] sm:$0xff]
        %v1848 = vld [vmem:[%s201 + $0x3140] sm:$0xff]
        %v1849 = vld [vmem:[%s201 + $0x3148] sm:$0xff]
        %v1850 = vld [vmem:[%s201 + $0x3150] sm:$0xff]
        %v1851 = vld [vmem:[%s201 + $0x3158] sm:$0xff]
        %v1852 = vld [vmem:[%s201 + $0x3160] sm:$0xff]
        %v1853 = vld [vmem:[%s201 + $0x3168] sm:$0xff]
        %v1854 = vld [vmem:[%s201 + $0x3170] sm:$0xff]
        %v1855 = vld [vmem:[%s201 + $0x3178] sm:$0xff]
        %v1856 = vld [vmem:[%s201 + $0x3180] sm:$0xff]
        %v1857 = vld [vmem:[%s201 + $0x3188] sm:$0xff]
        %v1858 = vld [vmem:[%s201 + $0x3190] sm:$0xff]
        %v1859 = vld [vmem:[%s201 + $0x3198] sm:$0xff]
        %v1860 = vld [vmem:[%s201 + $0x31a0] sm:$0xff]
        %v1861 = vld [vmem:[%s201 + $0x31a8] sm:$0xff]
        %v1862 = vld [vmem:[%s201 + $0x31b0] sm:$0xff]
        %v1863 = vld [vmem:[%s201 + $0x31b8] sm:$0xff]
        %v1864 = vld [vmem:[%s201 + $0x31c0] sm:$0xff]
        %v1865 = vld [vmem:[%s201 + $0x31c8] sm:$0xff]
        %v1866 = vld [vmem:[%s201 + $0x31d0] sm:$0xff]
        %v1867 = vld [vmem:[%s201 + $0x31d8] sm:$0xff]
        %v1868 = vld [vmem:[%s201 + $0x31e0] sm:$0xff]
        %v1869 = vld [vmem:[%s201 + $0x31e8] sm:$0xff]
        %v1870 = vld [vmem:[%s201 + $0x31f0] sm:$0xff]
        %v1871 = vld [vmem:[%s201 + $0x31f8] sm:$0xff]
        %v1872 = vld [vmem:[%s201 + $0x3200] sm:$0xff]
        %v1873 = vld [vmem:[%s201 + $0x3208] sm:$0xff]
        %v1874 = vld [vmem:[%s201 + $0x3210] sm:$0xff]
        %v1875 = vld [vmem:[%s201 + $0x3218] sm:$0xff]
        %v1876 = vld [vmem:[%s201 + $0x3220] sm:$0xff]
        %v1877 = vld [vmem:[%s201 + $0x3228] sm:$0xff]
        %v1878 = vld [vmem:[%s201 + $0x3230] sm:$0xff]
        %v1879 = vld [vmem:[%s201 + $0x3238] sm:$0xff]
        %v1880 = vld [vmem:[%s201 + $0x3240] sm:$0xff]
        %v1881 = vld [vmem:[%s201 + $0x3248] sm:$0xff]
        %v1882 = vld [vmem:[%s201 + $0x3250] sm:$0xff]
        %v1883 = vld [vmem:[%s201 + $0x3258] sm:$0xff]
        %v1884 = vld [vmem:[%s201 + $0x3260] sm:$0xff]
        %v1885 = vld [vmem:[%s201 + $0x3268] sm:$0xff]
        %v1886 = vld [vmem:[%s201 + $0x3270] sm:$0xff]
        %v1887 = vld [vmem:[%s201 + $0x3278] sm:$0xff]
        %v1888 = vld [vmem:[%s201 + $0x3280] sm:$0xff]
        %v1889 = vld [vmem:[%s201 + $0x3288] sm:$0xff]
        %v1890 = vld [vmem:[%s201 + $0x3290] sm:$0xff]
        %v1891 = vld [vmem:[%s201 + $0x3298] sm:$0xff]
        %v1892 = vld [vmem:[%s201 + $0x32a0] sm:$0xff]
        %v1893 = vld [vmem:[%s201 + $0x32a8] sm:$0xff]
        %v1894 = vld [vmem:[%s201 + $0x32b0] sm:$0xff]
        %v1895 = vld [vmem:[%s201 + $0x32b8] sm:$0xff]
        %v1896 = vld [vmem:[%s201 + $0x32c0] sm:$0xff]
        %v1897 = vld [vmem:[%s201 + $0x32c8] sm:$0xff]
        %v1898 = vld [vmem:[%s201 + $0x32d0] sm:$0xff]
        %v1899 = vld [vmem:[%s201 + $0x32d8] sm:$0xff]
        %v1900 = vld [vmem:[%s201 + $0x32e0] sm:$0xff]
        %v1901 = vld [vmem:[%s201 + $0x32e8] sm:$0xff]
        %v1902 = vld [vmem:[%s201 + $0x32f0] sm:$0xff]
        %v1903 = vld [vmem:[%s201 + $0x32f8] sm:$0xff]
        %v1904 = vld [vmem:[%s201 + $0x3300] sm:$0xff]
        %v1905 = vld [vmem:[%s201 + $0x3308] sm:$0xff]
        %v1906 = vld [vmem:[%s201 + $0x3310] sm:$0xff]
        %v1907 = vld [vmem:[%s201 + $0x3318] sm:$0xff]
        %v1908 = vld [vmem:[%s201 + $0x3320] sm:$0xff]
        %v1909 = vld [vmem:[%s201 + $0x3328] sm:$0xff]
        %v1910 = vld [vmem:[%s201 + $0x3330] sm:$0xff]
        %v1911 = vld [vmem:[%s201 + $0x3338] sm:$0xff]
        %v1912 = vld [vmem:[%s201 + $0x3340] sm:$0xff]
        %v1913 = vld [vmem:[%s201 + $0x3348] sm:$0xff]
        %v1914 = vld [vmem:[%s201 + $0x3350] sm:$0xff]
        %v1915 = vld [vmem:[%s201 + $0x3358] sm:$0xff]
        %v1916 = vld [vmem:[%s201 + $0x3360] sm:$0xff]
        %v1917 = vld [vmem:[%s201 + $0x3368] sm:$0xff]
        %v1918 = vld [vmem:[%s201 + $0x3370] sm:$0xff]
        %v1919 = vld [vmem:[%s201 + $0x3378] sm:$0xff]
        %v1920 = vld [vmem:[%s201 + $0x3380] sm:$0xff]
        %v1921 = vld [vmem:[%s201 + $0x3388] sm:$0xff]
        %v1922 = vld [vmem:[%s201 + $0x3390] sm:$0xff]
        %v1923 = vld [vmem:[%s201 + $0x3398] sm:$0xff]
        %v1924 = vld [vmem:[%s201 + $0x33a0] sm:$0xff]
        %v1925 = vld [vmem:[%s201 + $0x33a8] sm:$0xff]
        %v1926 = vld [vmem:[%s201 + $0x33b0] sm:$0xff]
        %v1927 = vld [vmem:[%s201 + $0x33b8] sm:$0xff]
        %v1928 = vld [vmem:[%s201 + $0x33c0] sm:$0xff]
        %v1929 = vld [vmem:[%s201 + $0x33c8] sm:$0xff]
        %v1930 = vld [vmem:[%s201 + $0x33d0] sm:$0xff]
        %v1931 = vld [vmem:[%s201 + $0x33d8] sm:$0xff]
        %v1932 = vld [vmem:[%s201 + $0x33e0] sm:$0xff]
        %v1933 = vld [vmem:[%s201 + $0x33e8] sm:$0xff]
        %v1934 = vld [vmem:[%s201 + $0x33f0] sm:$0xff]
        %v1935 = vld [vmem:[%s201 + $0x33f8] sm:$0xff]
        %v1936 = vld [vmem:[%s201 + $0x3400] sm:$0xff]
        %v1937 = vld [vmem:[%s201 + $0x3408] sm:$0xff]
        %v1938 = vld [vmem:[%s201 + $0x3410] sm:$0xff]
        %v1939 = vld [vmem:[%s201 + $0x3418] sm:$0xff]
        %v1940 = vld [vmem:[%s201 + $0x3420] sm:$0xff]
        %v1941 = vld [vmem:[%s201 + $0x3428] sm:$0xff]
        %v1942 = vld [vmem:[%s201 + $0x3430] sm:$0xff]
        %v1943 = vld [vmem:[%s201 + $0x3438] sm:$0xff]
        %v1944 = vld [vmem:[%s201 + $0x3440] sm:$0xff]
        %v1945 = vld [vmem:[%s201 + $0x3448] sm:$0xff]
        %v1946 = vld [vmem:[%s201 + $0x3450] sm:$0xff]
        %v1947 = vld [vmem:[%s201 + $0x3458] sm:$0xff]
        %v1948 = vld [vmem:[%s201 + $0x3460] sm:$0xff]
        %v1949 = vld [vmem:[%s201 + $0x3468] sm:$0xff]
        %v1950 = vld [vmem:[%s201 + $0x3470] sm:$0xff]
        %v1951 = vld [vmem:[%s201 + $0x3478] sm:$0xff]
        %v1952 = vld [vmem:[%s201 + $0x3480] sm:$0xff]
        %v1953 = vld [vmem:[%s201 + $0x3488] sm:$0xff]
        %v1954 = vld [vmem:[%s201 + $0x3490] sm:$0xff]
        %v1955 = vld [vmem:[%s201 + $0x3498] sm:$0xff]
        %v1956 = vld [vmem:[%s201 + $0x34a0] sm:$0xff]
        %v1957 = vld [vmem:[%s201 + $0x34a8] sm:$0xff]
        %v1958 = vld [vmem:[%s201 + $0x34b0] sm:$0xff]
        %v1959 = vld [vmem:[%s201 + $0x34b8] sm:$0xff]
        %v1960 = vld [vmem:[%s201 + $0x34c0] sm:$0xff]
        %v1961 = vld [vmem:[%s201 + $0x34c8] sm:$0xff]
        %v1962 = vld [vmem:[%s201 + $0x34d0] sm:$0xff]
        %v1963 = vld [vmem:[%s201 + $0x34d8] sm:$0xff]
        %v1964 = vld [vmem:[%s201 + $0x34e0] sm:$0xff]
        %v1965 = vld [vmem:[%s201 + $0x34e8] sm:$0xff]
        %v1966 = vld [vmem:[%s201 + $0x34f0] sm:$0xff]
        %v1967 = vld [vmem:[%s201 + $0x34f8] sm:$0xff]
        %v1968 = vld [vmem:[%s201 + $0x3500] sm:$0xff]
        %v1969 = vld [vmem:[%s201 + $0x3508] sm:$0xff]
        %v1970 = vld [vmem:[%s201 + $0x3510] sm:$0xff]
        %v1971 = vld [vmem:[%s201 + $0x3518] sm:$0xff]
        %v1972 = vld [vmem:[%s201 + $0x3520] sm:$0xff]
        %v1973 = vld [vmem:[%s201 + $0x3528] sm:$0xff]
        %v1974 = vld [vmem:[%s201 + $0x3530] sm:$0xff]
        %v1975 = vld [vmem:[%s201 + $0x3538] sm:$0xff]
        %v1976 = vld [vmem:[%s201 + $0x3540] sm:$0xff]
        %v1977 = vld [vmem:[%s201 + $0x3548] sm:$0xff]
        %v1978 = vld [vmem:[%s201 + $0x3550] sm:$0xff]
        %v1979 = vld [vmem:[%s201 + $0x3558] sm:$0xff]
        %v1980 = vld [vmem:[%s201 + $0x3560] sm:$0xff]
        %v1981 = vld [vmem:[%s201 + $0x3568] sm:$0xff]
        %v1982 = vld [vmem:[%s201 + $0x3570] sm:$0xff]
        %v1983 = vld [vmem:[%s201 + $0x3578] sm:$0xff]
        %v1984 = vld [vmem:[%s201 + $0x3580] sm:$0xff]
        %v1985 = vld [vmem:[%s201 + $0x3588] sm:$0xff]
        %v1986 = vld [vmem:[%s201 + $0x3590] sm:$0xff]
        %v1987 = vld [vmem:[%s201 + $0x3598] sm:$0xff]
        %v1988 = vld [vmem:[%s201 + $0x35a0] sm:$0xff]
        %v1989 = vld [vmem:[%s201 + $0x35a8] sm:$0xff]
        %v1990 = vld [vmem:[%s201 + $0x35b0] sm:$0xff]
        %v1991 = vld [vmem:[%s201 + $0x35b8] sm:$0xff]
        %v1992 = vld [vmem:[%s201 + $0x35c0] sm:$0xff]
        %v1993 = vld [vmem:[%s201 + $0x35c8] sm:$0xff]
        %v1994 = vld [vmem:[%s201 + $0x35d0] sm:$0xff]
        %v1995 = vld [vmem:[%s201 + $0x35d8] sm:$0xff]
        %v1996 = vld [vmem:[%s201 + $0x35e0] sm:$0xff]
        %v1997 = vld [vmem:[%s201 + $0x35e8] sm:$0xff]
        %v1998 = vld [vmem:[%s201 + $0x35f0] sm:$0xff]
        %v1999 = vld [vmem:[%s201 + $0x35f8] sm:$0xff]
        %v2000 = vld [vmem:[%s201 + $0x3600] sm:$0xff]
        %v2001 = vld [vmem:[%s201 + $0x3608] sm:$0xff]
        %v2002 = vld [vmem:[%s201 + $0x3610] sm:$0xff]
        %v2003 = vld [vmem:[%s201 + $0x3618] sm:$0xff]
        %v2004 = vld [vmem:[%s201 + $0x3620] sm:$0xff]
        %v2005 = vld [vmem:[%s201 + $0x3628] sm:$0xff]
        %v2006 = vld [vmem:[%s201 + $0x3630] sm:$0xff]
        %v2007 = vld [vmem:[%s201 + $0x3638] sm:$0xff]
        %v2008 = vld [vmem:[%s201 + $0x3640] sm:$0xff]
        %v2009 = vld [vmem:[%s201 + $0x3648] sm:$0xff]
        %v2010 = vld [vmem:[%s201 + $0x3650] sm:$0xff]
        %v2011 = vld [vmem:[%s201 + $0x3658] sm:$0xff]
        %v2012 = vld [vmem:[%s201 + $0x3660] sm:$0xff]
        %v2013 = vld [vmem:[%s201 + $0x3668] sm:$0xff]
        %v2014 = vld [vmem:[%s201 + $0x3670] sm:$0xff]
        %v2015 = vld [vmem:[%s201 + $0x3678] sm:$0xff]
        %v2016 = vld [vmem:[%s201 + $0x3680] sm:$0xff]
        %v2017 = vld [vmem:[%s201 + $0x3688] sm:$0xff]
        %v2018 = vld [vmem:[%s201 + $0x3690] sm:$0xff]
        %v2019 = vld [vmem:[%s201 + $0x3698] sm:$0xff]
        %v2020 = vld [vmem:[%s201 + $0x36a0] sm:$0xff]
        %v2021 = vld [vmem:[%s201 + $0x36a8] sm:$0xff]
        %v2022 = vld [vmem:[%s201 + $0x36b0] sm:$0xff]
        %v2023 = vld [vmem:[%s201 + $0x36b8] sm:$0xff]
        %v2024 = vld [vmem:[%s201 + $0x36c0] sm:$0xff]
        %v2025 = vld [vmem:[%s201 + $0x36c8] sm:$0xff]
        %v2026 = vld [vmem:[%s201 + $0x36d0] sm:$0xff]
        %v2027 = vld [vmem:[%s201 + $0x36d8] sm:$0xff]
        %v2028 = vld [vmem:[%s201 + $0x36e0] sm:$0xff]
        %v2029 = vld [vmem:[%s201 + $0x36e8] sm:$0xff]
        %v2030 = vld [vmem:[%s201 + $0x36f0] sm:$0xff]
        %v2031 = vld [vmem:[%s201 + $0x36f8] sm:$0xff]
        %v2032 = vld [vmem:[%s201 + $0x3700] sm:$0xff]
        %v2033 = vld [vmem:[%s201 + $0x3708] sm:$0xff]
        %v2034 = vld [vmem:[%s201 + $0x3710] sm:$0xff]
        %v2035 = vld [vmem:[%s201 + $0x3718] sm:$0xff]
        %v2036 = vld [vmem:[%s201 + $0x3720] sm:$0xff]
        %v2037 = vld [vmem:[%s201 + $0x3728] sm:$0xff]
        %v2038 = vld [vmem:[%s201 + $0x3730] sm:$0xff]
        %v2039 = vld [vmem:[%s201 + $0x3738] sm:$0xff]
        %v2040 = vld [vmem:[%s201 + $0x3740] sm:$0xff]
        %v2041 = vld [vmem:[%s201 + $0x3748] sm:$0xff]
        %v2042 = vld [vmem:[%s201 + $0x3750] sm:$0xff]
        %v2043 = vld [vmem:[%s201 + $0x3758] sm:$0xff]
        %v2044 = vld [vmem:[%s201 + $0x3760] sm:$0xff]
        %v2045 = vld [vmem:[%s201 + $0x3768] sm:$0xff]
        %v2046 = vld [vmem:[%s201 + $0x3770] sm:$0xff]
        %v2047 = vld [vmem:[%s201 + $0x3778] sm:$0xff]
        %v2048 = vld [vmem:[%s201 + $0x3780] sm:$0xff]
        %v2049 = vld [vmem:[%s201 + $0x3788] sm:$0xff]
        %v2050 = vld [vmem:[%s201 + $0x3790] sm:$0xff]
        %v2051 = vld [vmem:[%s201 + $0x3798] sm:$0xff]
        %v2052 = vld [vmem:[%s201 + $0x37a0] sm:$0xff]
        %v2053 = vld [vmem:[%s201 + $0x37a8] sm:$0xff]
        %v2054 = vld [vmem:[%s201 + $0x37b0] sm:$0xff]
        %v2055 = vld [vmem:[%s201 + $0x37b8] sm:$0xff]
        %v2056 = vld [vmem:[%s201 + $0x37c0] sm:$0xff]
        %v2057 = vld [vmem:[%s201 + $0x37c8] sm:$0xff]
        %v2058 = vld [vmem:[%s201 + $0x37d0] sm:$0xff]
        %v2059 = vld [vmem:[%s201 + $0x37d8] sm:$0xff]
        %v2060 = vld [vmem:[%s201 + $0x37e0] sm:$0xff]
        %v2061 = vld [vmem:[%s201 + $0x37e8] sm:$0xff]
        %v2062 = vld [vmem:[%s201 + $0x37f0] sm:$0xff]
        %v2063 = vld [vmem:[%s201 + $0x37f8] sm:$0xff]
        %v2078 = vcombine.high %v258, %v258
        %v2080 = vunpack.c.l.s4 1983009808
        %v2081 = vunpack.c.0.s8 %v2080
        %v2082 = vlaneseq
        %v2083 = vshrl.u32 %v2082, 7
        %v2084 = vsub.s32 %v2081, %v2083
        %v2085 = vrot.slane %v258, %v2084
        %v2087 = vunpack.c.l.s4 1983009808
        %v2088 = vunpack.c.0.s8 %v2087
        %v2089 = vlaneseq
        %v2090 = vshrl.u32 %v2089, 7
        %v2091 = vsub.s32 %v2088, %v2090
        %v2092 = vrot.slane %v2078, %v2091
        %v2093 = vcombine.high %v2085, %v2085
        %v2094 = vcombine.high %v2092, %v2092
        %v2095 = vcombine.high %v259, %v259
        %v2097 = vunpack.c.l.s4 1983009808
        %v2098 = vunpack.c.0.s8 %v2097
        %v2099 = vlaneseq
        %v2100 = vshrl.u32 %v2099, 7
        %v2101 = vsub.s32 %v2098, %v2100
        %v2102 = vrot.slane %v259, %v2101
        %v2104 = vunpack.c.l.s4 1983009808
        %v2105 = vunpack.c.0.s8 %v2104
        %v2106 = vlaneseq
        %v2107 = vshrl.u32 %v2106, 7
        %v2108 = vsub.s32 %v2105, %v2107
        %v2109 = vrot.slane %v2095, %v2108
        %v2110 = vcombine.high %v2102, %v2102
        %v2111 = vcombine.high %v2109, %v2109
        %v2112 = vcombine.high %v260, %v260
        %v2114 = vunpack.c.l.s4 1983009808
        %v2115 = vunpack.c.0.s8 %v2114
        %v2116 = vlaneseq
        %v2117 = vshrl.u32 %v2116, 7
        %v2118 = vsub.s32 %v2115, %v2117
        %v2119 = vrot.slane %v260, %v2118
        %v2121 = vunpack.c.l.s4 1983009808
        %v2122 = vunpack.c.0.s8 %v2121
        %v2123 = vlaneseq
        %v2124 = vshrl.u32 %v2123, 7
        %v2125 = vsub.s32 %v2122, %v2124
        %v2126 = vrot.slane %v2112, %v2125
        %v2127 = vcombine.high %v2119, %v2119
        %v2128 = vcombine.high %v2126, %v2126
        %v2129 = vcombine.high %v261, %v261
        %v2131 = vunpack.c.l.s4 1983009808
        %v2132 = vunpack.c.0.s8 %v2131
        %v2133 = vlaneseq
        %v2134 = vshrl.u32 %v2133, 7
        %v2135 = vsub.s32 %v2132, %v2134
        %v2136 = vrot.slane %v261, %v2135
        %v2138 = vunpack.c.l.s4 1983009808
        %v2139 = vunpack.c.0.s8 %v2138
        %v2140 = vlaneseq
        %v2141 = vshrl.u32 %v2140, 7
        %v2142 = vsub.s32 %v2139, %v2141
        %v2143 = vrot.slane %v2129, %v2142
        %v2144 = vcombine.high %v2136, %v2136
        %v2145 = vcombine.high %v2143, %v2143
        %v2146 = vcombine.high %v262, %v262
        %v2148 = vunpack.c.l.s4 1983009808
        %v2149 = vunpack.c.0.s8 %v2148
        %v2150 = vlaneseq
        %v2151 = vshrl.u32 %v2150, 7
        %v2152 = vsub.s32 %v2149, %v2151
        %v2153 = vrot.slane %v262, %v2152
        %v2155 = vunpack.c.l.s4 1983009808
        %v2156 = vunpack.c.0.s8 %v2155
        %v2157 = vlaneseq
        %v2158 = vshrl.u32 %v2157, 7
        %v2159 = vsub.s32 %v2156, %v2158
        %v2160 = vrot.slane %v2146, %v2159
        %v2161 = vcombine.high %v2153, %v2153
        %v2162 = vcombine.high %v2160, %v2160
        %v2163 = vcombine.high %v263, %v263
        %v2165 = vunpack.c.l.s4 1983009808
        %v2166 = vunpack.c.0.s8 %v2165
        %v2167 = vlaneseq
        %v2168 = vshrl.u32 %v2167, 7
        %v2169 = vsub.s32 %v2166, %v2168
        %v2170 = vrot.slane %v263, %v2169
        %v2172 = vunpack.c.l.s4 1983009808
        %v2173 = vunpack.c.0.s8 %v2172
        %v2174 = vlaneseq
        %v2175 = vshrl.u32 %v2174, 7
        %v2176 = vsub.s32 %v2173, %v2175
        %v2177 = vrot.slane %v2163, %v2176
        %v2178 = vcombine.high %v2170, %v2170
        %v2179 = vcombine.high %v2177, %v2177
        %v2180 = vcombine.high %v264, %v264
        %v2182 = vunpack.c.l.s4 1983009808
        %v2183 = vunpack.c.0.s8 %v2182
        %v2184 = vlaneseq
        %v2185 = vshrl.u32 %v2184, 7
        %v2186 = vsub.s32 %v2183, %v2185
        %v2187 = vrot.slane %v264, %v2186
        %v2189 = vunpack.c.l.s4 1983009808
        %v2190 = vunpack.c.0.s8 %v2189
        %v2191 = vlaneseq
        %v2192 = vshrl.u32 %v2191, 7
        %v2193 = vsub.s32 %v2190, %v2192
        %v2194 = vrot.slane %v2180, %v2193
        %v2195 = vcombine.high %v2187, %v2187
        %v2196 = vcombine.high %v2194, %v2194
        %v2197 = vcombine.high %v265, %v265
        %v2199 = vunpack.c.l.s4 1983009808
        %v2200 = vunpack.c.0.s8 %v2199
        %v2201 = vlaneseq
        %v2202 = vshrl.u32 %v2201, 7
        %v2203 = vsub.s32 %v2200, %v2202
        %v2204 = vrot.slane %v265, %v2203
        %v2206 = vunpack.c.l.s4 1983009808
        %v2207 = vunpack.c.0.s8 %v2206
        %v2208 = vlaneseq
        %v2209 = vshrl.u32 %v2208, 7
        %v2210 = vsub.s32 %v2207, %v2209
        %v2211 = vrot.slane %v2197, %v2210
        %v2212 = vcombine.high %v2204, %v2204
        %v2213 = vcombine.high %v2211, %v2211
        %v2214 = vcombine.high %v266, %v266
        %v2216 = vunpack.c.l.s4 1983009808
        %v2217 = vunpack.c.0.s8 %v2216
        %v2218 = vlaneseq
        %v2219 = vshrl.u32 %v2218, 7
        %v2220 = vsub.s32 %v2217, %v2219
        %v2221 = vrot.slane %v266, %v2220
        %v2223 = vunpack.c.l.s4 1983009808
        %v2224 = vunpack.c.0.s8 %v2223
        %v2225 = vlaneseq
        %v2226 = vshrl.u32 %v2225, 7
        %v2227 = vsub.s32 %v2224, %v2226
        %v2228 = vrot.slane %v2214, %v2227
        %v2229 = vcombine.high %v2221, %v2221
        %v2230 = vcombine.high %v2228, %v2228
        %v2231 = vcombine.high %v267, %v267
        %v2233 = vunpack.c.l.s4 1983009808
        %v2234 = vunpack.c.0.s8 %v2233
        %v2235 = vlaneseq
        %v2236 = vshrl.u32 %v2235, 7
        %v2237 = vsub.s32 %v2234, %v2236
        %v2238 = vrot.slane %v267, %v2237
        %v2240 = vunpack.c.l.s4 1983009808
        %v2241 = vunpack.c.0.s8 %v2240
        %v2242 = vlaneseq
        %v2243 = vshrl.u32 %v2242, 7
        %v2244 = vsub.s32 %v2241, %v2243
        %v2245 = vrot.slane %v2231, %v2244
        %v2246 = vcombine.high %v2238, %v2238
        %v2247 = vcombine.high %v2245, %v2245
        %v2248 = vcombine.high %v268, %v268
        %v2250 = vunpack.c.l.s4 1983009808
        %v2251 = vunpack.c.0.s8 %v2250
        %v2252 = vlaneseq
        %v2253 = vshrl.u32 %v2252, 7
        %v2254 = vsub.s32 %v2251, %v2253
        %v2255 = vrot.slane %v268, %v2254
        %v2257 = vunpack.c.l.s4 1983009808
        %v2258 = vunpack.c.0.s8 %v2257
        %v2259 = vlaneseq
        %v2260 = vshrl.u32 %v2259, 7
        %v2261 = vsub.s32 %v2258, %v2260
        %v2262 = vrot.slane %v2248, %v2261
        %v2263 = vcombine.high %v2255, %v2255
        %v2264 = vcombine.high %v2262, %v2262
        %v2265 = vcombine.high %v269, %v269
        %v2267 = vunpack.c.l.s4 1983009808
        %v2268 = vunpack.c.0.s8 %v2267
        %v2269 = vlaneseq
        %v2270 = vshrl.u32 %v2269, 7
        %v2271 = vsub.s32 %v2268, %v2270
        %v2272 = vrot.slane %v269, %v2271
        %v2274 = vunpack.c.l.s4 1983009808
        %v2275 = vunpack.c.0.s8 %v2274
        %v2276 = vlaneseq
        %v2277 = vshrl.u32 %v2276, 7
        %v2278 = vsub.s32 %v2275, %v2277
        %v2279 = vrot.slane %v2265, %v2278
        %v2280 = vcombine.high %v2272, %v2272
        %v2281 = vcombine.high %v2279, %v2279
        %v2282 = vcombine.high %v270, %v270
        %v2284 = vunpack.c.l.s4 1983009808
        %v2285 = vunpack.c.0.s8 %v2284
        %v2286 = vlaneseq
        %v2287 = vshrl.u32 %v2286, 7
        %v2288 = vsub.s32 %v2285, %v2287
        %v2289 = vrot.slane %v270, %v2288
        %v2291 = vunpack.c.l.s4 1983009808
        %v2292 = vunpack.c.0.s8 %v2291
        %v2293 = vlaneseq
        %v2294 = vshrl.u32 %v2293, 7
        %v2295 = vsub.s32 %v2292, %v2294
        %v2296 = vrot.slane %v2282, %v2295
        %v2297 = vcombine.high %v2289, %v2289
        %v2298 = vcombine.high %v2296, %v2296
        %v2299 = vcombine.high %v271, %v271
        %v2301 = vunpack.c.l.s4 1983009808
        %v2302 = vunpack.c.0.s8 %v2301
        %v2303 = vlaneseq
        %v2304 = vshrl.u32 %v2303, 7
        %v2305 = vsub.s32 %v2302, %v2304
        %v2306 = vrot.slane %v271, %v2305
        %v2308 = vunpack.c.l.s4 1983009808
        %v2309 = vunpack.c.0.s8 %v2308
        %v2310 = vlaneseq
        %v2311 = vshrl.u32 %v2310, 7
        %v2312 = vsub.s32 %v2309, %v2311
        %v2313 = vrot.slane %v2299, %v2312
        %v2314 = vcombine.high %v2306, %v2306
        %v2315 = vcombine.high %v2313, %v2313
        %2372 = vmatprep.subr.mxu0 %v273
        %2373 = vmatpush1.msra.mxu0 %v272
        %2374 = vmatprep.subr.mxu0 %v275
        %2375 = vmatpush1.msra.mxu0 %v274
        %2376 = vmatprep.subr.mxu0 %v277
        %2377 = vmatpush1.msra.mxu0 %v276
        %2378 = vmatprep.subr.mxu0 %v279
        %2379 = vmatpush1.msra.mxu0 %v278
        %2380 = vmatprep.subr.mxu0 %v281
        %2381 = vmatpush1.msra.mxu0 %v280
        %2382 = vmatprep.subr.mxu0 %v283
        %2383 = vmatpush1.msra.mxu0 %v282
        %2384 = vmatprep.subr.mxu0 %v285
        %2385 = vmatpush1.msra.mxu0 %v284
        %2386 = vmatprep.subr.mxu0 %v287
        %2387 = vmatpush1.msra.mxu0 %v286
        %2388 = vmatprep.subr.mxu0 %v289
        %2389 = vmatpush1.msra.mxu0 %v288
        %2390 = vmatprep.subr.mxu0 %v291
        %2391 = vmatpush1.msra.mxu0 %v290
        %2392 = vmatprep.subr.mxu0 %v293
        %2393 = vmatpush1.msra.mxu0 %v292
        %2394 = vmatprep.subr.mxu0 %v295
        %2395 = vmatpush1.msra.mxu0 %v294
        %2396 = vmatprep.subr.mxu0 %v297
        %2397 = vmatpush1.msra.mxu0 %v296
        %2398 = vmatprep.subr.mxu0 %v299
        %2399 = vmatpush1.msra.mxu0 %v298
        %2400 = vmatprep.subr.mxu0 %v301
        %2401 = vmatpush1.msra.mxu0 %v300
        %2402 = vmatprep.subr.mxu0 %v303
        %2403 = vmatpush1.msra.mxu0 %v302
        %2404 = vmatprep.subr.mxu0 %v305
        %2405 = vmatpush1.msra.mxu0 %v304
        %2406 = vmatprep.subr.mxu0 %v307
        %2407 = vmatpush1.msra.mxu0 %v306
        %2408 = vmatprep.subr.mxu0 %v309
        %2409 = vmatpush1.msra.mxu0 %v308
        %2410 = vmatprep.subr.mxu0 %v311
        %2411 = vmatpush1.msra.mxu0 %v310
        %2412 = vmatprep.subr.mxu0 %v313
        %2413 = vmatpush1.msra.mxu0 %v312
        %2414 = vmatprep.subr.mxu0 %v315
        %2415 = vmatpush1.msra.mxu0 %v314
        %2416 = vmatprep.subr.mxu0 %v317
        %2417 = vmatpush1.msra.mxu0 %v316
        %2418 = vmatprep.subr.mxu0 %v319
        %2419 = vmatpush1.msra.mxu0 %v318
        %2420 = vmatprep.subr.mxu0 %v321
        %2421 = vmatpush1.msra.mxu0 %v320
        %2422 = vmatprep.subr.mxu0 %v323
        %2423 = vmatpush1.msra.mxu0 %v322
        %2424 = vmatprep.subr.mxu0 %v325
        %2425 = vmatpush1.msra.mxu0 %v324
        %2426 = vmatprep.subr.mxu0 %v327
        %2427 = vmatpush1.msra.mxu0 %v326
        %2428 = vmatprep.subr.mxu0 %v329
        %2429 = vmatpush1.msra.mxu0 %v328
        %2430 = vmatprep.subr.mxu0 %v331
        %2431 = vmatpush1.msra.mxu0 %v330
        %2432 = vmatprep.subr.mxu0 %v333
        %2433 = vmatpush1.msra.mxu0 %v332
        %2434 = vmatprep.subr.mxu0 %v335
        %2435 = vmatpush1.msra.mxu0 %v334
        %2436 = vmatprep.mubr.f32.mxu0 %v2093
        %2437 = vmatmul.mubr.f32.gmra.mrb[0].mxu0 %v2085
        %v2438 = vpop.f32.mrb[0].mxu0
        %v2439 = vadd.f32 0.0, %v2438
        %v2440 = vpop.f32.mrb[0].mxu0
        %v2441 = vadd.f32 0.0, %v2440
        %2442 = vdwg.mxu0
        %2443 = vmatprep.subr.mxu0 %v337
        %2444 = vmatpush1.msra.mxu0 %v336
        %2445 = vmatprep.subr.mxu0 %v339
        %2446 = vmatpush1.msra.mxu0 %v338
        %2447 = vmatprep.subr.mxu0 %v341
        %2448 = vmatpush1.msra.mxu0 %v340
        %2449 = vmatprep.subr.mxu0 %v343
        %2450 = vmatpush1.msra.mxu0 %v342
        %2451 = vmatprep.subr.mxu0 %v345
        %2452 = vmatpush1.msra.mxu0 %v344
        %2453 = vmatprep.subr.mxu0 %v347
        %2454 = vmatpush1.msra.mxu0 %v346
        %2455 = vmatprep.subr.mxu0 %v349
        %2456 = vmatpush1.msra.mxu0 %v348
        %2457 = vmatprep.subr.mxu0 %v351
        %2458 = vmatpush1.msra.mxu0 %v350
        %2459 = vmatprep.subr.mxu0 %v353
        %2460 = vmatpush1.msra.mxu0 %v352
        %2461 = vmatprep.subr.mxu0 %v355
        %2462 = vmatpush1.msra.mxu0 %v354
        %2463 = vmatprep.subr.mxu0 %v357
        %2464 = vmatpush1.msra.mxu0 %v356
        %2465 = vmatprep.subr.mxu0 %v359
        %2466 = vmatpush1.msra.mxu0 %v358
        %2467 = vmatprep.subr.mxu0 %v361
        %2468 = vmatpush1.msra.mxu0 %v360
        %2469 = vmatprep.subr.mxu0 %v363
        %2470 = vmatpush1.msra.mxu0 %v362
        %2471 = vmatprep.subr.mxu0 %v365
        %2472 = vmatpush1.msra.mxu0 %v364
        %2473 = vmatprep.subr.mxu0 %v367
        %2474 = vmatpush1.msra.mxu0 %v366
        %2475 = vmatprep.subr.mxu0 %v369
        %2476 = vmatpush1.msra.mxu0 %v368
        %2477 = vmatprep.subr.mxu0 %v371
        %2478 = vmatpush1.msra.mxu0 %v370
        %2479 = vmatprep.subr.mxu0 %v373
        %2480 = vmatpush1.msra.mxu0 %v372
        %2481 = vmatprep.subr.mxu0 %v375
        %2482 = vmatpush1.msra.mxu0 %v374
        %2483 = vmatprep.subr.mxu0 %v377
        %2484 = vmatpush1.msra.mxu0 %v376
        %2485 = vmatprep.subr.mxu0 %v379
        %2486 = vmatpush1.msra.mxu0 %v378
        %2487 = vmatprep.subr.mxu0 %v381
        %2488 = vmatpush1.msra.mxu0 %v380
        %2489 = vmatprep.subr.mxu0 %v383
        %2490 = vmatpush1.msra.mxu0 %v382
        %2491 = vmatprep.subr.mxu0 %v385
        %2492 = vmatpush1.msra.mxu0 %v384
        %2493 = vmatprep.subr.mxu0 %v387
        %2494 = vmatpush1.msra.mxu0 %v386
        %2495 = vmatprep.subr.mxu0 %v389
        %2496 = vmatpush1.msra.mxu0 %v388
        %2497 = vmatprep.subr.mxu0 %v391
        %2498 = vmatpush1.msra.mxu0 %v390
        %2499 = vmatprep.subr.mxu0 %v393
        %2500 = vmatpush1.msra.mxu0 %v392
        %2501 = vmatprep.subr.mxu0 %v395
        %2502 = vmatpush1.msra.mxu0 %v394
        %2503 = vmatprep.subr.mxu0 %v397
        %2504 = vmatpush1.msra.mxu0 %v396
        %2505 = vmatprep.subr.mxu0 %v399
        %2506 = vmatpush1.msra.mxu0 %v398
        %2507 = vmatprep.mubr.f32.mxu0 %v2094
        %2508 = vmatmul.mubr.f32.gmra.mrb[0].mxu0 %v2092
        %v2509 = vpop.f32.mrb[0].mxu0
        %v2510 = vadd.f32 %v2439, %v2509
        %v2511 = vpop.f32.mrb[0].mxu0
        %v2512 = vadd.f32 %v2441, %v2511
        %2513 = vdwg.mxu0
        %2514 = vmatprep.subr.mxu0 %v401
        %2515 = vmatpush1.msra.mxu0 %v400
        %2516 = vmatprep.subr.mxu0 %v403
        %2517 = vmatpush1.msra.mxu0 %v402
        %2518 = vmatprep.subr.mxu0 %v405
        %2519 = vmatpush1.msra.mxu0 %v404
        %2520 = vmatprep.subr.mxu0 %v407
        %2521 = vmatpush1.msra.mxu0 %v406
        %2522 = vmatprep.subr.mxu0 %v409
        %2523 = vmatpush1.msra.mxu0 %v408
        %2524 = vmatprep.subr.mxu0 %v411
        %2525 = vmatpush1.msra.mxu0 %v410
        %2526 = vmatprep.subr.mxu0 %v413
        %2527 = vmatpush1.msra.mxu0 %v412
        %2528 = vmatprep.subr.mxu0 %v415
        %2529 = vmatpush1.msra.mxu0 %v414
        %2530 = vmatprep.subr.mxu0 %v417
        %2531 = vmatpush1.msra.mxu0 %v416
        %2532 = vmatprep.subr.mxu0 %v419
        %2533 = vmatpush1.msra.mxu0 %v418
        %2534 = vmatprep.subr.mxu0 %v421
        %2535 = vmatpush1.msra.mxu0 %v420
        %2536 = vmatprep.subr.mxu0 %v423
        %2537 = vmatpush1.msra.mxu0 %v422
        %2538 = vmatprep.subr.mxu0 %v425
        %2539 = vmatpush1.msra.mxu0 %v424
        %2540 = vmatprep.subr.mxu0 %v427
        %2541 = vmatpush1.msra.mxu0 %v426
        %2542 = vmatprep.subr.mxu0 %v429
        %2543 = vmatpush1.msra.mxu0 %v428
        %2544 = vmatprep.subr.mxu0 %v431
        %2545 = vmatpush1.msra.mxu0 %v430
        %2546 = vmatprep.subr.mxu0 %v433
        %2547 = vmatpush1.msra.mxu0 %v432
        %2548 = vmatprep.subr.mxu0 %v435
        %2549 = vmatpush1.msra.mxu0 %v434
        %2550 = vmatprep.subr.mxu0 %v437
        %2551 = vmatpush1.msra.mxu0 %v436
        %2552 = vmatprep.subr.mxu0 %v439
        %2553 = vmatpush1.msra.mxu0 %v438
        %2554 = vmatprep.subr.mxu0 %v441
        %2555 = vmatpush1.msra.mxu0 %v440
        %2556 = vmatprep.subr.mxu0 %v443
        %2557 = vmatpush1.msra.mxu0 %v442
        %2558 = vmatprep.subr.mxu0 %v445
        %2559 = vmatpush1.msra.mxu0 %v444
        %2560 = vmatprep.subr.mxu0 %v447
        %2561 = vmatpush1.msra.mxu0 %v446
        %2562 = vmatprep.subr.mxu0 %v449
        %2563 = vmatpush1.msra.mxu0 %v448
        %2564 = vmatprep.subr.mxu0 %v451
        %2565 = vmatpush1.msra.mxu0 %v450
        %2566 = vmatprep.subr.mxu0 %v453
        %2567 = vmatpush1.msra.mxu0 %v452
        %2568 = vmatprep.subr.mxu0 %v455
        %2569 = vmatpush1.msra.mxu0 %v454
        %2570 = vmatprep.subr.mxu0 %v457
        %2571 = vmatpush1.msra.mxu0 %v456
        %2572 = vmatprep.subr.mxu0 %v459
        %2573 = vmatpush1.msra.mxu0 %v458
        %2574 = vmatprep.subr.mxu0 %v461
        %2575 = vmatpush1.msra.mxu0 %v460
        %2576 = vmatprep.subr.mxu0 %v463
        %2577 = vmatpush1.msra.mxu0 %v462
        %2578 = vmatprep.mubr.f32.mxu0 %v2110
        %2579 = vmatmul.mubr.f32.gmra.mrb[0].mxu0 %v2102
        %v2580 = vpop.f32.mrb[0].mxu0
        %v2581 = vadd.f32 %v2510, %v2580
        %v2582 = vpop.f32.mrb[0].mxu0
        %v2583 = vadd.f32 %v2512, %v2582
        %2584 = vdwg.mxu0
        %2585 = vmatprep.subr.mxu0 %v465
        %2586 = vmatpush1.msra.mxu0 %v464
        %2587 = vmatprep.subr.mxu0 %v467
        %2588 = vmatpush1.msra.mxu0 %v466
        %2589 = vmatprep.subr.mxu0 %v469
        %2590 = vmatpush1.msra.mxu0 %v468
        %2591 = vmatprep.subr.mxu0 %v471
        %2592 = vmatpush1.msra.mxu0 %v470
        %2593 = vmatprep.subr.mxu0 %v473
        %2594 = vmatpush1.msra.mxu0 %v472
        %2595 = vmatprep.subr.mxu0 %v475
        %2596 = vmatpush1.msra.mxu0 %v474
        %2597 = vmatprep.subr.mxu0 %v477
        %2598 = vmatpush1.msra.mxu0 %v476
        %2599 = vmatprep.subr.mxu0 %v479
        %2600 = vmatpush1.msra.mxu0 %v478
        %2601 = vmatprep.subr.mxu0 %v481
        %2602 = vmatpush1.msra.mxu0 %v480
        %2603 = vmatprep.subr.mxu0 %v483
        %2604 = vmatpush1.msra.mxu0 %v482
        %2605 = vmatprep.subr.mxu0 %v485
        %2606 = vmatpush1.msra.mxu0 %v484
        %2607 = vmatprep.subr.mxu0 %v487
        %2608 = vmatpush1.msra.mxu0 %v486
        %2609 = vmatprep.subr.mxu0 %v489
        %2610 = vmatpush1.msra.mxu0 %v488
        %2611 = vmatprep.subr.mxu0 %v491
        %2612 = vmatpush1.msra.mxu0 %v490
        %2613 = vmatprep.subr.mxu0 %v493
        %2614 = vmatpush1.msra.mxu0 %v492
        %2615 = vmatprep.subr.mxu0 %v495
        %2616 = vmatpush1.msra.mxu0 %v494
        %2617 = vmatprep.subr.mxu0 %v497
        %2618 = vmatpush1.msra.mxu0 %v496
        %2619 = vmatprep.subr.mxu0 %v499
        %2620 = vmatpush1.msra.mxu0 %v498
        %2621 = vmatprep.subr.mxu0 %v501
        %2622 = vmatpush1.msra.mxu0 %v500
        %2623 = vmatprep.subr.mxu0 %v503
        %2624 = vmatpush1.msra.mxu0 %v502
        %2625 = vmatprep.subr.mxu0 %v505
        %2626 = vmatpush1.msra.mxu0 %v504
        %2627 = vmatprep.subr.mxu0 %v507
        %2628 = vmatpush1.msra.mxu0 %v506
        %2629 = vmatprep.subr.mxu0 %v509
        %2630 = vmatpush1.msra.mxu0 %v508
        %2631 = vmatprep.subr.mxu0 %v511
        %2632 = vmatpush1.msra.mxu0 %v510
        %2633 = vmatprep.subr.mxu0 %v513
        %2634 = vmatpush1.msra.mxu0 %v512
        %2635 = vmatprep.subr.mxu0 %v515
        %2636 = vmatpush1.msra.mxu0 %v514
        %2637 = vmatprep.subr.mxu0 %v517
        %2638 = vmatpush1.msra.mxu0 %v516
        %2639 = vmatprep.subr.mxu0 %v519
        %2640 = vmatpush1.msra.mxu0 %v518
        %2641 = vmatprep.subr.mxu0 %v521
        %2642 = vmatpush1.msra.mxu0 %v520
        %2643 = vmatprep.subr.mxu0 %v523
        %2644 = vmatpush1.msra.mxu0 %v522
        %2645 = vmatprep.subr.mxu0 %v525
        %2646 = vmatpush1.msra.mxu0 %v524
        %2647 = vmatprep.subr.mxu0 %v527
        %2648 = vmatpush1.msra.mxu0 %v526
        %2649 = vmatprep.mubr.f32.mxu0 %v2111
        %2650 = vmatmul.mubr.f32.gmra.mrb[0].mxu0 %v2109
        %v2651 = vpop.f32.mrb[0].mxu0
        %v2652 = vadd.f32 %v2581, %v2651
        %v2653 = vpop.f32.mrb[0].mxu0
        %v2654 = vadd.f32 %v2583, %v2653
        %2655 = vdwg.mxu0
        %2656 = vmatprep.subr.mxu0 %v529
        %2657 = vmatpush1.msra.mxu0 %v528
        %2658 = vmatprep.subr.mxu0 %v531
        %2659 = vmatpush1.msra.mxu0 %v530
        %2660 = vmatprep.subr.mxu0 %v533
        %2661 = vmatpush1.msra.mxu0 %v532
        %2662 = vmatprep.subr.mxu0 %v535
        %2663 = vmatpush1.msra.mxu0 %v534
        %2664 = vmatprep.subr.mxu0 %v537
        %2665 = vmatpush1.msra.mxu0 %v536
        %2666 = vmatprep.subr.mxu0 %v539
        %2667 = vmatpush1.msra.mxu0 %v538
        %2668 = vmatprep.subr.mxu0 %v541
        %2669 = vmatpush1.msra.mxu0 %v540
        %2670 = vmatprep.subr.mxu0 %v543
        %2671 = vmatpush1.msra.mxu0 %v542
        %2672 = vmatprep.subr.mxu0 %v545
        %2673 = vmatpush1.msra.mxu0 %v544
        %2674 = vmatprep.subr.mxu0 %v547
        %2675 = vmatpush1.msra.mxu0 %v546
        %2676 = vmatprep.subr.mxu0 %v549
        %2677 = vmatpush1.msra.mxu0 %v548
        %2678 = vmatprep.subr.mxu0 %v551
        %2679 = vmatpush1.msra.mxu0 %v550
        %2680 = vmatprep.subr.mxu0 %v553
        %2681 = vmatpush1.msra.mxu0 %v552
        %2682 = vmatprep.subr.mxu0 %v555
        %2683 = vmatpush1.msra.mxu0 %v554
        %2684 = vmatprep.subr.mxu0 %v557
        %2685 = vmatpush1.msra.mxu0 %v556
        %2686 = vmatprep.subr.mxu0 %v559
        %2687 = vmatpush1.msra.mxu0 %v558
        %2688 = vmatprep.subr.mxu0 %v561
        %2689 = vmatpush1.msra.mxu0 %v560
        %2690 = vmatprep.subr.mxu0 %v563
        %2691 = vmatpush1.msra.mxu0 %v562
        %2692 = vmatprep.subr.mxu0 %v565
        %2693 = vmatpush1.msra.mxu0 %v564
        %2694 = vmatprep.subr.mxu0 %v567
        %2695 = vmatpush1.msra.mxu0 %v566
        %2696 = vmatprep.subr.mxu0 %v569
        %2697 = vmatpush1.msra.mxu0 %v568
        %2698 = vmatprep.subr.mxu0 %v571
        %2699 = vmatpush1.msra.mxu0 %v570
        %2700 = vmatprep.subr.mxu0 %v573
        %2701 = vmatpush1.msra.mxu0 %v572
        %2702 = vmatprep.subr.mxu0 %v575
        %2703 = vmatpush1.msra.mxu0 %v574
        %2704 = vmatprep.subr.mxu0 %v577
        %2705 = vmatpush1.msra.mxu0 %v576
        %2706 = vmatprep.subr.mxu0 %v579
        %2707 = vmatpush1.msra.mxu0 %v578
        %2708 = vmatprep.subr.mxu0 %v581
        %2709 = vmatpush1.msra.mxu0 %v580
        %2710 = vmatprep.subr.mxu0 %v583
        %2711 = vmatpush1.msra.mxu0 %v582
        %2712 = vmatprep.subr.mxu0 %v585
        %2713 = vmatpush1.msra.mxu0 %v584
        %2714 = vmatprep.subr.mxu0 %v587
        %2715 = vmatpush1.msra.mxu0 %v586
        %2716 = vmatprep.subr.mxu0 %v589
        %2717 = vmatpush1.msra.mxu0 %v588
        %2718 = vmatprep.subr.mxu0 %v591
        %2719 = vmatpush1.msra.mxu0 %v590
        %2720 = vmatprep.mubr.f32.mxu0 %v2127
        %2721 = vmatmul.mubr.f32.gmra.mrb[0].mxu0 %v2119
        %v2722 = vpop.f32.mrb[0].mxu0
        %v2723 = vadd.f32 %v2652, %v2722
        %v2724 = vpop.f32.mrb[0].mxu0
        %v2725 = vadd.f32 %v2654, %v2724
        %2726 = vdwg.mxu0
        %2727 = vmatprep.subr.mxu0 %v593
        %2728 = vmatpush1.msra.mxu0 %v592
        %2729 = vmatprep.subr.mxu0 %v595
        %2730 = vmatpush1.msra.mxu0 %v594
        %2731 = vmatprep.subr.mxu0 %v597
        %2732 = vmatpush1.msra.mxu0 %v596
        %2733 = vmatprep.subr.mxu0 %v599
        %2734 = vmatpush1.msra.mxu0 %v598
        %2735 = vmatprep.subr.mxu0 %v601
        %2736 = vmatpush1.msra.mxu0 %v600
        %2737 = vmatprep.subr.mxu0 %v603
        %2738 = vmatpush1.msra.mxu0 %v602
        %2739 = vmatprep.subr.mxu0 %v605
        %2740 = vmatpush1.msra.mxu0 %v604
        %2741 = vmatprep.subr.mxu0 %v607
        %2742 = vmatpush1.msra.mxu0 %v606
        %2743 = vmatprep.subr.mxu0 %v609
        %2744 = vmatpush1.msra.mxu0 %v608
        %2745 = vmatprep.subr.mxu0 %v611
        %2746 = vmatpush1.msra.mxu0 %v610
        %2747 = vmatprep.subr.mxu0 %v613
        %2748 = vmatpush1.msra.mxu0 %v612
        %2749 = vmatprep.subr.mxu0 %v615
        %2750 = vmatpush1.msra.mxu0 %v614
        %2751 = vmatprep.subr.mxu0 %v617
        %2752 = vmatpush1.msra.mxu0 %v616
        %2753 = vmatprep.subr.mxu0 %v619
        %2754 = vmatpush1.msra.mxu0 %v618
        %2755 = vmatprep.subr.mxu0 %v621
        %2756 = vmatpush1.msra.mxu0 %v620
        %2757 = vmatprep.subr.mxu0 %v623
        %2758 = vmatpush1.msra.mxu0 %v622
        %2759 = vmatprep.subr.mxu0 %v625
        %2760 = vmatpush1.msra.mxu0 %v624
        %2761 = vmatprep.subr.mxu0 %v627
        %2762 = vmatpush1.msra.mxu0 %v626
        %2763 = vmatprep.subr.mxu0 %v629
        %2764 = vmatpush1.msra.mxu0 %v628
        %2765 = vmatprep.subr.mxu0 %v631
        %2766 = vmatpush1.msra.mxu0 %v630
        %2767 = vmatprep.subr.mxu0 %v633
        %2768 = vmatpush1.msra.mxu0 %v632
        %2769 = vmatprep.subr.mxu0 %v635
        %2770 = vmatpush1.msra.mxu0 %v634
        %2771 = vmatprep.subr.mxu0 %v637
        %2772 = vmatpush1.msra.mxu0 %v636
        %2773 = vmatprep.subr.mxu0 %v639
        %2774 = vmatpush1.msra.mxu0 %v638
        %2775 = vmatprep.subr.mxu0 %v641
        %2776 = vmatpush1.msra.mxu0 %v640
        %2777 = vmatprep.subr.mxu0 %v643
        %2778 = vmatpush1.msra.mxu0 %v642
        %2779 = vmatprep.subr.mxu0 %v645
        %2780 = vmatpush1.msra.mxu0 %v644
        %2781 = vmatprep.subr.mxu0 %v647
        %2782 = vmatpush1.msra.mxu0 %v646
        %2783 = vmatprep.subr.mxu0 %v649
        %2784 = vmatpush1.msra.mxu0 %v648
        %2785 = vmatprep.subr.mxu0 %v651
        %2786 = vmatpush1.msra.mxu0 %v650
        %2787 = vmatprep.subr.mxu0 %v653
        %2788 = vmatpush1.msra.mxu0 %v652
        %2789 = vmatprep.subr.mxu0 %v655
        %2790 = vmatpush1.msra.mxu0 %v654
        %2791 = vmatprep.mubr.f32.mxu0 %v2128
        %2792 = vmatmul.mubr.f32.gmra.mrb[0].mxu0 %v2126
        %v2793 = vpop.f32.mrb[0].mxu0
        %v2794 = vadd.f32 %v2723, %v2793
        %v2795 = vpop.f32.mrb[0].mxu0
        %v2796 = vadd.f32 %v2725, %v2795
        %2797 = vdwg.mxu0
        %2798 = vmatprep.subr.mxu0 %v657
        %2799 = vmatpush1.msra.mxu0 %v656
        %2800 = vmatprep.subr.mxu0 %v659
        %2801 = vmatpush1.msra.mxu0 %v658
        %2802 = vmatprep.subr.mxu0 %v661
        %2803 = vmatpush1.msra.mxu0 %v660
        %2804 = vmatprep.subr.mxu0 %v663
        %2805 = vmatpush1.msra.mxu0 %v662
        %2806 = vmatprep.subr.mxu0 %v665
        %2807 = vmatpush1.msra.mxu0 %v664
        %2808 = vmatprep.subr.mxu0 %v667
        %2809 = vmatpush1.msra.mxu0 %v666
        %2810 = vmatprep.subr.mxu0 %v669
        %2811 = vmatpush1.msra.mxu0 %v668
        %2812 = vmatprep.subr.mxu0 %v671
        %2813 = vmatpush1.msra.mxu0 %v670
        %2814 = vmatprep.subr.mxu0 %v673
        %2815 = vmatpush1.msra.mxu0 %v672
        %2816 = vmatprep.subr.mxu0 %v675
        %2817 = vmatpush1.msra.mxu0 %v674
        %2818 = vmatprep.subr.mxu0 %v677
        %2819 = vmatpush1.msra.mxu0 %v676
        %2820 = vmatprep.subr.mxu0 %v679
        %2821 = vmatpush1.msra.mxu0 %v678
        %2822 = vmatprep.subr.mxu0 %v681
        %2823 = vmatpush1.msra.mxu0 %v680
        %2824 = vmatprep.subr.mxu0 %v683
        %2825 = vmatpush1.msra.mxu0 %v682
        %2826 = vmatprep.subr.mxu0 %v685
        %2827 = vmatpush1.msra.mxu0 %v684
        %2828 = vmatprep.subr.mxu0 %v687
        %2829 = vmatpush1.msra.mxu0 %v686
        %2830 = vmatprep.subr.mxu0 %v689
        %2831 = vmatpush1.msra.mxu0 %v688
        %2832 = vmatprep.subr.mxu0 %v691
        %2833 = vmatpush1.msra.mxu0 %v690
        %2834 = vmatprep.subr.mxu0 %v693
        %2835 = vmatpush1.msra.mxu0 %v692
        %2836 = vmatprep.subr.mxu0 %v695
        %2837 = vmatpush1.msra.mxu0 %v694
        %2838 = vmatprep.subr.mxu0 %v697
        %2839 = vmatpush1.msra.mxu0 %v696
        %2840 = vmatprep.subr.mxu0 %v699
        %2841 = vmatpush1.msra.mxu0 %v698
        %2842 = vmatprep.subr.mxu0 %v701
        %2843 = vmatpush1.msra.mxu0 %v700
        %2844 = vmatprep.subr.mxu0 %v703
        %2845 = vmatpush1.msra.mxu0 %v702
        %2846 = vmatprep.subr.mxu0 %v705
        %2847 = vmatpush1.msra.mxu0 %v704
        %2848 = vmatprep.subr.mxu0 %v707
        %2849 = vmatpush1.msra.mxu0 %v706
        %2850 = vmatprep.subr.mxu0 %v709
        %2851 = vmatpush1.msra.mxu0 %v708
        %2852 = vmatprep.subr.mxu0 %v711
        %2853 = vmatpush1.msra.mxu0 %v710
        %2854 = vmatprep.subr.mxu0 %v713
        %2855 = vmatpush1.msra.mxu0 %v712
        %2856 = vmatprep.subr.mxu0 %v715
        %2857 = vmatpush1.msra.mxu0 %v714
        %2858 = vmatprep.subr.mxu0 %v717
        %2859 = vmatpush1.msra.mxu0 %v716
        %2860 = vmatprep.subr.mxu0 %v719
        %2861 = vmatpush1.msra.mxu0 %v718
        %2862 = vmatprep.mubr.f32.mxu0 %v2144
        %2863 = vmatmul.mubr.f32.gmra.mrb[0].mxu0 %v2136
        %v2864 = vpop.f32.mrb[0].mxu0
        %v2865 = vadd.f32 %v2794, %v2864
        %v2866 = vpop.f32.mrb[0].mxu0
        %v2867 = vadd.f32 %v2796, %v2866
        %2868 = vdwg.mxu0
        %2869 = vmatprep.subr.mxu0 %v721
        %2870 = vmatpush1.msra.mxu0 %v720
        %2871 = vmatprep.subr.mxu0 %v723
        %2872 = vmatpush1.msra.mxu0 %v722
        %2873 = vmatprep.subr.mxu0 %v725
        %2874 = vmatpush1.msra.mxu0 %v724
        %2875 = vmatprep.subr.mxu0 %v727
        %2876 = vmatpush1.msra.mxu0 %v726
        %2877 = vmatprep.subr.mxu0 %v729
        %2878 = vmatpush1.msra.mxu0 %v728
        %2879 = vmatprep.subr.mxu0 %v731
        %2880 = vmatpush1.msra.mxu0 %v730
        %2881 = vmatprep.subr.mxu0 %v733
        %2882 = vmatpush1.msra.mxu0 %v732
        %2883 = vmatprep.subr.mxu0 %v735
        %2884 = vmatpush1.msra.mxu0 %v734
        %2885 = vmatprep.subr.mxu0 %v737
        %2886 = vmatpush1.msra.mxu0 %v736
        %2887 = vmatprep.subr.mxu0 %v739
        %2888 = vmatpush1.msra.mxu0 %v738
        %2889 = vmatprep.subr.mxu0 %v741
        %2890 = vmatpush1.msra.mxu0 %v740
        %2891 = vmatprep.subr.mxu0 %v743
        %2892 = vmatpush1.msra.mxu0 %v742
        %2893 = vmatprep.subr.mxu0 %v745
        %2894 = vmatpush1.msra.mxu0 %v744
        %2895 = vmatprep.subr.mxu0 %v747
        %2896 = vmatpush1.msra.mxu0 %v746
        %2897 = vmatprep.subr.mxu0 %v749
        %2898 = vmatpush1.msra.mxu0 %v748
        %2899 = vmatprep.subr.mxu0 %v751
        %2900 = vmatpush1.msra.mxu0 %v750
        %2901 = vmatprep.subr.mxu0 %v753
        %2902 = vmatpush1.msra.mxu0 %v752
        %2903 = vmatprep.subr.mxu0 %v755
        %2904 = vmatpush1.msra.mxu0 %v754
        %2905 = vmatprep.subr.mxu0 %v757
        %2906 = vmatpush1.msra.mxu0 %v756
        %2907 = vmatprep.subr.mxu0 %v759
        %2908 = vmatpush1.msra.mxu0 %v758
        %2909 = vmatprep.subr.mxu0 %v761
        %2910 = vmatpush1.msra.mxu0 %v760
        %2911 = vmatprep.subr.mxu0 %v763
        %2912 = vmatpush1.msra.mxu0 %v762
        %2913 = vmatprep.subr.mxu0 %v765
        %2914 = vmatpush1.msra.mxu0 %v764
        %2915 = vmatprep.subr.mxu0 %v767
        %2916 = vmatpush1.msra.mxu0 %v766
        %2917 = vmatprep.subr.mxu0 %v769
        %2918 = vmatpush1.msra.mxu0 %v768
        %2919 = vmatprep.subr.mxu0 %v771
        %2920 = vmatpush1.msra.mxu0 %v770
        %2921 = vmatprep.subr.mxu0 %v773
        %2922 = vmatpush1.msra.mxu0 %v772
        %2923 = vmatprep.subr.mxu0 %v775
        %2924 = vmatpush1.msra.mxu0 %v774
        %2925 = vmatprep.subr.mxu0 %v777
        %2926 = vmatpush1.msra.mxu0 %v776
        %2927 = vmatprep.subr.mxu0 %v779
        %2928 = vmatpush1.msra.mxu0 %v778
        %2929 = vmatprep.subr.mxu0 %v781
        %2930 = vmatpush1.msra.mxu0 %v780
        %2931 = vmatprep.subr.mxu0 %v783
        %2932 = vmatpush1.msra.mxu0 %v782
        %2933 = vmatprep.mubr.f32.mxu0 %v2145
        %2934 = vmatmul.mubr.f32.gmra.mrb[0].mxu0 %v2143
        %v2935 = vpop.f32.mrb[0].mxu0
        %v2936 = vadd.f32 %v2865, %v2935
        %v2937 = vpop.f32.mrb[0].mxu0
        %v2938 = vadd.f32 %v2867, %v2937
        %2939 = vdwg.mxu0
        %2940 = vmatprep.subr.mxu0 %v785
        %2941 = vmatpush1.msra.mxu0 %v784
        %2942 = vmatprep.subr.mxu0 %v787
        %2943 = vmatpush1.msra.mxu0 %v786
        %2944 = vmatprep.subr.mxu0 %v789
        %2945 = vmatpush1.msra.mxu0 %v788
        %2946 = vmatprep.subr.mxu0 %v791
        %2947 = vmatpush1.msra.mxu0 %v790
        %2948 = vmatprep.subr.mxu0 %v793
        %2949 = vmatpush1.msra.mxu0 %v792
        %2950 = vmatprep.subr.mxu0 %v795
        %2951 = vmatpush1.msra.mxu0 %v794
        %2952 = vmatprep.subr.mxu0 %v797
        %2953 = vmatpush1.msra.mxu0 %v796
        %2954 = vmatprep.subr.mxu0 %v799
        %2955 = vmatpush1.msra.mxu0 %v798
        %2956 = vmatprep.subr.mxu0 %v801
        %2957 = vmatpush1.msra.mxu0 %v800
        %2958 = vmatprep.subr.mxu0 %v803
        %2959 = vmatpush1.msra.mxu0 %v802
        %2960 = vmatprep.subr.mxu0 %v805
        %2961 = vmatpush1.msra.mxu0 %v804
        %2962 = vmatprep.subr.mxu0 %v807
        %2963 = vmatpush1.msra.mxu0 %v806
        %2964 = vmatprep.subr.mxu0 %v809
        %2965 = vmatpush1.msra.mxu0 %v808
        %2966 = vmatprep.subr.mxu0 %v811
        %2967 = vmatpush1.msra.mxu0 %v810
        %2968 = vmatprep.subr.mxu0 %v813
        %2969 = vmatpush1.msra.mxu0 %v812
        %2970 = vmatprep.subr.mxu0 %v815
        %2971 = vmatpush1.msra.mxu0 %v814
        %2972 = vmatprep.subr.mxu0 %v817
        %2973 = vmatpush1.msra.mxu0 %v816
        %2974 = vmatprep.subr.mxu0 %v819
        %2975 = vmatpush1.msra.mxu0 %v818
        %2976 = vmatprep.subr.mxu0 %v821
        %2977 = vmatpush1.msra.mxu0 %v820
        %2978 = vmatprep.subr.mxu0 %v823
        %2979 = vmatpush1.msra.mxu0 %v822
        %2980 = vmatprep.subr.mxu0 %v825
        %2981 = vmatpush1.msra.mxu0 %v824
        %2982 = vmatprep.subr.mxu0 %v827
        %2983 = vmatpush1.msra.mxu0 %v826
        %2984 = vmatprep.subr.mxu0 %v829
        %2985 = vmatpush1.msra.mxu0 %v828
        %2986 = vmatprep.subr.mxu0 %v831
        %2987 = vmatpush1.msra.mxu0 %v830
        %2988 = vmatprep.subr.mxu0 %v833
        %2989 = vmatpush1.msra.mxu0 %v832
        %2990 = vmatprep.subr.mxu0 %v835
        %2991 = vmatpush1.msra.mxu0 %v834
        %2992 = vmatprep.subr.mxu0 %v837
        %2993 = vmatpush1.msra.mxu0 %v836
        %2994 = vmatprep.subr.mxu0 %v839
        %2995 = vmatpush1.msra.mxu0 %v838
        %2996 = vmatprep.subr.mxu0 %v841
        %2997 = vmatpush1.msra.mxu0 %v840
        %2998 = vmatprep.subr.mxu0 %v843
        %2999 = vmatpush1.msra.mxu0 %v842
        %3000 = vmatprep.subr.mxu0 %v845
        %3001 = vmatpush1.msra.mxu0 %v844
        %3002 = vmatprep.subr.mxu0 %v847
        %3003 = vmatpush1.msra.mxu0 %v846
        %3004 = vmatprep.mubr.f32.mxu0 %v2161
        %3005 = vmatmul.mubr.f32.gmra.mrb[0].mxu0 %v2153
        %v3006 = vpop.f32.mrb[0].mxu0
        %v3007 = vadd.f32 %v2936, %v3006
        %v3008 = vpop.f32.mrb[0].mxu0
        %v3009 = vadd.f32 %v2938, %v3008
        %3010 = vdwg.mxu0
        %3011 = vmatprep.subr.mxu0 %v849
        %3012 = vmatpush1.msra.mxu0 %v848
        %3013 = vmatprep.subr.mxu0 %v851
        %3014 = vmatpush1.msra.mxu0 %v850
        %3015 = vmatprep.subr.mxu0 %v853
        %3016 = vmatpush1.msra.mxu0 %v852
        %3017 = vmatprep.subr.mxu0 %v855
        %3018 = vmatpush1.msra.mxu0 %v854
        %3019 = vmatprep.subr.mxu0 %v857
        %3020 = vmatpush1.msra.mxu0 %v856
        %3021 = vmatprep.subr.mxu0 %v859
        %3022 = vmatpush1.msra.mxu0 %v858
        %3023 = vmatprep.subr.mxu0 %v861
        %3024 = vmatpush1.msra.mxu0 %v860
        %3025 = vmatprep.subr.mxu0 %v863
        %3026 = vmatpush1.msra.mxu0 %v862
        %3027 = vmatprep.subr.mxu0 %v865
        %3028 = vmatpush1.msra.mxu0 %v864
        %3029 = vmatprep.subr.mxu0 %v867
        %3030 = vmatpush1.msra.mxu0 %v866
        %3031 = vmatprep.subr.mxu0 %v869
        %3032 = vmatpush1.msra.mxu0 %v868
        %3033 = vmatprep.subr.mxu0 %v871
        %3034 = vmatpush1.msra.mxu0 %v870
        %3035 = vmatprep.subr.mxu0 %v873
        %3036 = vmatpush1.msra.mxu0 %v872
        %3037 = vmatprep.subr.mxu0 %v875
        %3038 = vmatpush1.msra.mxu0 %v874
        %3039 = vmatprep.subr.mxu0 %v877
        %3040 = vmatpush1.msra.mxu0 %v876
        %3041 = vmatprep.subr.mxu0 %v879
        %3042 = vmatpush1.msra.mxu0 %v878
        %3043 = vmatprep.subr.mxu0 %v881
        %3044 = vmatpush1.msra.mxu0 %v880
        %3045 = vmatprep.subr.mxu0 %v883
        %3046 = vmatpush1.msra.mxu0 %v882
        %3047 = vmatprep.subr.mxu0 %v885
        %3048 = vmatpush1.msra.mxu0 %v884
        %3049 = vmatprep.subr.mxu0 %v887
        %3050 = vmatpush1.msra.mxu0 %v886
        %3051 = vmatprep.subr.mxu0 %v889
        %3052 = vmatpush1.msra.mxu0 %v888
        %3053 = vmatprep.subr.mxu0 %v891
        %3054 = vmatpush1.msra.mxu0 %v890
        %3055 = vmatprep.subr.mxu0 %v893
        %3056 = vmatpush1.msra.mxu0 %v892
        %3057 = vmatprep.subr.mxu0 %v895
        %3058 = vmatpush1.msra.mxu0 %v894
        %3059 = vmatprep.subr.mxu0 %v897
        %3060 = vmatpush1.msra.mxu0 %v896
        %3061 = vmatprep.subr.mxu0 %v899
        %3062 = vmatpush1.msra.mxu0 %v898
        %3063 = vmatprep.subr.mxu0 %v901
        %3064 = vmatpush1.msra.mxu0 %v900
        %3065 = vmatprep.subr.mxu0 %v903
        %3066 = vmatpush1.msra.mxu0 %v902
        %3067 = vmatprep.subr.mxu0 %v905
        %3068 = vmatpush1.msra.mxu0 %v904
        %3069 = vmatprep.subr.mxu0 %v907
        %3070 = vmatpush1.msra.mxu0 %v906
        %3071 = vmatprep.subr.mxu0 %v909
        %3072 = vmatpush1.msra.mxu0 %v908
        %3073 = vmatprep.subr.mxu0 %v911
        %3074 = vmatpush1.msra.mxu0 %v910
        %3075 = vmatprep.mubr.f32.mxu0 %v2162
        %3076 = vmatmul.mubr.f32.gmra.mrb[0].mxu0 %v2160
        %v3077 = vpop.f32.mrb[0].mxu0
        %v3078 = vadd.f32 %v3007, %v3077
        %v3079 = vpop.f32.mrb[0].mxu0
        %v3080 = vadd.f32 %v3009, %v3079
        %3081 = vdwg.mxu0
        %3082 = vmatprep.subr.mxu0 %v913
        %3083 = vmatpush1.msra.mxu0 %v912
        %3084 = vmatprep.subr.mxu0 %v915
        %3085 = vmatpush1.msra.mxu0 %v914
        %3086 = vmatprep.subr.mxu0 %v917
        %3087 = vmatpush1.msra.mxu0 %v916
        %3088 = vmatprep.subr.mxu0 %v919
        %3089 = vmatpush1.msra.mxu0 %v918
        %3090 = vmatprep.subr.mxu0 %v921
        %3091 = vmatpush1.msra.mxu0 %v920
        %3092 = vmatprep.subr.mxu0 %v923
        %3093 = vmatpush1.msra.mxu0 %v922
        %3094 = vmatprep.subr.mxu0 %v925
        %3095 = vmatpush1.msra.mxu0 %v924
        %3096 = vmatprep.subr.mxu0 %v927
        %3097 = vmatpush1.msra.mxu0 %v926
        %3098 = vmatprep.subr.mxu0 %v929
        %3099 = vmatpush1.msra.mxu0 %v928
        %3100 = vmatprep.subr.mxu0 %v931
        %3101 = vmatpush1.msra.mxu0 %v930
        %3102 = vmatprep.subr.mxu0 %v933
        %3103 = vmatpush1.msra.mxu0 %v932
        %3104 = vmatprep.subr.mxu0 %v935
        %3105 = vmatpush1.msra.mxu0 %v934
        %3106 = vmatprep.subr.mxu0 %v937
        %3107 = vmatpush1.msra.mxu0 %v936
        %3108 = vmatprep.subr.mxu0 %v939
        %3109 = vmatpush1.msra.mxu0 %v938
        %3110 = vmatprep.subr.mxu0 %v941
        %3111 = vmatpush1.msra.mxu0 %v940
        %3112 = vmatprep.subr.mxu0 %v943
        %3113 = vmatpush1.msra.mxu0 %v942
        %3114 = vmatprep.subr.mxu0 %v945
        %3115 = vmatpush1.msra.mxu0 %v944
        %3116 = vmatprep.subr.mxu0 %v947
        %3117 = vmatpush1.msra.mxu0 %v946
        %3118 = vmatprep.subr.mxu0 %v949
        %3119 = vmatpush1.msra.mxu0 %v948
        %3120 = vmatprep.subr.mxu0 %v951
        %3121 = vmatpush1.msra.mxu0 %v950
        %3122 = vmatprep.subr.mxu0 %v953
        %3123 = vmatpush1.msra.mxu0 %v952
        %3124 = vmatprep.subr.mxu0 %v955
        %3125 = vmatpush1.msra.mxu0 %v954
        %3126 = vmatprep.subr.mxu0 %v957
        %3127 = vmatpush1.msra.mxu0 %v956
        %3128 = vmatprep.subr.mxu0 %v959
        %3129 = vmatpush1.msra.mxu0 %v958
        %3130 = vmatprep.subr.mxu0 %v961
        %3131 = vmatpush1.msra.mxu0 %v960
        %3132 = vmatprep.subr.mxu0 %v963
        %3133 = vmatpush1.msra.mxu0 %v962
        %3134 = vmatprep.subr.mxu0 %v965
        %3135 = vmatpush1.msra.mxu0 %v964
        %3136 = vmatprep.subr.mxu0 %v967
        %3137 = vmatpush1.msra.mxu0 %v966
        %3138 = vmatprep.subr.mxu0 %v969
        %3139 = vmatpush1.msra.mxu0 %v968
        %3140 = vmatprep.subr.mxu0 %v971
        %3141 = vmatpush1.msra.mxu0 %v970
        %3142 = vmatprep.subr.mxu0 %v973
        %3143 = vmatpush1.msra.mxu0 %v972
        %3144 = vmatprep.subr.mxu0 %v975
        %3145 = vmatpush1.msra.mxu0 %v974
        %3146 = vmatprep.mubr.f32.mxu0 %v2178
        %3147 = vmatmul.mubr.f32.gmra.mrb[0].mxu0 %v2170
        %v3148 = vpop.f32.mrb[0].mxu0
        %v3149 = vadd.f32 %v3078, %v3148
        %v3150 = vpop.f32.mrb[0].mxu0
        %v3151 = vadd.f32 %v3080, %v3150
        %3152 = vdwg.mxu0
        %3153 = vmatprep.subr.mxu0 %v977
        %3154 = vmatpush1.msra.mxu0 %v976
        %3155 = vmatprep.subr.mxu0 %v979
        %3156 = vmatpush1.msra.mxu0 %v978
        %3157 = vmatprep.subr.mxu0 %v981
        %3158 = vmatpush1.msra.mxu0 %v980
        %3159 = vmatprep.subr.mxu0 %v983
        %3160 = vmatpush1.msra.mxu0 %v982
        %3161 = vmatprep.subr.mxu0 %v985
        %3162 = vmatpush1.msra.mxu0 %v984
        %3163 = vmatprep.subr.mxu0 %v987
        %3164 = vmatpush1.msra.mxu0 %v986
        %3165 = vmatprep.subr.mxu0 %v989
        %3166 = vmatpush1.msra.mxu0 %v988
        %3167 = vmatprep.subr.mxu0 %v991
        %3168 = vmatpush1.msra.mxu0 %v990
        %3169 = vmatprep.subr.mxu0 %v993
        %3170 = vmatpush1.msra.mxu0 %v992
        %3171 = vmatprep.subr.mxu0 %v995
        %3172 = vmatpush1.msra.mxu0 %v994
        %3173 = vmatprep.subr.mxu0 %v997
        %3174 = vmatpush1.msra.mxu0 %v996
        %3175 = vmatprep.subr.mxu0 %v999
        %3176 = vmatpush1.msra.mxu0 %v998
        %3177 = vmatprep.subr.mxu0 %v1001
        %3178 = vmatpush1.msra.mxu0 %v1000
        %3179 = vmatprep.subr.mxu0 %v1003
        %3180 = vmatpush1.msra.mxu0 %v1002
        %3181 = vmatprep.subr.mxu0 %v1005
        %3182 = vmatpush1.msra.mxu0 %v1004
        %3183 = vmatprep.subr.mxu0 %v1007
        %3184 = vmatpush1.msra.mxu0 %v1006
        %3185 = vmatprep.subr.mxu0 %v1009
        %3186 = vmatpush1.msra.mxu0 %v1008
        %3187 = vmatprep.subr.mxu0 %v1011
        %3188 = vmatpush1.msra.mxu0 %v1010
        %3189 = vmatprep.subr.mxu0 %v1013
        %3190 = vmatpush1.msra.mxu0 %v1012
        %3191 = vmatprep.subr.mxu0 %v1015
        %3192 = vmatpush1.msra.mxu0 %v1014
        %3193 = vmatprep.subr.mxu0 %v1017
        %3194 = vmatpush1.msra.mxu0 %v1016
        %3195 = vmatprep.subr.mxu0 %v1019
        %3196 = vmatpush1.msra.mxu0 %v1018
        %3197 = vmatprep.subr.mxu0 %v1021
        %3198 = vmatpush1.msra.mxu0 %v1020
        %3199 = vmatprep.subr.mxu0 %v1023
        %3200 = vmatpush1.msra.mxu0 %v1022
        %3201 = vmatprep.subr.mxu0 %v1025
        %3202 = vmatpush1.msra.mxu0 %v1024
        %3203 = vmatprep.subr.mxu0 %v1027
        %3204 = vmatpush1.msra.mxu0 %v1026
        %3205 = vmatprep.subr.mxu0 %v1029
        %3206 = vmatpush1.msra.mxu0 %v1028
        %3207 = vmatprep.subr.mxu0 %v1031
        %3208 = vmatpush1.msra.mxu0 %v1030
        %3209 = vmatprep.subr.mxu0 %v1033
        %3210 = vmatpush1.msra.mxu0 %v1032
        %3211 = vmatprep.subr.mxu0 %v1035
        %3212 = vmatpush1.msra.mxu0 %v1034
        %3213 = vmatprep.subr.mxu0 %v1037
        %3214 = vmatpush1.msra.mxu0 %v1036
        %3215 = vmatprep.subr.mxu0 %v1039
        %3216 = vmatpush1.msra.mxu0 %v1038
        %3217 = vmatprep.mubr.f32.mxu0 %v2179
        %3218 = vmatmul.mubr.f32.gmra.mrb[0].mxu0 %v2177
        %v3219 = vpop.f32.mrb[0].mxu0
        %v3220 = vadd.f32 %v3149, %v3219
        %v3221 = vpop.f32.mrb[0].mxu0
        %v3222 = vadd.f32 %v3151, %v3221
        %3223 = vdwg.mxu0
        %3224 = vmatprep.subr.mxu0 %v1041
        %3225 = vmatpush1.msra.mxu0 %v1040
        %3226 = vmatprep.subr.mxu0 %v1043
        %3227 = vmatpush1.msra.mxu0 %v1042
        %3228 = vmatprep.subr.mxu0 %v1045
        %3229 = vmatpush1.msra.mxu0 %v1044
        %3230 = vmatprep.subr.mxu0 %v1047
        %3231 = vmatpush1.msra.mxu0 %v1046
        %3232 = vmatprep.subr.mxu0 %v1049
        %3233 = vmatpush1.msra.mxu0 %v1048
        %3234 = vmatprep.subr.mxu0 %v1051
        %3235 = vmatpush1.msra.mxu0 %v1050
        %3236 = vmatprep.subr.mxu0 %v1053
        %3237 = vmatpush1.msra.mxu0 %v1052
        %3238 = vmatprep.subr.mxu0 %v1055
        %3239 = vmatpush1.msra.mxu0 %v1054
        %3240 = vmatprep.subr.mxu0 %v1057
        %3241 = vmatpush1.msra.mxu0 %v1056
        %3242 = vmatprep.subr.mxu0 %v1059
        %3243 = vmatpush1.msra.mxu0 %v1058
        %3244 = vmatprep.subr.mxu0 %v1061
        %3245 = vmatpush1.msra.mxu0 %v1060
        %3246 = vmatprep.subr.mxu0 %v1063
        %3247 = vmatpush1.msra.mxu0 %v1062
        %3248 = vmatprep.subr.mxu0 %v1065
        %3249 = vmatpush1.msra.mxu0 %v1064
        %3250 = vmatprep.subr.mxu0 %v1067
        %3251 = vmatpush1.msra.mxu0 %v1066
        %3252 = vmatprep.subr.mxu0 %v1069
        %3253 = vmatpush1.msra.mxu0 %v1068
        %3254 = vmatprep.subr.mxu0 %v1071
        %3255 = vmatpush1.msra.mxu0 %v1070
        %3256 = vmatprep.subr.mxu0 %v1073
        %3257 = vmatpush1.msra.mxu0 %v1072
        %3258 = vmatprep.subr.mxu0 %v1075
        %3259 = vmatpush1.msra.mxu0 %v1074
        %3260 = vmatprep.subr.mxu0 %v1077
        %3261 = vmatpush1.msra.mxu0 %v1076
        %3262 = vmatprep.subr.mxu0 %v1079
        %3263 = vmatpush1.msra.mxu0 %v1078
        %3264 = vmatprep.subr.mxu0 %v1081
        %3265 = vmatpush1.msra.mxu0 %v1080
        %3266 = vmatprep.subr.mxu0 %v1083
        %3267 = vmatpush1.msra.mxu0 %v1082
        %3268 = vmatprep.subr.mxu0 %v1085
        %3269 = vmatpush1.msra.mxu0 %v1084
        %3270 = vmatprep.subr.mxu0 %v1087
        %3271 = vmatpush1.msra.mxu0 %v1086
        %3272 = vmatprep.subr.mxu0 %v1089
        %3273 = vmatpush1.msra.mxu0 %v1088
        %3274 = vmatprep.subr.mxu0 %v1091
        %3275 = vmatpush1.msra.mxu0 %v1090
        %3276 = vmatprep.subr.mxu0 %v1093
        %3277 = vmatpush1.msra.mxu0 %v1092
        %3278 = vmatprep.subr.mxu0 %v1095
        %3279 = vmatpush1.msra.mxu0 %v1094
        %3280 = vmatprep.subr.mxu0 %v1097
        %3281 = vmatpush1.msra.mxu0 %v1096
        %3282 = vmatprep.subr.mxu0 %v1099
        %3283 = vmatpush1.msra.mxu0 %v1098
        %3284 = vmatprep.subr.mxu0 %v1101
        %3285 = vmatpush1.msra.mxu0 %v1100
        %3286 = vmatprep.subr.mxu0 %v1103
        %3287 = vmatpush1.msra.mxu0 %v1102
        %3288 = vmatprep.mubr.f32.mxu0 %v2195
        %3289 = vmatmul.mubr.f32.gmra.mrb[0].mxu0 %v2187
        %v3290 = vpop.f32.mrb[0].mxu0
        %v3291 = vadd.f32 %v3220, %v3290
        %v3292 = vpop.f32.mrb[0].mxu0
        %v3293 = vadd.f32 %v3222, %v3292
        %3294 = vdwg.mxu0
        %3295 = vmatprep.subr.mxu0 %v1105
        %3296 = vmatpush1.msra.mxu0 %v1104
        %3297 = vmatprep.subr.mxu0 %v1107
        %3298 = vmatpush1.msra.mxu0 %v1106
        %3299 = vmatprep.subr.mxu0 %v1109
        %3300 = vmatpush1.msra.mxu0 %v1108
        %3301 = vmatprep.subr.mxu0 %v1111
        %3302 = vmatpush1.msra.mxu0 %v1110
        %3303 = vmatprep.subr.mxu0 %v1113
        %3304 = vmatpush1.msra.mxu0 %v1112
        %3305 = vmatprep.subr.mxu0 %v1115
        %3306 = vmatpush1.msra.mxu0 %v1114
        %3307 = vmatprep.subr.mxu0 %v1117
        %3308 = vmatpush1.msra.mxu0 %v1116
        %3309 = vmatprep.subr.mxu0 %v1119
        %3310 = vmatpush1.msra.mxu0 %v1118
        %3311 = vmatprep.subr.mxu0 %v1121
        %3312 = vmatpush1.msra.mxu0 %v1120
        %3313 = vmatprep.subr.mxu0 %v1123
        %3314 = vmatpush1.msra.mxu0 %v1122
        %3315 = vmatprep.subr.mxu0 %v1125
        %3316 = vmatpush1.msra.mxu0 %v1124
        %3317 = vmatprep.subr.mxu0 %v1127
        %3318 = vmatpush1.msra.mxu0 %v1126
        %3319 = vmatprep.subr.mxu0 %v1129
        %3320 = vmatpush1.msra.mxu0 %v1128
        %3321 = vmatprep.subr.mxu0 %v1131
        %3322 = vmatpush1.msra.mxu0 %v1130
        %3323 = vmatprep.subr.mxu0 %v1133
        %3324 = vmatpush1.msra.mxu0 %v1132
        %3325 = vmatprep.subr.mxu0 %v1135
        %3326 = vmatpush1.msra.mxu0 %v1134
        %3327 = vmatprep.subr.mxu0 %v1137
        %3328 = vmatpush1.msra.mxu0 %v1136
        %3329 = vmatprep.subr.mxu0 %v1139
        %3330 = vmatpush1.msra.mxu0 %v1138
        %3331 = vmatprep.subr.mxu0 %v1141
        %3332 = vmatpush1.msra.mxu0 %v1140
        %3333 = vmatprep.subr.mxu0 %v1143
        %3334 = vmatpush1.msra.mxu0 %v1142
        %3335 = vmatprep.subr.mxu0 %v1145
        %3336 = vmatpush1.msra.mxu0 %v1144
        %3337 = vmatprep.subr.mxu0 %v1147
        %3338 = vmatpush1.msra.mxu0 %v1146
        %3339 = vmatprep.subr.mxu0 %v1149
        %3340 = vmatpush1.msra.mxu0 %v1148
        %3341 = vmatprep.subr.mxu0 %v1151
        %3342 = vmatpush1.msra.mxu0 %v1150
        %3343 = vmatprep.subr.mxu0 %v1153
        %3344 = vmatpush1.msra.mxu0 %v1152
        %3345 = vmatprep.subr.mxu0 %v1155
        %3346 = vmatpush1.msra.mxu0 %v1154
        %3347 = vmatprep.subr.mxu0 %v1157
        %3348 = vmatpush1.msra.mxu0 %v1156
        %3349 = vmatprep.subr.mxu0 %v1159
        %3350 = vmatpush1.msra.mxu0 %v1158
        %3351 = vmatprep.subr.mxu0 %v1161
        %3352 = vmatpush1.msra.mxu0 %v1160
        %3353 = vmatprep.subr.mxu0 %v1163
        %3354 = vmatpush1.msra.mxu0 %v1162
        %3355 = vmatprep.subr.mxu0 %v1165
        %3356 = vmatpush1.msra.mxu0 %v1164
        %3357 = vmatprep.subr.mxu0 %v1167
        %3358 = vmatpush1.msra.mxu0 %v1166
        %3359 = vmatprep.mubr.f32.mxu0 %v2196
        %3360 = vmatmul.mubr.f32.gmra.mrb[0].mxu0 %v2194
        %v3361 = vpop.f32.mrb[0].mxu0
        %v3362 = vadd.f32 %v3291, %v3361
        %v3363 = vpop.f32.mrb[0].mxu0
        %v3364 = vadd.f32 %v3293, %v3363
        %3365 = vdwg.mxu0
        %3366 = vmatprep.subr.mxu0 %v1169
        %3367 = vmatpush1.msra.mxu0 %v1168
        %3368 = vmatprep.subr.mxu0 %v1171
        %3369 = vmatpush1.msra.mxu0 %v1170
        %3370 = vmatprep.subr.mxu0 %v1173
        %3371 = vmatpush1.msra.mxu0 %v1172
        %3372 = vmatprep.subr.mxu0 %v1175
        %3373 = vmatpush1.msra.mxu0 %v1174
        %3374 = vmatprep.subr.mxu0 %v1177
        %3375 = vmatpush1.msra.mxu0 %v1176
        %3376 = vmatprep.subr.mxu0 %v1179
        %3377 = vmatpush1.msra.mxu0 %v1178
        %3378 = vmatprep.subr.mxu0 %v1181
        %3379 = vmatpush1.msra.mxu0 %v1180
        %3380 = vmatprep.subr.mxu0 %v1183
        %3381 = vmatpush1.msra.mxu0 %v1182
        %3382 = vmatprep.subr.mxu0 %v1185
        %3383 = vmatpush1.msra.mxu0 %v1184
        %3384 = vmatprep.subr.mxu0 %v1187
        %3385 = vmatpush1.msra.mxu0 %v1186
        %3386 = vmatprep.subr.mxu0 %v1189
        %3387 = vmatpush1.msra.mxu0 %v1188
        %3388 = vmatprep.subr.mxu0 %v1191
        %3389 = vmatpush1.msra.mxu0 %v1190
        %3390 = vmatprep.subr.mxu0 %v1193
        %3391 = vmatpush1.msra.mxu0 %v1192
        %3392 = vmatprep.subr.mxu0 %v1195
        %3393 = vmatpush1.msra.mxu0 %v1194
        %3394 = vmatprep.subr.mxu0 %v1197
        %3395 = vmatpush1.msra.mxu0 %v1196
        %3396 = vmatprep.subr.mxu0 %v1199
        %3397 = vmatpush1.msra.mxu0 %v1198
        %3398 = vmatprep.subr.mxu0 %v1201
        %3399 = vmatpush1.msra.mxu0 %v1200
        %3400 = vmatprep.subr.mxu0 %v1203
        %3401 = vmatpush1.msra.mxu0 %v1202
        %3402 = vmatprep.subr.mxu0 %v1205
        %3403 = vmatpush1.msra.mxu0 %v1204
        %3404 = vmatprep.subr.mxu0 %v1207
        %3405 = vmatpush1.msra.mxu0 %v1206
        %3406 = vmatprep.subr.mxu0 %v1209
        %3407 = vmatpush1.msra.mxu0 %v1208
        %3408 = vmatprep.subr.mxu0 %v1211
        %3409 = vmatpush1.msra.mxu0 %v1210
        %3410 = vmatprep.subr.mxu0 %v1213
        %3411 = vmatpush1.msra.mxu0 %v1212
        %3412 = vmatprep.subr.mxu0 %v1215
        %3413 = vmatpush1.msra.mxu0 %v1214
        %3414 = vmatprep.subr.mxu0 %v1217
        %3415 = vmatpush1.msra.mxu0 %v1216
        %3416 = vmatprep.subr.mxu0 %v1219
        %3417 = vmatpush1.msra.mxu0 %v1218
        %3418 = vmatprep.subr.mxu0 %v1221
        %3419 = vmatpush1.msra.mxu0 %v1220
        %3420 = vmatprep.subr.mxu0 %v1223
        %3421 = vmatpush1.msra.mxu0 %v1222
        %3422 = vmatprep.subr.mxu0 %v1225
        %3423 = vmatpush1.msra.mxu0 %v1224
        %3424 = vmatprep.subr.mxu0 %v1227
        %3425 = vmatpush1.msra.mxu0 %v1226
        %3426 = vmatprep.subr.mxu0 %v1229
        %3427 = vmatpush1.msra.mxu0 %v1228
        %3428 = vmatprep.subr.mxu0 %v1231
        %3429 = vmatpush1.msra.mxu0 %v1230
        %3430 = vmatprep.mubr.f32.mxu0 %v2212
        %3431 = vmatmul.mubr.f32.gmra.mrb[0].mxu0 %v2204
        %v3432 = vpop.f32.mrb[0].mxu0
        %v3433 = vadd.f32 %v3362, %v3432
        %v3434 = vpop.f32.mrb[0].mxu0
        %v3435 = vadd.f32 %v3364, %v3434
        %3436 = vdwg.mxu0
        %3437 = vmatprep.subr.mxu0 %v1233
        %3438 = vmatpush1.msra.mxu0 %v1232
        %3439 = vmatprep.subr.mxu0 %v1235
        %3440 = vmatpush1.msra.mxu0 %v1234
        %3441 = vmatprep.subr.mxu0 %v1237
        %3442 = vmatpush1.msra.mxu0 %v1236
        %3443 = vmatprep.subr.mxu0 %v1239
        %3444 = vmatpush1.msra.mxu0 %v1238
        %3445 = vmatprep.subr.mxu0 %v1241
        %3446 = vmatpush1.msra.mxu0 %v1240
        %3447 = vmatprep.subr.mxu0 %v1243
        %3448 = vmatpush1.msra.mxu0 %v1242
        %3449 = vmatprep.subr.mxu0 %v1245
        %3450 = vmatpush1.msra.mxu0 %v1244
        %3451 = vmatprep.subr.mxu0 %v1247
        %3452 = vmatpush1.msra.mxu0 %v1246
        %3453 = vmatprep.subr.mxu0 %v1249
        %3454 = vmatpush1.msra.mxu0 %v1248
        %3455 = vmatprep.subr.mxu0 %v1251
        %3456 = vmatpush1.msra.mxu0 %v1250
        %3457 = vmatprep.subr.mxu0 %v1253
        %3458 = vmatpush1.msra.mxu0 %v1252
        %3459 = vmatprep.subr.mxu0 %v1255
        %3460 = vmatpush1.msra.mxu0 %v1254
        %3461 = vmatprep.subr.mxu0 %v1257
        %3462 = vmatpush1.msra.mxu0 %v1256
        %3463 = vmatprep.subr.mxu0 %v1259
        %3464 = vmatpush1.msra.mxu0 %v1258
        %3465 = vmatprep.subr.mxu0 %v1261
        %3466 = vmatpush1.msra.mxu0 %v1260
        %3467 = vmatprep.subr.mxu0 %v1263
        %3468 = vmatpush1.msra.mxu0 %v1262
        %3469 = vmatprep.subr.mxu0 %v1265
        %3470 = vmatpush1.msra.mxu0 %v1264
        %3471 = vmatprep.subr.mxu0 %v1267
        %3472 = vmatpush1.msra.mxu0 %v1266
        %3473 = vmatprep.subr.mxu0 %v1269
        %3474 = vmatpush1.msra.mxu0 %v1268
        %3475 = vmatprep.subr.mxu0 %v1271
        %3476 = vmatpush1.msra.mxu0 %v1270
        %3477 = vmatprep.subr.mxu0 %v1273
        %3478 = vmatpush1.msra.mxu0 %v1272
        %3479 = vmatprep.subr.mxu0 %v1275
        %3480 = vmatpush1.msra.mxu0 %v1274
        %3481 = vmatprep.subr.mxu0 %v1277
        %3482 = vmatpush1.msra.mxu0 %v1276
        %3483 = vmatprep.subr.mxu0 %v1279
        %3484 = vmatpush1.msra.mxu0 %v1278
        %3485 = vmatprep.subr.mxu0 %v1281
        %3486 = vmatpush1.msra.mxu0 %v1280
        %3487 = vmatprep.subr.mxu0 %v1283
        %3488 = vmatpush1.msra.mxu0 %v1282
        %3489 = vmatprep.subr.mxu0 %v1285
        %3490 = vmatpush1.msra.mxu0 %v1284
        %3491 = vmatprep.subr.mxu0 %v1287
        %3492 = vmatpush1.msra.mxu0 %v1286
        %3493 = vmatprep.subr.mxu0 %v1289
        %3494 = vmatpush1.msra.mxu0 %v1288
        %3495 = vmatprep.subr.mxu0 %v1291
        %3496 = vmatpush1.msra.mxu0 %v1290
        %3497 = vmatprep.subr.mxu0 %v1293
        %3498 = vmatpush1.msra.mxu0 %v1292
        %3499 = vmatprep.subr.mxu0 %v1295
        %3500 = vmatpush1.msra.mxu0 %v1294
        %3501 = vmatprep.mubr.f32.mxu0 %v2213
        %3502 = vmatmul.mubr.f32.gmra.mrb[0].mxu0 %v2211
        %v3503 = vpop.f32.mrb[0].mxu0
        %v3504 = vadd.f32 %v3433, %v3503
        %v3505 = vpop.f32.mrb[0].mxu0
        %v3506 = vadd.f32 %v3435, %v3505
        %3507 = vdwg.mxu0
        %3508 = vmatprep.subr.mxu0 %v1297
        %3509 = vmatpush1.msra.mxu0 %v1296
        %3510 = vmatprep.subr.mxu0 %v1299
        %3511 = vmatpush1.msra.mxu0 %v1298
        %3512 = vmatprep.subr.mxu0 %v1301
        %3513 = vmatpush1.msra.mxu0 %v1300
        %3514 = vmatprep.subr.mxu0 %v1303
        %3515 = vmatpush1.msra.mxu0 %v1302
        %3516 = vmatprep.subr.mxu0 %v1305
        %3517 = vmatpush1.msra.mxu0 %v1304
        %3518 = vmatprep.subr.mxu0 %v1307
        %3519 = vmatpush1.msra.mxu0 %v1306
        %3520 = vmatprep.subr.mxu0 %v1309
        %3521 = vmatpush1.msra.mxu0 %v1308
        %3522 = vmatprep.subr.mxu0 %v1311
        %3523 = vmatpush1.msra.mxu0 %v1310
        %3524 = vmatprep.subr.mxu0 %v1313
        %3525 = vmatpush1.msra.mxu0 %v1312
        %3526 = vmatprep.subr.mxu0 %v1315
        %3527 = vmatpush1.msra.mxu0 %v1314
        %3528 = vmatprep.subr.mxu0 %v1317
        %3529 = vmatpush1.msra.mxu0 %v1316
        %3530 = vmatprep.subr.mxu0 %v1319
        %3531 = vmatpush1.msra.mxu0 %v1318
        %3532 = vmatprep.subr.mxu0 %v1321
        %3533 = vmatpush1.msra.mxu0 %v1320
        %3534 = vmatprep.subr.mxu0 %v1323
        %3535 = vmatpush1.msra.mxu0 %v1322
        %3536 = vmatprep.subr.mxu0 %v1325
        %3537 = vmatpush1.msra.mxu0 %v1324
        %3538 = vmatprep.subr.mxu0 %v1327
        %3539 = vmatpush1.msra.mxu0 %v1326
        %3540 = vmatprep.subr.mxu0 %v1329
        %3541 = vmatpush1.msra.mxu0 %v1328
        %3542 = vmatprep.subr.mxu0 %v1331
        %3543 = vmatpush1.msra.mxu0 %v1330
        %3544 = vmatprep.subr.mxu0 %v1333
        %3545 = vmatpush1.msra.mxu0 %v1332
        %3546 = vmatprep.subr.mxu0 %v1335
        %3547 = vmatpush1.msra.mxu0 %v1334
        %3548 = vmatprep.subr.mxu0 %v1337
        %3549 = vmatpush1.msra.mxu0 %v1336
        %3550 = vmatprep.subr.mxu0 %v1339
        %3551 = vmatpush1.msra.mxu0 %v1338
        %3552 = vmatprep.subr.mxu0 %v1341
        %3553 = vmatpush1.msra.mxu0 %v1340
        %3554 = vmatprep.subr.mxu0 %v1343
        %3555 = vmatpush1.msra.mxu0 %v1342
        %3556 = vmatprep.subr.mxu0 %v1345
        %3557 = vmatpush1.msra.mxu0 %v1344
        %3558 = vmatprep.subr.mxu0 %v1347
        %3559 = vmatpush1.msra.mxu0 %v1346
        %3560 = vmatprep.subr.mxu0 %v1349
        %3561 = vmatpush1.msra.mxu0 %v1348
        %3562 = vmatprep.subr.mxu0 %v1351
        %3563 = vmatpush1.msra.mxu0 %v1350
        %3564 = vmatprep.subr.mxu0 %v1353
        %3565 = vmatpush1.msra.mxu0 %v1352
        %3566 = vmatprep.subr.mxu0 %v1355
        %3567 = vmatpush1.msra.mxu0 %v1354
        %3568 = vmatprep.subr.mxu0 %v1357
        %3569 = vmatpush1.msra.mxu0 %v1356
        %3570 = vmatprep.subr.mxu0 %v1359
        %3571 = vmatpush1.msra.mxu0 %v1358
        %3572 = vmatprep.mubr.f32.mxu0 %v2229
        %3573 = vmatmul.mubr.f32.gmra.mrb[0].mxu0 %v2221
        %v3574 = vpop.f32.mrb[0].mxu0
        %v3575 = vadd.f32 %v3504, %v3574
        %v3576 = vpop.f32.mrb[0].mxu0
        %v3577 = vadd.f32 %v3506, %v3576
        %3578 = vdwg.mxu0
        %3579 = vmatprep.subr.mxu0 %v1361
        %3580 = vmatpush1.msra.mxu0 %v1360
        %3581 = vmatprep.subr.mxu0 %v1363
        %3582 = vmatpush1.msra.mxu0 %v1362
        %3583 = vmatprep.subr.mxu0 %v1365
        %3584 = vmatpush1.msra.mxu0 %v1364
        %3585 = vmatprep.subr.mxu0 %v1367
        %3586 = vmatpush1.msra.mxu0 %v1366
        %3587 = vmatprep.subr.mxu0 %v1369
        %3588 = vmatpush1.msra.mxu0 %v1368
        %3589 = vmatprep.subr.mxu0 %v1371
        %3590 = vmatpush1.msra.mxu0 %v1370
        %3591 = vmatprep.subr.mxu0 %v1373
        %3592 = vmatpush1.msra.mxu0 %v1372
        %3593 = vmatprep.subr.mxu0 %v1375
        %3594 = vmatpush1.msra.mxu0 %v1374
        %3595 = vmatprep.subr.mxu0 %v1377
        %3596 = vmatpush1.msra.mxu0 %v1376
        %3597 = vmatprep.subr.mxu0 %v1379
        %3598 = vmatpush1.msra.mxu0 %v1378
        %3599 = vmatprep.subr.mxu0 %v1381
        %3600 = vmatpush1.msra.mxu0 %v1380
        %3601 = vmatprep.subr.mxu0 %v1383
        %3602 = vmatpush1.msra.mxu0 %v1382
        %3603 = vmatprep.subr.mxu0 %v1385
        %3604 = vmatpush1.msra.mxu0 %v1384
        %3605 = vmatprep.subr.mxu0 %v1387
        %3606 = vmatpush1.msra.mxu0 %v1386
        %3607 = vmatprep.subr.mxu0 %v1389
        %3608 = vmatpush1.msra.mxu0 %v1388
        %3609 = vmatprep.subr.mxu0 %v1391
        %3610 = vmatpush1.msra.mxu0 %v1390
        %3611 = vmatprep.subr.mxu0 %v1393
        %3612 = vmatpush1.msra.mxu0 %v1392
        %3613 = vmatprep.subr.mxu0 %v1395
        %3614 = vmatpush1.msra.mxu0 %v1394
        %3615 = vmatprep.subr.mxu0 %v1397
        %3616 = vmatpush1.msra.mxu0 %v1396
        %3617 = vmatprep.subr.mxu0 %v1399
        %3618 = vmatpush1.msra.mxu0 %v1398
        %3619 = vmatprep.subr.mxu0 %v1401
        %3620 = vmatpush1.msra.mxu0 %v1400
        %3621 = vmatprep.subr.mxu0 %v1403
        %3622 = vmatpush1.msra.mxu0 %v1402
        %3623 = vmatprep.subr.mxu0 %v1405
        %3624 = vmatpush1.msra.mxu0 %v1404
        %3625 = vmatprep.subr.mxu0 %v1407
        %3626 = vmatpush1.msra.mxu0 %v1406
        %3627 = vmatprep.subr.mxu0 %v1409
        %3628 = vmatpush1.msra.mxu0 %v1408
        %3629 = vmatprep.subr.mxu0 %v1411
        %3630 = vmatpush1.msra.mxu0 %v1410
        %3631 = vmatprep.subr.mxu0 %v1413
        %3632 = vmatpush1.msra.mxu0 %v1412
        %3633 = vmatprep.subr.mxu0 %v1415
        %3634 = vmatpush1.msra.mxu0 %v1414
        %3635 = vmatprep.subr.mxu0 %v1417
        %3636 = vmatpush1.msra.mxu0 %v1416
        %3637 = vmatprep.subr.mxu0 %v1419
        %3638 = vmatpush1.msra.mxu0 %v1418
        %3639 = vmatprep.subr.mxu0 %v1421
        %3640 = vmatpush1.msra.mxu0 %v1420
        %3641 = vmatprep.subr.mxu0 %v1423
        %3642 = vmatpush1.msra.mxu0 %v1422
        %3643 = vmatprep.mubr.f32.mxu0 %v2230
        %3644 = vmatmul.mubr.f32.gmra.mrb[0].mxu0 %v2228
        %v3645 = vpop.f32.mrb[0].mxu0
        %v3646 = vadd.f32 %v3575, %v3645
        %v3647 = vpop.f32.mrb[0].mxu0
        %v3648 = vadd.f32 %v3577, %v3647
        %3649 = vdwg.mxu0
        %3650 = vmatprep.subr.mxu0 %v1425
        %3651 = vmatpush1.msra.mxu0 %v1424
        %3652 = vmatprep.subr.mxu0 %v1427
        %3653 = vmatpush1.msra.mxu0 %v1426
        %3654 = vmatprep.subr.mxu0 %v1429
        %3655 = vmatpush1.msra.mxu0 %v1428
        %3656 = vmatprep.subr.mxu0 %v1431
        %3657 = vmatpush1.msra.mxu0 %v1430
        %3658 = vmatprep.subr.mxu0 %v1433
        %3659 = vmatpush1.msra.mxu0 %v1432
        %3660 = vmatprep.subr.mxu0 %v1435
        %3661 = vmatpush1.msra.mxu0 %v1434
        %3662 = vmatprep.subr.mxu0 %v1437
        %3663 = vmatpush1.msra.mxu0 %v1436
        %3664 = vmatprep.subr.mxu0 %v1439
        %3665 = vmatpush1.msra.mxu0 %v1438
        %3666 = vmatprep.subr.mxu0 %v1441
        %3667 = vmatpush1.msra.mxu0 %v1440
        %3668 = vmatprep.subr.mxu0 %v1443
        %3669 = vmatpush1.msra.mxu0 %v1442
        %3670 = vmatprep.subr.mxu0 %v1445
        %3671 = vmatpush1.msra.mxu0 %v1444
        %3672 = vmatprep.subr.mxu0 %v1447
        %3673 = vmatpush1.msra.mxu0 %v1446
        %3674 = vmatprep.subr.mxu0 %v1449
        %3675 = vmatpush1.msra.mxu0 %v1448
        %3676 = vmatprep.subr.mxu0 %v1451
        %3677 = vmatpush1.msra.mxu0 %v1450
        %3678 = vmatprep.subr.mxu0 %v1453
        %3679 = vmatpush1.msra.mxu0 %v1452
        %3680 = vmatprep.subr.mxu0 %v1455
        %3681 = vmatpush1.msra.mxu0 %v1454
        %3682 = vmatprep.subr.mxu0 %v1457
        %3683 = vmatpush1.msra.mxu0 %v1456
        %3684 = vmatprep.subr.mxu0 %v1459
        %3685 = vmatpush1.msra.mxu0 %v1458
        %3686 = vmatprep.subr.mxu0 %v1461
        %3687 = vmatpush1.msra.mxu0 %v1460
        %3688 = vmatprep.subr.mxu0 %v1463
        %3689 = vmatpush1.msra.mxu0 %v1462
        %3690 = vmatprep.subr.mxu0 %v1465
        %3691 = vmatpush1.msra.mxu0 %v1464
        %3692 = vmatprep.subr.mxu0 %v1467
        %3693 = vmatpush1.msra.mxu0 %v1466
        %3694 = vmatprep.subr.mxu0 %v1469
        %3695 = vmatpush1.msra.mxu0 %v1468
        %3696 = vmatprep.subr.mxu0 %v1471
        %3697 = vmatpush1.msra.mxu0 %v1470
        %3698 = vmatprep.subr.mxu0 %v1473
        %3699 = vmatpush1.msra.mxu0 %v1472
        %3700 = vmatprep.subr.mxu0 %v1475
        %3701 = vmatpush1.msra.mxu0 %v1474
        %3702 = vmatprep.subr.mxu0 %v1477
        %3703 = vmatpush1.msra.mxu0 %v1476
        %3704 = vmatprep.subr.mxu0 %v1479
        %3705 = vmatpush1.msra.mxu0 %v1478
        %3706 = vmatprep.subr.mxu0 %v1481
        %3707 = vmatpush1.msra.mxu0 %v1480
        %3708 = vmatprep.subr.mxu0 %v1483
        %3709 = vmatpush1.msra.mxu0 %v1482
        %3710 = vmatprep.subr.mxu0 %v1485
        %3711 = vmatpush1.msra.mxu0 %v1484
        %3712 = vmatprep.subr.mxu0 %v1487
        %3713 = vmatpush1.msra.mxu0 %v1486
        %3714 = vmatprep.mubr.f32.mxu0 %v2246
        %3715 = vmatmul.mubr.f32.gmra.mrb[0].mxu0 %v2238
        %v3716 = vpop.f32.mrb[0].mxu0
        %v3717 = vadd.f32 %v3646, %v3716
        %v3718 = vpop.f32.mrb[0].mxu0
        %v3719 = vadd.f32 %v3648, %v3718
        %3720 = vdwg.mxu0
        %3721 = vmatprep.subr.mxu0 %v1489
        %3722 = vmatpush1.msra.mxu0 %v1488
        %3723 = vmatprep.subr.mxu0 %v1491
        %3724 = vmatpush1.msra.mxu0 %v1490
        %3725 = vmatprep.subr.mxu0 %v1493
        %3726 = vmatpush1.msra.mxu0 %v1492
        %3727 = vmatprep.subr.mxu0 %v1495
        %3728 = vmatpush1.msra.mxu0 %v1494
        %3729 = vmatprep.subr.mxu0 %v1497
        %3730 = vmatpush1.msra.mxu0 %v1496
        %3731 = vmatprep.subr.mxu0 %v1499
        %3732 = vmatpush1.msra.mxu0 %v1498
        %3733 = vmatprep.subr.mxu0 %v1501
        %3734 = vmatpush1.msra.mxu0 %v1500
        %3735 = vmatprep.subr.mxu0 %v1503
        %3736 = vmatpush1.msra.mxu0 %v1502
        %3737 = vmatprep.subr.mxu0 %v1505
        %3738 = vmatpush1.msra.mxu0 %v1504
        %3739 = vmatprep.subr.mxu0 %v1507
        %3740 = vmatpush1.msra.mxu0 %v1506
        %3741 = vmatprep.subr.mxu0 %v1509
        %3742 = vmatpush1.msra.mxu0 %v1508
        %3743 = vmatprep.subr.mxu0 %v1511
        %3744 = vmatpush1.msra.mxu0 %v1510
        %3745 = vmatprep.subr.mxu0 %v1513
        %3746 = vmatpush1.msra.mxu0 %v1512
        %3747 = vmatprep.subr.mxu0 %v1515
        %3748 = vmatpush1.msra.mxu0 %v1514
        %3749 = vmatprep.subr.mxu0 %v1517
        %3750 = vmatpush1.msra.mxu0 %v1516
        %3751 = vmatprep.subr.mxu0 %v1519
        %3752 = vmatpush1.msra.mxu0 %v1518
        %3753 = vmatprep.subr.mxu0 %v1521
        %3754 = vmatpush1.msra.mxu0 %v1520
        %3755 = vmatprep.subr.mxu0 %v1523
        %3756 = vmatpush1.msra.mxu0 %v1522
        %3757 = vmatprep.subr.mxu0 %v1525
        %3758 = vmatpush1.msra.mxu0 %v1524
        %3759 = vmatprep.subr.mxu0 %v1527
        %3760 = vmatpush1.msra.mxu0 %v1526
        %3761 = vmatprep.subr.mxu0 %v1529
        %3762 = vmatpush1.msra.mxu0 %v1528
        %3763 = vmatprep.subr.mxu0 %v1531
        %3764 = vmatpush1.msra.mxu0 %v1530
        %3765 = vmatprep.subr.mxu0 %v1533
        %3766 = vmatpush1.msra.mxu0 %v1532
        %3767 = vmatprep.subr.mxu0 %v1535
        %3768 = vmatpush1.msra.mxu0 %v1534
        %3769 = vmatprep.subr.mxu0 %v1537
        %3770 = vmatpush1.msra.mxu0 %v1536
        %3771 = vmatprep.subr.mxu0 %v1539
        %3772 = vmatpush1.msra.mxu0 %v1538
        %3773 = vmatprep.subr.mxu0 %v1541
        %3774 = vmatpush1.msra.mxu0 %v1540
        %3775 = vmatprep.subr.mxu0 %v1543
        %3776 = vmatpush1.msra.mxu0 %v1542
        %3777 = vmatprep.subr.mxu0 %v1545
        %3778 = vmatpush1.msra.mxu0 %v1544
        %3779 = vmatprep.subr.mxu0 %v1547
        %3780 = vmatpush1.msra.mxu0 %v1546
        %3781 = vmatprep.subr.mxu0 %v1549
        %3782 = vmatpush1.msra.mxu0 %v1548
        %3783 = vmatprep.subr.mxu0 %v1551
        %3784 = vmatpush1.msra.mxu0 %v1550
        %3785 = vmatprep.mubr.f32.mxu0 %v2247
        %3786 = vmatmul.mubr.f32.gmra.mrb[0].mxu0 %v2245
        %v3787 = vpop.f32.mrb[0].mxu0
        %v3788 = vadd.f32 %v3717, %v3787
        %v3789 = vpop.f32.mrb[0].mxu0
        %v3790 = vadd.f32 %v3719, %v3789
        %3791 = vdwg.mxu0
        %3792 = vmatprep.subr.mxu0 %v1553
        %3793 = vmatpush1.msra.mxu0 %v1552
        %3794 = vmatprep.subr.mxu0 %v1555
        %3795 = vmatpush1.msra.mxu0 %v1554
        %3796 = vmatprep.subr.mxu0 %v1557
        %3797 = vmatpush1.msra.mxu0 %v1556
        %3798 = vmatprep.subr.mxu0 %v1559
        %3799 = vmatpush1.msra.mxu0 %v1558
        %3800 = vmatprep.subr.mxu0 %v1561
        %3801 = vmatpush1.msra.mxu0 %v1560
        %3802 = vmatprep.subr.mxu0 %v1563
        %3803 = vmatpush1.msra.mxu0 %v1562
        %3804 = vmatprep.subr.mxu0 %v1565
        %3805 = vmatpush1.msra.mxu0 %v1564
        %3806 = vmatprep.subr.mxu0 %v1567
        %3807 = vmatpush1.msra.mxu0 %v1566
        %3808 = vmatprep.subr.mxu0 %v1569
        %3809 = vmatpush1.msra.mxu0 %v1568
        %3810 = vmatprep.subr.mxu0 %v1571
        %3811 = vmatpush1.msra.mxu0 %v1570
        %3812 = vmatprep.subr.mxu0 %v1573
        %3813 = vmatpush1.msra.mxu0 %v1572
        %3814 = vmatprep.subr.mxu0 %v1575
        %3815 = vmatpush1.msra.mxu0 %v1574
        %3816 = vmatprep.subr.mxu0 %v1577
        %3817 = vmatpush1.msra.mxu0 %v1576
        %3818 = vmatprep.subr.mxu0 %v1579
        %3819 = vmatpush1.msra.mxu0 %v1578
        %3820 = vmatprep.subr.mxu0 %v1581
        %3821 = vmatpush1.msra.mxu0 %v1580
        %3822 = vmatprep.subr.mxu0 %v1583
        %3823 = vmatpush1.msra.mxu0 %v1582
        %3824 = vmatprep.subr.mxu0 %v1585
        %3825 = vmatpush1.msra.mxu0 %v1584
        %3826 = vmatprep.subr.mxu0 %v1587
        %3827 = vmatpush1.msra.mxu0 %v1586
        %3828 = vmatprep.subr.mxu0 %v1589
        %3829 = vmatpush1.msra.mxu0 %v1588
        %3830 = vmatprep.subr.mxu0 %v1591
        %3831 = vmatpush1.msra.mxu0 %v1590
        %3832 = vmatprep.subr.mxu0 %v1593
        %3833 = vmatpush1.msra.mxu0 %v1592
        %3834 = vmatprep.subr.mxu0 %v1595
        %3835 = vmatpush1.msra.mxu0 %v1594
        %3836 = vmatprep.subr.mxu0 %v1597
        %3837 = vmatpush1.msra.mxu0 %v1596
        %3838 = vmatprep.subr.mxu0 %v1599
        %3839 = vmatpush1.msra.mxu0 %v1598
        %3840 = vmatprep.subr.mxu0 %v1601
        %3841 = vmatpush1.msra.mxu0 %v1600
        %3842 = vmatprep.subr.mxu0 %v1603
        %3843 = vmatpush1.msra.mxu0 %v1602
        %3844 = vmatprep.subr.mxu0 %v1605
        %3845 = vmatpush1.msra.mxu0 %v1604
        %3846 = vmatprep.subr.mxu0 %v1607
        %3847 = vmatpush1.msra.mxu0 %v1606
        %3848 = vmatprep.subr.mxu0 %v1609
        %3849 = vmatpush1.msra.mxu0 %v1608
        %3850 = vmatprep.subr.mxu0 %v1611
        %3851 = vmatpush1.msra.mxu0 %v1610
        %3852 = vmatprep.subr.mxu0 %v1613
        %3853 = vmatpush1.msra.mxu0 %v1612
        %3854 = vmatprep.subr.mxu0 %v1615
        %3855 = vmatpush1.msra.mxu0 %v1614
        %3856 = vmatprep.mubr.f32.mxu0 %v2263
        %3857 = vmatmul.mubr.f32.gmra.mrb[0].mxu0 %v2255
        %v3858 = vpop.f32.mrb[0].mxu0
        %v3859 = vadd.f32 %v3788, %v3858
        %v3860 = vpop.f32.mrb[0].mxu0
        %v3861 = vadd.f32 %v3790, %v3860
        %3862 = vdwg.mxu0
        %3863 = vmatprep.subr.mxu0 %v1617
        %3864 = vmatpush1.msra.mxu0 %v1616
        %3865 = vmatprep.subr.mxu0 %v1619
        %3866 = vmatpush1.msra.mxu0 %v1618
        %3867 = vmatprep.subr.mxu0 %v1621
        %3868 = vmatpush1.msra.mxu0 %v1620
        %3869 = vmatprep.subr.mxu0 %v1623
        %3870 = vmatpush1.msra.mxu0 %v1622
        %3871 = vmatprep.subr.mxu0 %v1625
        %3872 = vmatpush1.msra.mxu0 %v1624
        %3873 = vmatprep.subr.mxu0 %v1627
        %3874 = vmatpush1.msra.mxu0 %v1626
        %3875 = vmatprep.subr.mxu0 %v1629
        %3876 = vmatpush1.msra.mxu0 %v1628
        %3877 = vmatprep.subr.mxu0 %v1631
        %3878 = vmatpush1.msra.mxu0 %v1630
        %3879 = vmatprep.subr.mxu0 %v1633
        %3880 = vmatpush1.msra.mxu0 %v1632
        %3881 = vmatprep.subr.mxu0 %v1635
        %3882 = vmatpush1.msra.mxu0 %v1634
        %3883 = vmatprep.subr.mxu0 %v1637
        %3884 = vmatpush1.msra.mxu0 %v1636
        %3885 = vmatprep.subr.mxu0 %v1639
        %3886 = vmatpush1.msra.mxu0 %v1638
        %3887 = vmatprep.subr.mxu0 %v1641
        %3888 = vmatpush1.msra.mxu0 %v1640
        %3889 = vmatprep.subr.mxu0 %v1643
        %3890 = vmatpush1.msra.mxu0 %v1642
        %3891 = vmatprep.subr.mxu0 %v1645
        %3892 = vmatpush1.msra.mxu0 %v1644
        %3893 = vmatprep.subr.mxu0 %v1647
        %3894 = vmatpush1.msra.mxu0 %v1646
        %3895 = vmatprep.subr.mxu0 %v1649
        %3896 = vmatpush1.msra.mxu0 %v1648
        %3897 = vmatprep.subr.mxu0 %v1651
        %3898 = vmatpush1.msra.mxu0 %v1650
        %3899 = vmatprep.subr.mxu0 %v1653
        %3900 = vmatpush1.msra.mxu0 %v1652
        %3901 = vmatprep.subr.mxu0 %v1655
        %3902 = vmatpush1.msra.mxu0 %v1654
        %3903 = vmatprep.subr.mxu0 %v1657
        %3904 = vmatpush1.msra.mxu0 %v1656
        %3905 = vmatprep.subr.mxu0 %v1659
        %3906 = vmatpush1.msra.mxu0 %v1658
        %3907 = vmatprep.subr.mxu0 %v1661
        %3908 = vmatpush1.msra.mxu0 %v1660
        %3909 = vmatprep.subr.mxu0 %v1663
        %3910 = vmatpush1.msra.mxu0 %v1662
        %3911 = vmatprep.subr.mxu0 %v1665
        %3912 = vmatpush1.msra.mxu0 %v1664
        %3913 = vmatprep.subr.mxu0 %v1667
        %3914 = vmatpush1.msra.mxu0 %v1666
        %3915 = vmatprep.subr.mxu0 %v1669
        %3916 = vmatpush1.msra.mxu0 %v1668
        %3917 = vmatprep.subr.mxu0 %v1671
        %3918 = vmatpush1.msra.mxu0 %v1670
        %3919 = vmatprep.subr.mxu0 %v1673
        %3920 = vmatpush1.msra.mxu0 %v1672
        %3921 = vmatprep.subr.mxu0 %v1675
        %3922 = vmatpush1.msra.mxu0 %v1674
        %3923 = vmatprep.subr.mxu0 %v1677
        %3924 = vmatpush1.msra.mxu0 %v1676
        %3925 = vmatprep.subr.mxu0 %v1679
        %3926 = vmatpush1.msra.mxu0 %v1678
        %3927 = vmatprep.mubr.f32.mxu0 %v2264
        %3928 = vmatmul.mubr.f32.gmra.mrb[0].mxu0 %v2262
        %v3929 = vpop.f32.mrb[0].mxu0
        %v3930 = vadd.f32 %v3859, %v3929
        %v3931 = vpop.f32.mrb[0].mxu0
        %v3932 = vadd.f32 %v3861, %v3931
        %3933 = vdwg.mxu0
        %3934 = vmatprep.subr.mxu0 %v1681
        %3935 = vmatpush1.msra.mxu0 %v1680
        %3936 = vmatprep.subr.mxu0 %v1683
        %3937 = vmatpush1.msra.mxu0 %v1682
        %3938 = vmatprep.subr.mxu0 %v1685
        %3939 = vmatpush1.msra.mxu0 %v1684
        %3940 = vmatprep.subr.mxu0 %v1687
        %3941 = vmatpush1.msra.mxu0 %v1686
        %3942 = vmatprep.subr.mxu0 %v1689
        %3943 = vmatpush1.msra.mxu0 %v1688
        %3944 = vmatprep.subr.mxu0 %v1691
        %3945 = vmatpush1.msra.mxu0 %v1690
        %3946 = vmatprep.subr.mxu0 %v1693
        %3947 = vmatpush1.msra.mxu0 %v1692
        %3948 = vmatprep.subr.mxu0 %v1695
        %3949 = vmatpush1.msra.mxu0 %v1694
        %3950 = vmatprep.subr.mxu0 %v1697
        %3951 = vmatpush1.msra.mxu0 %v1696
        %3952 = vmatprep.subr.mxu0 %v1699
        %3953 = vmatpush1.msra.mxu0 %v1698
        %3954 = vmatprep.subr.mxu0 %v1701
        %3955 = vmatpush1.msra.mxu0 %v1700
        %3956 = vmatprep.subr.mxu0 %v1703
        %3957 = vmatpush1.msra.mxu0 %v1702
        %3958 = vmatprep.subr.mxu0 %v1705
        %3959 = vmatpush1.msra.mxu0 %v1704
        %3960 = vmatprep.subr.mxu0 %v1707
        %3961 = vmatpush1.msra.mxu0 %v1706
        %3962 = vmatprep.subr.mxu0 %v1709
        %3963 = vmatpush1.msra.mxu0 %v1708
        %3964 = vmatprep.subr.mxu0 %v1711
        %3965 = vmatpush1.msra.mxu0 %v1710
        %3966 = vmatprep.subr.mxu0 %v1713
        %3967 = vmatpush1.msra.mxu0 %v1712
        %3968 = vmatprep.subr.mxu0 %v1715
        %3969 = vmatpush1.msra.mxu0 %v1714
        %3970 = vmatprep.subr.mxu0 %v1717
        %3971 = vmatpush1.msra.mxu0 %v1716
        %3972 = vmatprep.subr.mxu0 %v1719
        %3973 = vmatpush1.msra.mxu0 %v1718
        %3974 = vmatprep.subr.mxu0 %v1721
        %3975 = vmatpush1.msra.mxu0 %v1720
        %3976 = vmatprep.subr.mxu0 %v1723
        %3977 = vmatpush1.msra.mxu0 %v1722
        %3978 = vmatprep.subr.mxu0 %v1725
        %3979 = vmatpush1.msra.mxu0 %v1724
        %3980 = vmatprep.subr.mxu0 %v1727
        %3981 = vmatpush1.msra.mxu0 %v1726
        %3982 = vmatprep.subr.mxu0 %v1729
        %3983 = vmatpush1.msra.mxu0 %v1728
        %3984 = vmatprep.subr.mxu0 %v1731
        %3985 = vmatpush1.msra.mxu0 %v1730
        %3986 = vmatprep.subr.mxu0 %v1733
        %3987 = vmatpush1.msra.mxu0 %v1732
        %3988 = vmatprep.subr.mxu0 %v1735
        %3989 = vmatpush1.msra.mxu0 %v1734
        %3990 = vmatprep.subr.mxu0 %v1737
        %3991 = vmatpush1.msra.mxu0 %v1736
        %3992 = vmatprep.subr.mxu0 %v1739
        %3993 = vmatpush1.msra.mxu0 %v1738
        %3994 = vmatprep.subr.mxu0 %v1741
        %3995 = vmatpush1.msra.mxu0 %v1740
        %3996 = vmatprep.subr.mxu0 %v1743
        %3997 = vmatpush1.msra.mxu0 %v1742
        %3998 = vmatprep.mubr.f32.mxu0 %v2280
        %3999 = vmatmul.mubr.f32.gmra.mrb[0].mxu0 %v2272
        %v4000 = vpop.f32.mrb[0].mxu0
        %v4001 = vadd.f32 %v3930, %v4000
        %v4002 = vpop.f32.mrb[0].mxu0
        %v4003 = vadd.f32 %v3932, %v4002
        %4004 = vdwg.mxu0
        %4005 = vmatprep.subr.mxu0 %v1745
        %4006 = vmatpush1.msra.mxu0 %v1744
        %4007 = vmatprep.subr.mxu0 %v1747
        %4008 = vmatpush1.msra.mxu0 %v1746
        %4009 = vmatprep.subr.mxu0 %v1749
        %4010 = vmatpush1.msra.mxu0 %v1748
        %4011 = vmatprep.subr.mxu0 %v1751
        %4012 = vmatpush1.msra.mxu0 %v1750
        %4013 = vmatprep.subr.mxu0 %v1753
        %4014 = vmatpush1.msra.mxu0 %v1752
        %4015 = vmatprep.subr.mxu0 %v1755
        %4016 = vmatpush1.msra.mxu0 %v1754
        %4017 = vmatprep.subr.mxu0 %v1757
        %4018 = vmatpush1.msra.mxu0 %v1756
        %4019 = vmatprep.subr.mxu0 %v1759
        %4020 = vmatpush1.msra.mxu0 %v1758
        %4021 = vmatprep.subr.mxu0 %v1761
        %4022 = vmatpush1.msra.mxu0 %v1760
        %4023 = vmatprep.subr.mxu0 %v1763
        %4024 = vmatpush1.msra.mxu0 %v1762
        %4025 = vmatprep.subr.mxu0 %v1765
        %4026 = vmatpush1.msra.mxu0 %v1764
        %4027 = vmatprep.subr.mxu0 %v1767
        %4028 = vmatpush1.msra.mxu0 %v1766
        %4029 = vmatprep.subr.mxu0 %v1769
        %4030 = vmatpush1.msra.mxu0 %v1768
        %4031 = vmatprep.subr.mxu0 %v1771
        %4032 = vmatpush1.msra.mxu0 %v1770
        %4033 = vmatprep.subr.mxu0 %v1773
        %4034 = vmatpush1.msra.mxu0 %v1772
        %4035 = vmatprep.subr.mxu0 %v1775
        %4036 = vmatpush1.msra.mxu0 %v1774
        %4037 = vmatprep.subr.mxu0 %v1777
        %4038 = vmatpush1.msra.mxu0 %v1776
        %4039 = vmatprep.subr.mxu0 %v1779
        %4040 = vmatpush1.msra.mxu0 %v1778
        %4041 = vmatprep.subr.mxu0 %v1781
        %4042 = vmatpush1.msra.mxu0 %v1780
        %4043 = vmatprep.subr.mxu0 %v1783
        %4044 = vmatpush1.msra.mxu0 %v1782
        %4045 = vmatprep.subr.mxu0 %v1785
        %4046 = vmatpush1.msra.mxu0 %v1784
        %4047 = vmatprep.subr.mxu0 %v1787
        %4048 = vmatpush1.msra.mxu0 %v1786
        %4049 = vmatprep.subr.mxu0 %v1789
        %4050 = vmatpush1.msra.mxu0 %v1788
        %4051 = vmatprep.subr.mxu0 %v1791
        %4052 = vmatpush1.msra.mxu0 %v1790
        %4053 = vmatprep.subr.mxu0 %v1793
        %4054 = vmatpush1.msra.mxu0 %v1792
        %4055 = vmatprep.subr.mxu0 %v1795
        %4056 = vmatpush1.msra.mxu0 %v1794
        %4057 = vmatprep.subr.mxu0 %v1797
        %4058 = vmatpush1.msra.mxu0 %v1796
        %4059 = vmatprep.subr.mxu0 %v1799
        %4060 = vmatpush1.msra.mxu0 %v1798
        %4061 = vmatprep.subr.mxu0 %v1801
        %4062 = vmatpush1.msra.mxu0 %v1800
        %4063 = vmatprep.subr.mxu0 %v1803
        %4064 = vmatpush1.msra.mxu0 %v1802
        %4065 = vmatprep.subr.mxu0 %v1805
        %4066 = vmatpush1.msra.mxu0 %v1804
        %4067 = vmatprep.subr.mxu0 %v1807
        %4068 = vmatpush1.msra.mxu0 %v1806
        %4069 = vmatprep.mubr.f32.mxu0 %v2281
        %4070 = vmatmul.mubr.f32.gmra.mrb[0].mxu0 %v2279
        %v4071 = vpop.f32.mrb[0].mxu0
        %v4072 = vadd.f32 %v4001, %v4071
        %v4073 = vpop.f32.mrb[0].mxu0
        %v4074 = vadd.f32 %v4003, %v4073
        %4075 = vdwg.mxu0
        %4076 = vmatprep.subr.mxu0 %v1809
        %4077 = vmatpush1.msra.mxu0 %v1808
        %4078 = vmatprep.subr.mxu0 %v1811
        %4079 = vmatpush1.msra.mxu0 %v1810
        %4080 = vmatprep.subr.mxu0 %v1813
        %4081 = vmatpush1.msra.mxu0 %v1812
        %4082 = vmatprep.subr.mxu0 %v1815
        %4083 = vmatpush1.msra.mxu0 %v1814
        %4084 = vmatprep.subr.mxu0 %v1817
        %4085 = vmatpush1.msra.mxu0 %v1816
        %4086 = vmatprep.subr.mxu0 %v1819
        %4087 = vmatpush1.msra.mxu0 %v1818
        %4088 = vmatprep.subr.mxu0 %v1821
        %4089 = vmatpush1.msra.mxu0 %v1820
        %4090 = vmatprep.subr.mxu0 %v1823
        %4091 = vmatpush1.msra.mxu0 %v1822
        %4092 = vmatprep.subr.mxu0 %v1825
        %4093 = vmatpush1.msra.mxu0 %v1824
        %4094 = vmatprep.subr.mxu0 %v1827
        %4095 = vmatpush1.msra.mxu0 %v1826
        %4096 = vmatprep.subr.mxu0 %v1829
        %4097 = vmatpush1.msra.mxu0 %v1828
        %4098 = vmatprep.subr.mxu0 %v1831
        %4099 = vmatpush1.msra.mxu0 %v1830
        %4100 = vmatprep.subr.mxu0 %v1833
        %4101 = vmatpush1.msra.mxu0 %v1832
        %4102 = vmatprep.subr.mxu0 %v1835
        %4103 = vmatpush1.msra.mxu0 %v1834
        %4104 = vmatprep.subr.mxu0 %v1837
        %4105 = vmatpush1.msra.mxu0 %v1836
        %4106 = vmatprep.subr.mxu0 %v1839
        %4107 = vmatpush1.msra.mxu0 %v1838
        %4108 = vmatprep.subr.mxu0 %v1841
        %4109 = vmatpush1.msra.mxu0 %v1840
        %4110 = vmatprep.subr.mxu0 %v1843
        %4111 = vmatpush1.msra.mxu0 %v1842
        %4112 = vmatprep.subr.mxu0 %v1845
        %4113 = vmatpush1.msra.mxu0 %v1844
        %4114 = vmatprep.subr.mxu0 %v1847
        %4115 = vmatpush1.msra.mxu0 %v1846
        %4116 = vmatprep.subr.mxu0 %v1849
        %4117 = vmatpush1.msra.mxu0 %v1848
        %4118 = vmatprep.subr.mxu0 %v1851
        %4119 = vmatpush1.msra.mxu0 %v1850
        %4120 = vmatprep.subr.mxu0 %v1853
        %4121 = vmatpush1.msra.mxu0 %v1852
        %4122 = vmatprep.subr.mxu0 %v1855
        %4123 = vmatpush1.msra.mxu0 %v1854
        %4124 = vmatprep.subr.mxu0 %v1857
        %4125 = vmatpush1.msra.mxu0 %v1856
        %4126 = vmatprep.subr.mxu0 %v1859
        %4127 = vmatpush1.msra.mxu0 %v1858
        %4128 = vmatprep.subr.mxu0 %v1861
        %4129 = vmatpush1.msra.mxu0 %v1860
        %4130 = vmatprep.subr.mxu0 %v1863
        %4131 = vmatpush1.msra.mxu0 %v1862
        %4132 = vmatprep.subr.mxu0 %v1865
        %4133 = vmatpush1.msra.mxu0 %v1864
        %4134 = vmatprep.subr.mxu0 %v1867
        %4135 = vmatpush1.msra.mxu0 %v1866
        %4136 = vmatprep.subr.mxu0 %v1869
        %4137 = vmatpush1.msra.mxu0 %v1868
        %4138 = vmatprep.subr.mxu0 %v1871
        %4139 = vmatpush1.msra.mxu0 %v1870
        %4140 = vmatprep.mubr.f32.mxu0 %v2297
        %4141 = vmatmul.mubr.f32.gmra.mrb[0].mxu0 %v2289
        %v4142 = vpop.f32.mrb[0].mxu0
        %v4143 = vadd.f32 %v4072, %v4142
        %v4144 = vpop.f32.mrb[0].mxu0
        %v4145 = vadd.f32 %v4074, %v4144
        %4146 = vdwg.mxu0
        %4147 = vmatprep.subr.mxu0 %v1873
        %4148 = vmatpush1.msra.mxu0 %v1872
        %4149 = vmatprep.subr.mxu0 %v1875
        %4150 = vmatpush1.msra.mxu0 %v1874
        %4151 = vmatprep.subr.mxu0 %v1877
        %4152 = vmatpush1.msra.mxu0 %v1876
        %4153 = vmatprep.subr.mxu0 %v1879
        %4154 = vmatpush1.msra.mxu0 %v1878
        %4155 = vmatprep.subr.mxu0 %v1881
        %4156 = vmatpush1.msra.mxu0 %v1880
        %4157 = vmatprep.subr.mxu0 %v1883
        %4158 = vmatpush1.msra.mxu0 %v1882
        %4159 = vmatprep.subr.mxu0 %v1885
        %4160 = vmatpush1.msra.mxu0 %v1884
        %4161 = vmatprep.subr.mxu0 %v1887
        %4162 = vmatpush1.msra.mxu0 %v1886
        %4163 = vmatprep.subr.mxu0 %v1889
        %4164 = vmatpush1.msra.mxu0 %v1888
        %4165 = vmatprep.subr.mxu0 %v1891
        %4166 = vmatpush1.msra.mxu0 %v1890
        %4167 = vmatprep.subr.mxu0 %v1893
        %4168 = vmatpush1.msra.mxu0 %v1892
        %4169 = vmatprep.subr.mxu0 %v1895
        %4170 = vmatpush1.msra.mxu0 %v1894
        %4171 = vmatprep.subr.mxu0 %v1897
        %4172 = vmatpush1.msra.mxu0 %v1896
        %4173 = vmatprep.subr.mxu0 %v1899
        %4174 = vmatpush1.msra.mxu0 %v1898
        %4175 = vmatprep.subr.mxu0 %v1901
        %4176 = vmatpush1.msra.mxu0 %v1900
        %4177 = vmatprep.subr.mxu0 %v1903
        %4178 = vmatpush1.msra.mxu0 %v1902
        %4179 = vmatprep.subr.mxu0 %v1905
        %4180 = vmatpush1.msra.mxu0 %v1904
        %4181 = vmatprep.subr.mxu0 %v1907
        %4182 = vmatpush1.msra.mxu0 %v1906
        %4183 = vmatprep.subr.mxu0 %v1909
        %4184 = vmatpush1.msra.mxu0 %v1908
        %4185 = vmatprep.subr.mxu0 %v1911
        %4186 = vmatpush1.msra.mxu0 %v1910
        %4187 = vmatprep.subr.mxu0 %v1913
        %4188 = vmatpush1.msra.mxu0 %v1912
        %4189 = vmatprep.subr.mxu0 %v1915
        %4190 = vmatpush1.msra.mxu0 %v1914
        %4191 = vmatprep.subr.mxu0 %v1917
        %4192 = vmatpush1.msra.mxu0 %v1916
        %4193 = vmatprep.subr.mxu0 %v1919
        %4194 = vmatpush1.msra.mxu0 %v1918
        %4195 = vmatprep.subr.mxu0 %v1921
        %4196 = vmatpush1.msra.mxu0 %v1920
        %4197 = vmatprep.subr.mxu0 %v1923
        %4198 = vmatpush1.msra.mxu0 %v1922
        %4199 = vmatprep.subr.mxu0 %v1925
        %4200 = vmatpush1.msra.mxu0 %v1924
        %4201 = vmatprep.subr.mxu0 %v1927
        %4202 = vmatpush1.msra.mxu0 %v1926
        %4203 = vmatprep.subr.mxu0 %v1929
        %4204 = vmatpush1.msra.mxu0 %v1928
        %4205 = vmatprep.subr.mxu0 %v1931
        %4206 = vmatpush1.msra.mxu0 %v1930
        %4207 = vmatprep.subr.mxu0 %v1933
        %4208 = vmatpush1.msra.mxu0 %v1932
        %4209 = vmatprep.subr.mxu0 %v1935
        %4210 = vmatpush1.msra.mxu0 %v1934
        %4211 = vmatprep.mubr.f32.mxu0 %v2298
        %4212 = vmatmul.mubr.f32.gmra.mrb[0].mxu0 %v2296
        %v4213 = vpop.f32.mrb[0].mxu0
        %v4214 = vadd.f32 %v4143, %v4213
        %v4215 = vpop.f32.mrb[0].mxu0
        %v4216 = vadd.f32 %v4145, %v4215
        %4217 = vdwg.mxu0
        %4218 = vmatprep.subr.mxu0 %v1937
        %4219 = vmatpush1.msra.mxu0 %v1936
        %4220 = vmatprep.subr.mxu0 %v1939
        %4221 = vmatpush1.msra.mxu0 %v1938
        %4222 = vmatprep.subr.mxu0 %v1941
        %4223 = vmatpush1.msra.mxu0 %v1940
        %4224 = vmatprep.subr.mxu0 %v1943
        %4225 = vmatpush1.msra.mxu0 %v1942
        %4226 = vmatprep.subr.mxu0 %v1945
        %4227 = vmatpush1.msra.mxu0 %v1944
        %4228 = vmatprep.subr.mxu0 %v1947
        %4229 = vmatpush1.msra.mxu0 %v1946
        %4230 = vmatprep.subr.mxu0 %v1949
        %4231 = vmatpush1.msra.mxu0 %v1948
        %4232 = vmatprep.subr.mxu0 %v1951
        %4233 = vmatpush1.msra.mxu0 %v1950
        %4234 = vmatprep.subr.mxu0 %v1953
        %4235 = vmatpush1.msra.mxu0 %v1952
        %4236 = vmatprep.subr.mxu0 %v1955
        %4237 = vmatpush1.msra.mxu0 %v1954
        %4238 = vmatprep.subr.mxu0 %v1957
        %4239 = vmatpush1.msra.mxu0 %v1956
        %4240 = vmatprep.subr.mxu0 %v1959
        %4241 = vmatpush1.msra.mxu0 %v1958
        %4242 = vmatprep.subr.mxu0 %v1961
        %4243 = vmatpush1.msra.mxu0 %v1960
        %4244 = vmatprep.subr.mxu0 %v1963
        %4245 = vmatpush1.msra.mxu0 %v1962
        %4246 = vmatprep.subr.mxu0 %v1965
        %4247 = vmatpush1.msra.mxu0 %v1964
        %4248 = vmatprep.subr.mxu0 %v1967
        %4249 = vmatpush1.msra.mxu0 %v1966
        %4250 = vmatprep.subr.mxu0 %v1969
        %4251 = vmatpush1.msra.mxu0 %v1968
        %4252 = vmatprep.subr.mxu0 %v1971
        %4253 = vmatpush1.msra.mxu0 %v1970
        %4254 = vmatprep.subr.mxu0 %v1973
        %4255 = vmatpush1.msra.mxu0 %v1972
        %4256 = vmatprep.subr.mxu0 %v1975
        %4257 = vmatpush1.msra.mxu0 %v1974
        %4258 = vmatprep.subr.mxu0 %v1977
        %4259 = vmatpush1.msra.mxu0 %v1976
        %4260 = vmatprep.subr.mxu0 %v1979
        %4261 = vmatpush1.msra.mxu0 %v1978
        %4262 = vmatprep.subr.mxu0 %v1981
        %4263 = vmatpush1.msra.mxu0 %v1980
        %4264 = vmatprep.subr.mxu0 %v1983
        %4265 = vmatpush1.msra.mxu0 %v1982
        %4266 = vmatprep.subr.mxu0 %v1985
        %4267 = vmatpush1.msra.mxu0 %v1984
        %4268 = vmatprep.subr.mxu0 %v1987
        %4269 = vmatpush1.msra.mxu0 %v1986
        %4270 = vmatprep.subr.mxu0 %v1989
        %4271 = vmatpush1.msra.mxu0 %v1988
        %4272 = vmatprep.subr.mxu0 %v1991
        %4273 = vmatpush1.msra.mxu0 %v1990
        %4274 = vmatprep.subr.mxu0 %v1993
        %4275 = vmatpush1.msra.mxu0 %v1992
        %4276 = vmatprep.subr.mxu0 %v1995
        %4277 = vmatpush1.msra.mxu0 %v1994
        %4278 = vmatprep.subr.mxu0 %v1997
        %4279 = vmatpush1.msra.mxu0 %v1996
        %4280 = vmatprep.subr.mxu0 %v1999
        %4281 = vmatpush1.msra.mxu0 %v1998
        %4282 = vmatprep.mubr.f32.mxu0 %v2314
        %4283 = vmatmul.mubr.f32.gmra.mrb[0].mxu0 %v2306
        %v4284 = vpop.f32.mrb[0].mxu0
        %v4285 = vadd.f32 %v4214, %v4284
        %v4286 = vpop.f32.mrb[0].mxu0
        %v4287 = vadd.f32 %v4216, %v4286
        %4288 = vdwg.mxu0
        %4289 = vmatprep.subr.mxu0 %v2001
        %4290 = vmatpush1.msra.mxu0 %v2000
        %4291 = vmatprep.subr.mxu0 %v2003
        %4292 = vmatpush1.msra.mxu0 %v2002
        %4293 = vmatprep.subr.mxu0 %v2005
        %4294 = vmatpush1.msra.mxu0 %v2004
        %4295 = vmatprep.subr.mxu0 %v2007
        %4296 = vmatpush1.msra.mxu0 %v2006
        %4297 = vmatprep.subr.mxu0 %v2009
        %4298 = vmatpush1.msra.mxu0 %v2008
        %4299 = vmatprep.subr.mxu0 %v2011
        %4300 = vmatpush1.msra.mxu0 %v2010
        %4301 = vmatprep.subr.mxu0 %v2013
        %4302 = vmatpush1.msra.mxu0 %v2012
        %4303 = vmatprep.subr.mxu0 %v2015
        %4304 = vmatpush1.msra.mxu0 %v2014
        %4305 = vmatprep.subr.mxu0 %v2017
        %4306 = vmatpush1.msra.mxu0 %v2016
        %4307 = vmatprep.subr.mxu0 %v2019
        %4308 = vmatpush1.msra.mxu0 %v2018
        %4309 = vmatprep.subr.mxu0 %v2021
        %4310 = vmatpush1.msra.mxu0 %v2020
        %4311 = vmatprep.subr.mxu0 %v2023
        %4312 = vmatpush1.msra.mxu0 %v2022
        %4313 = vmatprep.subr.mxu0 %v2025
        %4314 = vmatpush1.msra.mxu0 %v2024
        %4315 = vmatprep.subr.mxu0 %v2027
        %4316 = vmatpush1.msra.mxu0 %v2026
        %4317 = vmatprep.subr.mxu0 %v2029
        %4318 = vmatpush1.msra.mxu0 %v2028
        %4319 = vmatprep.subr.mxu0 %v2031
        %4320 = vmatpush1.msra.mxu0 %v2030
        %4321 = vmatprep.subr.mxu0 %v2033
        %4322 = vmatpush1.msra.mxu0 %v2032
        %4323 = vmatprep.subr.mxu0 %v2035
        %4324 = vmatpush1.msra.mxu0 %v2034
        %4325 = vmatprep.subr.mxu0 %v2037
        %4326 = vmatpush1.msra.mxu0 %v2036
        %4327 = vmatprep.subr.mxu0 %v2039
        %4328 = vmatpush1.msra.mxu0 %v2038
        %4329 = vmatprep.subr.mxu0 %v2041
        %4330 = vmatpush1.msra.mxu0 %v2040
        %4331 = vmatprep.subr.mxu0 %v2043
        %4332 = vmatpush1.msra.mxu0 %v2042
        %4333 = vmatprep.subr.mxu0 %v2045
        %4334 = vmatpush1.msra.mxu0 %v2044
        %4335 = vmatprep.subr.mxu0 %v2047
        %4336 = vmatpush1.msra.mxu0 %v2046
        %4337 = vmatprep.subr.mxu0 %v2049
        %4338 = vmatpush1.msra.mxu0 %v2048
        %4339 = vmatprep.subr.mxu0 %v2051
        %4340 = vmatpush1.msra.mxu0 %v2050
        %4341 = vmatprep.subr.mxu0 %v2053
        %4342 = vmatpush1.msra.mxu0 %v2052
        %4343 = vmatprep.subr.mxu0 %v2055
        %4344 = vmatpush1.msra.mxu0 %v2054
        %4345 = vmatprep.subr.mxu0 %v2057
        %4346 = vmatpush1.msra.mxu0 %v2056
        %4347 = vmatprep.subr.mxu0 %v2059
        %4348 = vmatpush1.msra.mxu0 %v2058
        %4349 = vmatprep.subr.mxu0 %v2061
        %4350 = vmatpush1.msra.mxu0 %v2060
        %4351 = vmatprep.subr.mxu0 %v2063
        %4352 = vmatpush1.msra.mxu0 %v2062
        %4353 = vmatprep.mubr.f32.mxu0 %v2315
        %4354 = vmatmul.mubr.f32.gmra.mrb[0].mxu0 %v2313
        %v4355 = vpop.f32.mrb[0].mxu0
        %v4356 = vadd.f32 %v4285, %v4355
        %v4357 = vpop.f32.mrb[0].mxu0
        %v4358 = vadd.f32 %v4287, %v4357
        %4359 = vdwg.mxu0
        %v4362 = vcombine.low %v4356, %v4358
        %v4364 = vunpack.c.l.s4 1983009808
        %v4365 = vunpack.c.0.s8 %v4364
        %v4366 = vlaneseq
        %v4367 = vshrl.u32 %v4366, 7
        %v4368 = vsub.s32 %v4365, %v4367
        %v4369 = vrot.slane %v4362, %v4368
        %v4371 = vadd.f32 %v257, %v4369
        %4372 = vst [vmem:[%s250] sm:$0xf] %v4371
        %p4373 = scmp.eq.s32.totalorder %s22, 20
        // Predicated region
        $region41: #{custom_mlp_forward.2} parent=31 // pred_check
          %p4374 = pneg %p4373
        $region42: #{custom_mlp_forward.2} parent=31 // pred_check_branch
          %4376 = sbr.rel (%p4374) target = $region44
        $region43: #{custom_mlp_forward.2} parent=31 // pred_region
          %v4377 = vld [vmem:[%s250] sm:$0xf]
          %v4378 = vld [vmem:[%s244] sm:$0x3]
          %v4380 = vlaneseq
          %v4381 = vshrl.u32 %v4380, 7
          %v4382 = vsub.s32 0, %v4381
          %v4383 = vrot.slane %v4378, %v4382
          %v4384 = vlaneseq
          %v4385 = vshrl.u32 %v4384, 7
          %v4386 = vsub.s32 1, %v4385
          %v4387 = vrot.slane %v4378, %v4386
          %v4388 = vcombine.low %v4383, %v4387
          %v4390 = vunpack.c.l.s4 1983009808
          %v4391 = vunpack.c.0.s8 %v4390
          %v4392 = vlaneseq
          %v4393 = vshrl.u32 %v4392, 7
          %v4394 = vsub.s32 %v4391, %v4393
          %v4395 = vrot.slane %v4388, %v4394
          %v4397 = vadd.f32 %v4377, %v4395
          %v4398 = vmax.f32 %v4397, 0.0
          %4399 = vst [vmem:[%s250] sm:$0xf] %v4398
        $region44: #{custom_mlp_forward.2} parent=31 // pred_fallthru
          _
        %s4400 = smul.u32 2, %s21
        %p4401 = scmp.lt.s32.totalorder %s4400, 3
        %s4402 = scalar_select %p4401, %s4400, 3
        %s4403 = smul.addr %s4402, 2
        %s4404 = scalar_lea.vmem %s3, %s4403
        // Predicated region
        $region45: #{custom_mlp_forward.2} parent=31 // pred_check
          %p4405 = pneg %p127
        $region46: #{custom_mlp_forward.2} parent=31 // pred_check_branch
          %4407 = sbr.rel (%p4405) target = $region48
        $region47: #{custom_mlp_forward.2} parent=31 // pred_region
          %s4408 = smul.u32 2, %s21
        $region48: #{custom_mlp_forward.2} parent=31 // pred_fallthru
          _
      $region32: #{custom_mlp_forward.2} parent=5 // pred_fallthru
        _
      %p4409 = scmp.le.s32.totalorder 2, %s12
      // Predicated region
      $region49: #{custom_mlp_forward.2} parent=5 // pred_check
        %p4410 = pneg %p4409
      $region50: #{custom_mlp_forward.2} parent=5 // pred_check_branch
        %4412 = sbr.rel (%p4410) target = $region52
      $region51: #{custom_mlp_forward.2} parent=5 // pred_region
        %s4413 = ssub.s32 %s12, 2
        // Predicated region
        $region53: #{custom_mlp_forward.2} parent=51 // pred_check
          %p4414 = pneg %p133
        $region54: #{custom_mlp_forward.2} parent=51 // pred_check_branch
          %4416 = sbr.rel (%p4414) target = $region56
        $region55: #{custom_mlp_forward.2} parent=51 // pred_region
          %s4417 = smul.u32 2, %s23
          %p4418 = scmp.lt.s32.totalorder %s4417, 3
          %s4419 = scalar_select %p4418, %s4417, 3
          %s4420 = smul.addr %s4419, 2
          %s4421 = scalar_lea.vmem %s3, %s4420
        $region56: #{custom_mlp_forward.2} parent=51 // pred_fallthru
          _
      $region52: #{custom_mlp_forward.2} parent=5 // pred_fallthru
        _
    $region6: #{custom_mlp_forward.2} parent=1 // loop_footer
      %s16 = sadd.s32 1, %s12
    $region7: #{custom_mlp_forward.2} parent=1 // loop_footer_branch
      %11 = sbr.rel target = $region3
    $region8: #{custom_mlp_forward.2} parent=1 // loop_exit
      _
    %4422 = vsyncpa [#allocation3], 1
    %s4423 = scalar_lea.sflag [#allocation3], 1
    %4424 = vsyncpa %s4423, 1

</llo_original>
